<compile_context>
chip_gen: v7x
topology: tpu7x:2x2x1
jax: 0.10.0
libtpu: 0.0.40
codegen_flags: <defaults>
</compile_context>

<pallas_src>
import jax
import jax.numpy as jnp
import numpy as np
from jax.experimental import pallas as pl
from jax.experimental.pallas import tpu as pltpu

C = 128          # lane-padded channel width used everywhere inside the kernel
NUM_CLASSES = 6
H1, W1 = 16, 16  # conv1 spatial size
H2, W2 = 8, 8    # post-pool spatial size


# ----------------------------------------------------------------------------
# In-kernel helpers (operate on values, all ops safe for Mosaic + interpret)
# ----------------------------------------------------------------------------
def _conv1_taps(xp, w_taps, ss, h, w):
    """3x3 conv, 9-tap accumulation.  xp: (h+2, w+2, 3), w_taps: (9, 3, C)."""
    m = h * w
    acc = jnp.zeros((m, C), jnp.float32)
    for ky in range(3):
        for kx in range(3):
            patch = xp[ky:ky + h, kx:kx + w, :].reshape(m, 3)
            acc = acc + jnp.dot(patch, w_taps[ky * 3 + kx],
                                preferred_element_type=jnp.float32)
    out = acc * ss[0:1, :] + ss[1:2, :]          # folded BN/bias affine
    return jnp.maximum(out, 0.0)                 # ReLU, (m, C)


def _conv_im2col(xp, w, ss, h, w_):
    """3x3 conv as a single im2col matmul.  xp: (h+2, w_+2, C), w: (9C, C)."""
    m = h * w_
    taps = [xp[ky:ky + h, kx:kx + w_, :].reshape(m, C)
            for ky in range(3) for kx in range(3)]
    patches = jnp.concatenate(taps, axis=-1)     # (m, 9C) -- 128-aligned pieces
    acc = jnp.dot(patches, w, preferred_element_type=jnp.float32)
    out = acc * ss[0:1, :] + ss[1:2, :]
    return jnp.maximum(out, 0.0)                 # (m, C)


# ----------------------------------------------------------------------------
# Fused network kernel (one grid step == one image)
# ----------------------------------------------------------------------------
def _convnet_kernel(x_ref, w1_ref, ss1_ref, sel_ref, w2_ref, ss2_ref,
                    w3_ref, ss3_ref, fcw_ref, fcb_ref, o_ref,
                    pad1_ref, pad2_ref, pad3_ref):
    # ---- conv1 + bn1 + relu (16x16) --------------------------------------
    pad1_ref[...] = jnp.zeros(pad1_ref.shape, pad1_ref.dtype)
    x = x_ref[...].reshape(H1, W1, 3)
    pad1_ref[1:H1 + 1, 1:W1 + 1, :] = x
    y1 = _conv1_taps(pad1_ref[...], w1_ref[...], ss1_ref[...], H1, W1)  # (256,C)

    # ---- 2x2 maxpool fused into the conv1 epilogue ------------------------
    # H-pair max via a major-dim reshape, W-pair max via even/odd selection
    # matmuls (avoids strided slices / sublane-splitting reshapes).
    yh = jnp.max(y1.reshape(H2, 2, W1, C), axis=1)       # (8, 16, C)
    yhf = yh.reshape(H2 * W1, C)                         # (128, C)
    sel = sel_ref[...]
    pooled = jnp.maximum(
        jnp.dot(sel[0], yhf, preferred_element_type=jnp.float32),
        jnp.dot(sel[1], yhf, preferred_element_type=jnp.float32))  # (64, C)

    # ---- conv2 + relu (8x8) -----------------------------------------------
    pad2_ref[...] = jnp.zeros(pad2_ref.shape, pad2_ref.dtype)
    pad2_ref[1:H2 + 1, 1:W2 + 1, :] = pooled.reshape(H2, W2, C)
    y2 = _conv_im2col(pad2_ref[...], w2_ref[...], ss2_ref[...], H2, W2)  # (64,C)

    # ---- conv3 + bn3 + relu (8x8) -----------------------------------------
    pad3_ref[...] = jnp.zeros(pad3_ref.shape, pad3_ref.dtype)
    pad3_ref[1:H2 + 1, 1:W2 + 1, :] = y2.reshape(H2, W2, C)
    y3 = _conv_im2col(pad3_ref[...], w3_ref[...], ss3_ref[...], H2, W2)  # (64,C)

    # ---- fc (NCHW flatten + channel padding folded into fcw) ---------------
    prods = y3[None, :, :] * fcw_ref[...]                # (6, 64, C)
    s1 = jnp.sum(prods, axis=1)                          # (6, C)
    logits = jnp.sum(s1, axis=1, keepdims=True) + fcb_ref[...]   # (6, 1)
    o_ref[...] = logits.reshape(1, NUM_CLASSES, 1)


# ----------------------------------------------------------------------------
# Wrapper
# ----------------------------------------------------------------------------
def convnet_forward(x_nchw, p):
    x = jnp.transpose(x_nchw, (0, 2, 3, 1)).astype(jnp.float32)  # NCHW -> NHWC
    n = x.shape[0]
    out = pl.pallas_call(
        _convnet_kernel,
        out_shape=jax.ShapeDtypeStruct((n, NUM_CLASSES, 1), jnp.float32),
        grid=(n,),
        in_specs=[
            pl.BlockSpec((1, H1, W1, 3), lambda b: (b, 0, 0, 0)),    # x
            pl.BlockSpec((9, 3, C), lambda b: (0, 0, 0)),            # w1 taps
            pl.BlockSpec((2, C), lambda b: (0, 0)),                  # ss1
            pl.BlockSpec((2, H2 * W2, H2 * W1), lambda b: (0, 0, 0)),# pool sel
            pl.BlockSpec((9 * C, C), lambda b: (0, 0)),              # w2
            pl.BlockSpec((2, C), lambda b: (0, 0)),                  # ss2
            pl.BlockSpec((9 * C, C), lambda b: (0, 0)),              # w3
            pl.BlockSpec((2, C), lambda b: (0, 0)),                  # ss3
            pl.BlockSpec((NUM_CLASSES, H2 * W2, C), lambda b: (0, 0, 0)),  # fcw
            pl.BlockSpec((NUM_CLASSES, 1), lambda b: (0, 0)),        # fcb
        ],
        out_specs=pl.BlockSpec((1, NUM_CLASSES, 1), lambda b: (b, 0, 0)),
        scratch_shapes=[
            pltpu.VMEM((H1 + 2, W1 + 2, 3), jnp.float32),    # padded conv1 in
            pltpu.VMEM((H2 + 2, W2 + 2, C), jnp.float32),    # padded conv2 in
            pltpu.VMEM((H2 + 2, W2 + 2, C), jnp.float32),    # padded conv3 in
        ],
        compiler_params=pltpu.CompilerParams(
            dimension_semantics=("parallel",)),
    )(x, p["w1"], p["ss1"], p["sel"], p["w2"], p["ss2"],
      p["w3"], p["ss3"], p["fcw"], p["fcb"])
    return out[:, :, 0]                                   # (N, num_classes)


# ----------------------------------------------------------------------------
# Parameters (PyTorch layouts) and fold into kernel layouts
# ----------------------------------------------------------------------------
def make_raw_params(key, num_classes=NUM_CLASSES, fc_in=32 * H2 * W2):
    ks = jax.random.split(key, 16)
    n = lambda k, s, sc=0.1: sc * jax.random.normal(k, s, jnp.float32)
    return dict(
        w1=n(ks[0], (12, 3, 3, 3)), b1=n(ks[1], (12,)),
        g1=1.0 + n(ks[2], (12,)), be1=n(ks[3], (12,)),
        m1=n(ks[4], (12,)), v1=1.0 + jnp.abs(n(ks[5], (12,))),
        w2=n(ks[6], (20, 12, 3, 3)), b2=n(ks[7], (20,)),
        w3=n(ks[8], (32, 20, 3, 3)), b3=n(ks[9], (32,)),
        g3=1.0 + n(ks[10], (32,)), be3=n(ks[11], (32,)),
        m3=n(ks[12], (32,)), v3=1.0 + jnp.abs(n(ks[13], (32,))),
        fc_w=n(ks[14], (num_classes, fc_in), 0.02), fc_b=n(ks[15], (num_classes,)),
    )


def fold_params(raw, eps=1e-5):
    """Kernel layouts: HWIO weights channel-padded to 128 (im2col-folded for
    conv2/3), eval-mode BN + bias folded to (scale, shift), maxpool selector
    matrices, fc weight permuted to NHWC-flatten order + channel-padded."""
    def hwio(w_oihw):
        return jnp.transpose(w_oihw, (2, 3, 1, 0)).astype(jnp.float32)

    def pad_w(w, cin_pad):
        kh, kw, i, o = w.shape
        return jnp.zeros((kh, kw, cin_pad, C), jnp.float32).at[:, :, :i, :o].set(w)

    def pad_ss(scale, shift):
        c = scale.shape[0]
        ss = jnp.zeros((2, C), jnp.float32)
        return ss.at[0, :c].set(scale).at[1, :c].set(shift)

    s1 = raw["g1"] / jnp.sqrt(raw["v1"] + eps)
    sh1 = raw["b1"] * s1 + raw["be1"] - raw["m1"] * s1
    s3 = raw["g3"] / jnp.sqrt(raw["v3"] + eps)
    sh3 = raw["b3"] * s3 + raw["be3"] - raw["m3"] * s3

    w1 = pad_w(hwio(raw["w1"]), 3).reshape(9, 3, C)          # per-tap
    w2 = pad_w(hwio(raw["w2"]), C).reshape(9 * C, C)         # im2col-folded
    w3 = pad_w(hwio(raw["w3"]), C).reshape(9 * C, C)

    # Maxpool even/odd column selectors: pooled row hp*8+wp picks H-paired
    # rows hp*16 + 2*wp (+1).
    sel = np.zeros((2, H2 * W2, H2 * W1), np.float32)
    for hp in range(H2):
        for wp in range(W2):
            sel[0, hp * W2 + wp, hp * W1 + 2 * wp] = 1.0
            sel[1, hp * W2 + wp, hp * W1 + 2 * wp + 1] = 1.0

    # fc: PyTorch flatten is NCHW (f = c*64 + h*8 + w); reorder to (k, m=h*8+w, c)
    # and zero-pad channels to 128 so it consumes the kernel's padded NHWC maps.
    k = raw["fc_w"].shape[0]
    fcw = raw["fc_w"].reshape(k, 32, H2, W2)
    fcw = jnp.transpose(fcw, (0, 2, 3, 1)).reshape(k, H2 * W2, 32)
    fcw_p = jnp.zeros((k, H2 * W2, C), jnp.float32).at[:, :, :32].set(fcw)

    return dict(
        w1=w1, ss1=pad_ss(s1, sh1),
        w2=w2, ss2=pad_ss(jnp.ones_like(raw["b2"]), raw["b2"]),
        w3=w3, ss3=pad_ss(s3, sh3),
        sel=jnp.asarray(sel),
        fcw=fcw_p, fcb=raw["fc_b"].reshape(k, 1).astype(jnp.float32),
    )


# ----------------------------------------------------------------------------
# Pure-JAX reference (eval-mode BN), for verification
# ----------------------------------------------------------------------------
def reference_forward(x_nchw, raw, eps=1e-5):
    def conv(x, w, b):
        y = jax.lax.conv_general_dilated(
            x, w, window_strides=(1, 1), padding=((1, 1), (1, 1)),
            dimension_numbers=("NCHW", "OIHW", "NCHW"))
        return y + b.reshape(1, -1, 1, 1)

    def bn(x, g, be, m, v):
        c = lambda a: a.reshape(1, -1, 1, 1)
        return (x - c(m)) / jnp.sqrt(c(v) + eps) * c(g) + c(be)

    y = jnp.maximum(bn(conv(x_nchw, raw["w1"], raw["b1"]),
                       raw["g1"], raw["be1"], raw["m1"], raw["v1"]), 0.0)
    n, ch, h, w = y.shape
    y = y.reshape(n, ch, h // 2, 2, w // 2, 2).max(axis=(3, 5))
    y = jnp.maximum(conv(y, raw["w2"], raw["b2"]), 0.0)
    y = jnp.maximum(bn(conv(y, raw["w3"], raw["b3"]),
                       raw["g3"], raw["be3"], raw["m3"], raw["v3"]), 0.0)
    return y.reshape(n, -1) @ raw["fc_w"].T + raw["fc_b"]


# ----------------------------------------------------------------------------
if __name__ == "__main__":
    key = jax.random.PRNGKey(0)
    k_x, k_p = jax.random.split(key)

    # NCHW input consistent with the module: (batch, 3, 16, 16).
    x = jax.random.normal(k_x, (2, 3, 16, 16), jnp.float32)

    raw = make_raw_params(k_p)
    params = fold_params(raw)

    out = jax.block_until_ready(jax.jit(convnet_forward)(x, params))
    ref = jax.block_until_ready(reference_forward(x, raw))

    err = float(jnp.max(jnp.abs(out - ref)))
    assert out.shape == (2, NUM_CLASSES), out.shape
    assert err < 1e-3, f"mismatch vs reference: {err}"

    print("KERNEL_OK")
</pallas_src>

<mosaic_0001>
module attributes {stable_mosaic.version = 11 : i64} {
  func.func @_convnet_kernel(%arg0: i32, %arg1: memref<1x16x16x3xf32, #tpu.memory_space<vmem>>, %arg2: memref<9x3x128xf32, #tpu.memory_space<vmem>>, %arg3: memref<2x128xf32, #tpu.memory_space<vmem>>, %arg4: memref<2x64x128xf32, #tpu.memory_space<vmem>>, %arg5: memref<1152x128xf32, #tpu.memory_space<vmem>>, %arg6: memref<2x128xf32, #tpu.memory_space<vmem>>, %arg7: memref<1152x128xf32, #tpu.memory_space<vmem>>, %arg8: memref<2x128xf32, #tpu.memory_space<vmem>>, %arg9: memref<6x64x128xf32, #tpu.memory_space<vmem>>, %arg10: memref<6x1xf32, #tpu.memory_space<vmem>>, %arg11: memref<1x6x1xf32, #tpu.memory_space<vmem>>, %arg12: memref<18x18x3xf32, #tpu.memory_space<vmem>>, %arg13: memref<10x10x128xf32, #tpu.memory_space<vmem>>, %arg14: memref<10x10x128xf32, #tpu.memory_space<vmem>>) attributes {dimension_semantics = [#tpu.dimension_semantics<parallel>], iteration_bounds = array<i64: 2>, scalar_prefetch = 0 : i64, scratch_operands = 3 : i64, tpu.core_type = #tpu.core_type<tc>, window_params = [{transform_indices = @transform_0, window_bounds = array<i64: 1, 16, 16, 3>}, {pipeline_mode = #tpu.pipeline_mode<synchronous>, transform_indices = @transform_1, window_bounds = array<i64: 9, 3, 128>}, {pipeline_mode = #tpu.pipeline_mode<synchronous>, transform_indices = @transform_2, window_bounds = array<i64: 2, 128>}, {pipeline_mode = #tpu.pipeline_mode<synchronous>, transform_indices = @transform_3, window_bounds = array<i64: 2, 64, 128>}, {pipeline_mode = #tpu.pipeline_mode<synchronous>, transform_indices = @transform_4, window_bounds = array<i64: 1152, 128>}, {pipeline_mode = #tpu.pipeline_mode<synchronous>, transform_indices = @transform_5, window_bounds = array<i64: 2, 128>}, {pipeline_mode = #tpu.pipeline_mode<synchronous>, transform_indices = @transform_6, window_bounds = array<i64: 1152, 128>}, {pipeline_mode = #tpu.pipeline_mode<synchronous>, transform_indices = @transform_7, window_bounds = array<i64: 2, 128>}, {pipeline_mode = #tpu.pipeline_mode<synchronous>, transform_indices = @transform_8, window_bounds = array<i64: 6, 64, 128>}, {pipeline_mode = #tpu.pipeline_mode<synchronous>, transform_indices = @transform_9, window_bounds = array<i64: 6, 1>}, {transform_indices = @transform_10, window_bounds = array<i64: 1, 6, 1>}]} {
    %cst = arith.constant 0.000000e+00 : f32
    %0 = vector.broadcast %cst : f32 to vector<18x18x3xf32>
    %c0 = arith.constant 0 : index
    %c0_0 = arith.constant 0 : index
    %c0_1 = arith.constant 0 : index
    %1 = vector.load %arg12[%c0, %c0_0, %c0_1] : memref<18x18x3xf32, #tpu.memory_space<vmem>>, vector<18x18x3xf32>
    tpu.vector_store %arg12[%c0, %c0_0, %c0_1], %0 {strides = array<i32>} : memref<18x18x3xf32, #tpu.memory_space<vmem>>, vector<18x18x3xf32>,
    %c0_2 = arith.constant 0 : index
    %c0_3 = arith.constant 0 : index
    %c0_4 = arith.constant 0 : index
    %c0_5 = arith.constant 0 : index
    %2 = vector.load %arg1[%c0_2, %c0_3, %c0_4, %c0_5] : memref<1x16x16x3xf32, #tpu.memory_space<vmem>>, vector<1x16x16x3xf32>
    %3 = vector.shape_cast %2 : vector<1x16x16x3xf32> to vector<16x16x3xf32>
    %c1 = arith.constant 1 : index
    %c1_6 = arith.constant 1 : index
    %c0_7 = arith.constant 0 : index
    %4 = vector.load %arg12[%c1, %c1_6, %c0_7] : memref<18x18x3xf32, #tpu.memory_space<vmem>>, vector<16x16x3xf32>
    tpu.vector_store %arg12[%c1, %c1_6, %c0_7], %3 {strides = array<i32>} : memref<18x18x3xf32, #tpu.memory_space<vmem>>, vector<16x16x3xf32>,
    %c0_8 = arith.constant 0 : index
    %c0_9 = arith.constant 0 : index
    %c0_10 = arith.constant 0 : index
    %5 = vector.load %arg12[%c0_8, %c0_9, %c0_10] : memref<18x18x3xf32, #tpu.memory_space<vmem>>, vector<18x18x3xf32>
    %c0_11 = arith.constant 0 : index
    %c0_12 = arith.constant 0 : index
    %c0_13 = arith.constant 0 : index
    %6 = vector.load %arg2[%c0_11, %c0_12, %c0_13] : memref<9x3x128xf32, #tpu.memory_space<vmem>>, vector<9x3x128xf32>
    %c0_14 = arith.constant 0 : index
    %c0_15 = arith.constant 0 : index
    %7 = vector.load %arg3[%c0_14, %c0_15] : memref<2x128xf32, #tpu.memory_space<vmem>>, vector<2x128xf32>
    %cst_16 = arith.constant 0.000000e+00 : f32
    %8 = vector.broadcast %cst_16 : f32 to vector<256x128xf32>
    %9 = vector.extract_strided_slice %5 {offsets = [0, 0, 0], sizes = [16, 16, 3], strides = [1, 1, 1]} : vector<18x18x3xf32> to vector<16x16x3xf32>
    %10 = vector.shape_cast %9 : vector<16x16x3xf32> to vector<256x3xf32>
    %11 = vector.extract_strided_slice %6 {offsets = [0, 0, 0], sizes = [1, 3, 128], strides = [1, 1, 1]} : vector<9x3x128xf32> to vector<1x3x128xf32>
    %12 = vector.shape_cast %11 : vector<1x3x128xf32> to vector<3x128xf32>
    %cst_17 = arith.constant dense<0.000000e+00> : vector<256x128xf32>
    %13 = tpu.matmul %10, %12, %cst_17 {dimension_numbers = #tpu.dot_dimension_numbers<[1], [0], [0], [1], [0, 0, 1, 1], [], []>} : vector<256x3xf32>, vector<3x128xf32>, vector<256x128xf32> -> vector<256x128xf32>
    %14 = arith.addf %8, %13 : vector<256x128xf32>
    %15 = vector.extract_strided_slice %5 {offsets = [0, 1, 0], sizes = [16, 16, 3], strides = [1, 1, 1]} : vector<18x18x3xf32> to vector<16x16x3xf32>
    %16 = vector.shape_cast %15 : vector<16x16x3xf32> to vector<256x3xf32>
    %17 = vector.extract_strided_slice %6 {offsets = [1, 0, 0], sizes = [1, 3, 128], strides = [1, 1, 1]} : vector<9x3x128xf32> to vector<1x3x128xf32>
    %18 = vector.shape_cast %17 : vector<1x3x128xf32> to vector<3x128xf32>
    %cst_18 = arith.constant dense<0.000000e+00> : vector<256x128xf32>
    %19 = tpu.matmul %16, %18, %cst_18 {dimension_numbers = #tpu.dot_dimension_numbers<[1], [0], [0], [1], [0, 0, 1, 1], [], []>} : vector<256x3xf32>, vector<3x128xf32>, vector<256x128xf32> -> vector<256x128xf32>
    %20 = arith.addf %14, %19 : vector<256x128xf32>
    %21 = vector.extract_strided_slice %5 {offsets = [0, 2, 0], sizes = [16, 16, 3], strides = [1, 1, 1]} : vector<18x18x3xf32> to vector<16x16x3xf32>
    %22 = vector.shape_cast %21 : vector<16x16x3xf32> to vector<256x3xf32>
    %23 = vector.extract_strided_slice %6 {offsets = [2, 0, 0], sizes = [1, 3, 128], strides = [1, 1, 1]} : vector<9x3x128xf32> to vector<1x3x128xf32>
    %24 = vector.shape_cast %23 : vector<1x3x128xf32> to vector<3x128xf32>
    %cst_19 = arith.constant dense<0.000000e+00> : vector<256x128xf32>
    %25 = tpu.matmul %22, %24, %cst_19 {dimension_numbers = #tpu.dot_dimension_numbers<[1], [0], [0], [1], [0, 0, 1, 1], [], []>} : vector<256x3xf32>, vector<3x128xf32>, vector<256x128xf32> -> vector<256x128xf32>
    %26 = arith.addf %20, %25 : vector<256x128xf32>
    %27 = vector.extract_strided_slice %5 {offsets = [1, 0, 0], sizes = [16, 16, 3], strides = [1, 1, 1]} : vector<18x18x3xf32> to vector<16x16x3xf32>
    %28 = vector.shape_cast %27 : vector<16x16x3xf32> to vector<256x3xf32>
    %29 = vector.extract_strided_slice %6 {offsets = [3, 0, 0], sizes = [1, 3, 128], strides = [1, 1, 1]} : vector<9x3x128xf32> to vector<1x3x128xf32>
    %30 = vector.shape_cast %29 : vector<1x3x128xf32> to vector<3x128xf32>
    %cst_20 = arith.constant dense<0.000000e+00> : vector<256x128xf32>
    %31 = tpu.matmul %28, %30, %cst_20 {dimension_numbers = #tpu.dot_dimension_numbers<[1], [0], [0], [1], [0, 0, 1, 1], [], []>} : vector<256x3xf32>, vector<3x128xf32>, vector<256x128xf32> -> vector<256x128xf32>
    %32 = arith.addf %26, %31 : vector<256x128xf32>
    %33 = vector.extract_strided_slice %5 {offsets = [1, 1, 0], sizes = [16, 16, 3], strides = [1, 1, 1]} : vector<18x18x3xf32> to vector<16x16x3xf32>
    %34 = vector.shape_cast %33 : vector<16x16x3xf32> to vector<256x3xf32>
    %35 = vector.extract_strided_slice %6 {offsets = [4, 0, 0], sizes = [1, 3, 128], strides = [1, 1, 1]} : vector<9x3x128xf32> to vector<1x3x128xf32>
    %36 = vector.shape_cast %35 : vector<1x3x128xf32> to vector<3x128xf32>
    %cst_21 = arith.constant dense<0.000000e+00> : vector<256x128xf32>
    %37 = tpu.matmul %34, %36, %cst_21 {dimension_numbers = #tpu.dot_dimension_numbers<[1], [0], [0], [1], [0, 0, 1, 1], [], []>} : vector<256x3xf32>, vector<3x128xf32>, vector<256x128xf32> -> vector<256x128xf32>
    %38 = arith.addf %32, %37 : vector<256x128xf32>
    %39 = vector.extract_strided_slice %5 {offsets = [1, 2, 0], sizes = [16, 16, 3], strides = [1, 1, 1]} : vector<18x18x3xf32> to vector<16x16x3xf32>
    %40 = vector.shape_cast %39 : vector<16x16x3xf32> to vector<256x3xf32>
    %41 = vector.extract_strided_slice %6 {offsets = [5, 0, 0], sizes = [1, 3, 128], strides = [1, 1, 1]} : vector<9x3x128xf32> to vector<1x3x128xf32>
    %42 = vector.shape_cast %41 : vector<1x3x128xf32> to vector<3x128xf32>
    %cst_22 = arith.constant dense<0.000000e+00> : vector<256x128xf32>
    %43 = tpu.matmul %40, %42, %cst_22 {dimension_numbers = #tpu.dot_dimension_numbers<[1], [0], [0], [1], [0, 0, 1, 1], [], []>} : vector<256x3xf32>, vector<3x128xf32>, vector<256x128xf32> -> vector<256x128xf32>
    %44 = arith.addf %38, %43 : vector<256x128xf32>
    %45 = vector.extract_strided_slice %5 {offsets = [2, 0, 0], sizes = [16, 16, 3], strides = [1, 1, 1]} : vector<18x18x3xf32> to vector<16x16x3xf32>
    %46 = vector.shape_cast %45 : vector<16x16x3xf32> to vector<256x3xf32>
    %47 = vector.extract_strided_slice %6 {offsets = [6, 0, 0], sizes = [1, 3, 128], strides = [1, 1, 1]} : vector<9x3x128xf32> to vector<1x3x128xf32>
    %48 = vector.shape_cast %47 : vector<1x3x128xf32> to vector<3x128xf32>
    %cst_23 = arith.constant dense<0.000000e+00> : vector<256x128xf32>
    %49 = tpu.matmul %46, %48, %cst_23 {dimension_numbers = #tpu.dot_dimension_numbers<[1], [0], [0], [1], [0, 0, 1, 1], [], []>} : vector<256x3xf32>, vector<3x128xf32>, vector<256x128xf32> -> vector<256x128xf32>
    %50 = arith.addf %44, %49 : vector<256x128xf32>
    %51 = vector.extract_strided_slice %5 {offsets = [2, 1, 0], sizes = [16, 16, 3], strides = [1, 1, 1]} : vector<18x18x3xf32> to vector<16x16x3xf32>
    %52 = vector.shape_cast %51 : vector<16x16x3xf32> to vector<256x3xf32>
    %53 = vector.extract_strided_slice %6 {offsets = [7, 0, 0], sizes = [1, 3, 128], strides = [1, 1, 1]} : vector<9x3x128xf32> to vector<1x3x128xf32>
    %54 = vector.shape_cast %53 : vector<1x3x128xf32> to vector<3x128xf32>
    %cst_24 = arith.constant dense<0.000000e+00> : vector<256x128xf32>
    %55 = tpu.matmul %52, %54, %cst_24 {dimension_numbers = #tpu.dot_dimension_numbers<[1], [0], [0], [1], [0, 0, 1, 1], [], []>} : vector<256x3xf32>, vector<3x128xf32>, vector<256x128xf32> -> vector<256x128xf32>
    %56 = arith.addf %50, %55 : vector<256x128xf32>
    %57 = vector.extract_strided_slice %5 {offsets = [2, 2, 0], sizes = [16, 16, 3], strides = [1, 1, 1]} : vector<18x18x3xf32> to vector<16x16x3xf32>
    %58 = vector.shape_cast %57 : vector<16x16x3xf32> to vector<256x3xf32>
    %59 = vector.extract_strided_slice %6 {offsets = [8, 0, 0], sizes = [1, 3, 128], strides = [1, 1, 1]} : vector<9x3x128xf32> to vector<1x3x128xf32>
    %60 = vector.shape_cast %59 : vector<1x3x128xf32> to vector<3x128xf32>
    %cst_25 = arith.constant dense<0.000000e+00> : vector<256x128xf32>
    %61 = tpu.matmul %58, %60, %cst_25 {dimension_numbers = #tpu.dot_dimension_numbers<[1], [0], [0], [1], [0, 0, 1, 1], [], []>} : vector<256x3xf32>, vector<3x128xf32>, vector<256x128xf32> -> vector<256x128xf32>
    %62 = arith.addf %56, %61 : vector<256x128xf32>
    %63 = vector.extract_strided_slice %7 {offsets = [0, 0], sizes = [1, 128], strides = [1, 1]} : vector<2x128xf32> to vector<1x128xf32>
    %64 = vector.broadcast %63 : vector<1x128xf32> to vector<256x128xf32>
    %65 = arith.mulf %62, %64 : vector<256x128xf32>
    %66 = vector.extract_strided_slice %7 {offsets = [1, 0], sizes = [1, 128], strides = [1, 1]} : vector<2x128xf32> to vector<1x128xf32>
    %67 = vector.broadcast %66 : vector<1x128xf32> to vector<256x128xf32>
    %68 = arith.addf %65, %67 : vector<256x128xf32>
    %cst_26 = arith.constant 0.000000e+00 : f32
    %69 = vector.broadcast %cst_26 : f32 to vector<256x128xf32>
    %70 = arith.maximumf %68, %69 : vector<256x128xf32>
    %71 = vector.shape_cast %70 : vector<256x128xf32> to vector<8x2x16x128xf32>
    %cst_27 = arith.constant dense<0xFF800000> : vector<8x16x128xf32>
    %72 = vector.multi_reduction <maximumf>, %71, %cst_27 [1] : vector<8x2x16x128xf32> to vector<8x16x128xf32>
    %73 = vector.shape_cast %72 : vector<8x16x128xf32> to vector<128x128xf32>
    %c0_28 = arith.constant 0 : index
    %c0_29 = arith.constant 0 : index
    %c0_30 = arith.constant 0 : index
    %74 = vector.load %arg4[%c0_28, %c0_29, %c0_30] : memref<2x64x128xf32, #tpu.memory_space<vmem>>, vector<2x64x128xf32>
    %75 = vector.extract_strided_slice %74 {offsets = [0, 0, 0], sizes = [1, 64, 128], strides = [1, 1, 1]} : vector<2x64x128xf32> to vector<1x64x128xf32>
    %76 = vector.shape_cast %75 : vector<1x64x128xf32> to vector<64x128xf32>
    %cst_31 = arith.constant dense<0.000000e+00> : vector<64x128xf32>
    %77 = tpu.matmul %76, %73, %cst_31 {dimension_numbers = #tpu.dot_dimension_numbers<[1], [0], [0], [1], [0, 0, 1, 1], [], []>} : vector<64x128xf32>, vector<128x128xf32>, vector<64x128xf32> -> vector<64x128xf32>
    %78 = vector.extract_strided_slice %74 {offsets = [1, 0, 0], sizes = [1, 64, 128], strides = [1, 1, 1]} : vector<2x64x128xf32> to vector<1x64x128xf32>
    %79 = vector.shape_cast %78 : vector<1x64x128xf32> to vector<64x128xf32>
    %cst_32 = arith.constant dense<0.000000e+00> : vector<64x128xf32>
    %80 = tpu.matmul %79, %73, %cst_32 {dimension_numbers = #tpu.dot_dimension_numbers<[1], [0], [0], [1], [0, 0, 1, 1], [], []>} : vector<64x128xf32>, vector<128x128xf32>, vector<64x128xf32> -> vector<64x128xf32>
    %81 = arith.maximumf %77, %80 : vector<64x128xf32>
    %cst_33 = arith.constant 0.000000e+00 : f32
    %82 = vector.broadcast %cst_33 : f32 to vector<10x10x128xf32>
    %c0_34 = arith.constant 0 : index
    %c0_35 = arith.constant 0 : index
    %c0_36 = arith.constant 0 : index
    %83 = vector.load %arg13[%c0_34, %c0_35, %c0_36] : memref<10x10x128xf32, #tpu.memory_space<vmem>>, vector<10x10x128xf32>
    tpu.vector_store %arg13[%c0_34, %c0_35, %c0_36], %82 {strides = array<i32>} : memref<10x10x128xf32, #tpu.memory_space<vmem>>, vector<10x10x128xf32>,
    %84 = vector.shape_cast %81 : vector<64x128xf32> to vector<8x8x128xf32>
    %c1_37 = arith.constant 1 : index
    %c1_38 = arith.constant 1 : index
    %c0_39 = arith.constant 0 : index
    %85 = vector.load %arg13[%c1_37, %c1_38, %c0_39] : memref<10x10x128xf32, #tpu.memory_space<vmem>>, vector<8x8x128xf32>
    tpu.vector_store %arg13[%c1_37, %c1_38, %c0_39], %84 {strides = array<i32>} : memref<10x10x128xf32, #tpu.memory_space<vmem>>, vector<8x8x128xf32>,
    %c0_40 = arith.constant 0 : index
    %c0_41 = arith.constant 0 : index
    %c0_42 = arith.constant 0 : index
    %86 = vector.load %arg13[%c0_40, %c0_41, %c0_42] : memref<10x10x128xf32, #tpu.memory_space<vmem>>, vector<10x10x128xf32>
    %c0_43 = arith.constant 0 : index
    %c0_44 = arith.constant 0 : index
    %87 = vector.load %arg5[%c0_43, %c0_44] : memref<1152x128xf32, #tpu.memory_space<vmem>>, vector<1152x128xf32>
    %c0_45 = arith.constant 0 : index
    %c0_46 = arith.constant 0 : index
    %88 = vector.load %arg6[%c0_45, %c0_46] : memref<2x128xf32, #tpu.memory_space<vmem>>, vector<2x128xf32>
    %89 = vector.extract_strided_slice %86 {offsets = [0, 0, 0], sizes = [8, 8, 128], strides = [1, 1, 1]} : vector<10x10x128xf32> to vector<8x8x128xf32>
    %90 = vector.shape_cast %89 : vector<8x8x128xf32> to vector<64x128xf32>
    %91 = vector.extract_strided_slice %86 {offsets = [0, 1, 0], sizes = [8, 8, 128], strides = [1, 1, 1]} : vector<10x10x128xf32> to vector<8x8x128xf32>
    %92 = vector.shape_cast %91 : vector<8x8x128xf32> to vector<64x128xf32>
    %93 = vector.extract_strided_slice %86 {offsets = [0, 2, 0], sizes = [8, 8, 128], strides = [1, 1, 1]} : vector<10x10x128xf32> to vector<8x8x128xf32>
    %94 = vector.shape_cast %93 : vector<8x8x128xf32> to vector<64x128xf32>
    %95 = vector.extract_strided_slice %86 {offsets = [1, 0, 0], sizes = [8, 8, 128], strides = [1, 1, 1]} : vector<10x10x128xf32> to vector<8x8x128xf32>
    %96 = vector.shape_cast %95 : vector<8x8x128xf32> to vector<64x128xf32>
    %97 = vector.extract_strided_slice %86 {offsets = [1, 1, 0], sizes = [8, 8, 128], strides = [1, 1, 1]} : vector<10x10x128xf32> to vector<8x8x128xf32>
    %98 = vector.shape_cast %97 : vector<8x8x128xf32> to vector<64x128xf32>
    %99 = vector.extract_strided_slice %86 {offsets = [1, 2, 0], sizes = [8, 8, 128], strides = [1, 1, 1]} : vector<10x10x128xf32> to vector<8x8x128xf32>
    %100 = vector.shape_cast %99 : vector<8x8x128xf32> to vector<64x128xf32>
    %101 = vector.extract_strided_slice %86 {offsets = [2, 0, 0], sizes = [8, 8, 128], strides = [1, 1, 1]} : vector<10x10x128xf32> to vector<8x8x128xf32>
    %102 = vector.shape_cast %101 : vector<8x8x128xf32> to vector<64x128xf32>
    %103 = vector.extract_strided_slice %86 {offsets = [2, 1, 0], sizes = [8, 8, 128], strides = [1, 1, 1]} : vector<10x10x128xf32> to vector<8x8x128xf32>
    %104 = vector.shape_cast %103 : vector<8x8x128xf32> to vector<64x128xf32>
    %105 = vector.extract_strided_slice %86 {offsets = [2, 2, 0], sizes = [8, 8, 128], strides = [1, 1, 1]} : vector<10x10x128xf32> to vector<8x8x128xf32>
    %106 = vector.shape_cast %105 : vector<8x8x128xf32> to vector<64x128xf32>
    %107 = tpu.concatenate %90, %92, %94, %96, %98, %100, %102, %104, %106 in 1 : vector<64x128xf32>, vector<64x128xf32>, vector<64x128xf32>, vector<64x128xf32>, vector<64x128xf32>, vector<64x128xf32>, vector<64x128xf32>, vector<64x128xf32>, vector<64x128xf32> -> vector<64x1152xf32>
    %cst_47 = arith.constant dense<0.000000e+00> : vector<64x128xf32>
    %108 = tpu.matmul %107, %87, %cst_47 {dimension_numbers = #tpu.dot_dimension_numbers<[1], [0], [0], [1], [0, 0, 1, 1], [], []>} : vector<64x1152xf32>, vector<1152x128xf32>, vector<64x128xf32> -> vector<64x128xf32>
    %109 = vector.extract_strided_slice %88 {offsets = [0, 0], sizes = [1, 128], strides = [1, 1]} : vector<2x128xf32> to vector<1x128xf32>
    %110 = vector.broadcast %109 : vector<1x128xf32> to vector<64x128xf32>
    %111 = arith.mulf %108, %110 : vector<64x128xf32>
    %112 = vector.extract_strided_slice %88 {offsets = [1, 0], sizes = [1, 128], strides = [1, 1]} : vector<2x128xf32> to vector<1x128xf32>
    %113 = vector.broadcast %112 : vector<1x128xf32> to vector<64x128xf32>
    %114 = arith.addf %111, %113 : vector<64x128xf32>
    %cst_48 = arith.constant 0.000000e+00 : f32
    %115 = vector.broadcast %cst_48 : f32 to vector<64x128xf32>
    %116 = arith.maximumf %114, %115 : vector<64x128xf32>
    %cst_49 = arith.constant 0.000000e+00 : f32
    %117 = vector.broadcast %cst_49 : f32 to vector<10x10x128xf32>
    %c0_50 = arith.constant 0 : index
    %c0_51 = arith.constant 0 : index
    %c0_52 = arith.constant 0 : index
    %118 = vector.load %arg14[%c0_50, %c0_51, %c0_52] : memref<10x10x128xf32, #tpu.memory_space<vmem>>, vector<10x10x128xf32>
    tpu.vector_store %arg14[%c0_50, %c0_51, %c0_52], %117 {strides = array<i32>} : memref<10x10x128xf32, #tpu.memory_space<vmem>>, vector<10x10x128xf32>,
    %119 = vector.shape_cast %116 : vector<64x128xf32> to vector<8x8x128xf32>
    %c1_53 = arith.constant 1 : index
    %c1_54 = arith.constant 1 : index
    %c0_55 = arith.constant 0 : index
    %120 = vector.load %arg14[%c1_53, %c1_54, %c0_55] : memref<10x10x128xf32, #tpu.memory_space<vmem>>, vector<8x8x128xf32>
    tpu.vector_store %arg14[%c1_53, %c1_54, %c0_55], %119 {strides = array<i32>} : memref<10x10x128xf32, #tpu.memory_space<vmem>>, vector<8x8x128xf32>,
    %c0_56 = arith.constant 0 : index
    %c0_57 = arith.constant 0 : index
    %c0_58 = arith.constant 0 : index
    %121 = vector.load %arg14[%c0_56, %c0_57, %c0_58] : memref<10x10x128xf32, #tpu.memory_space<vmem>>, vector<10x10x128xf32>
    %c0_59 = arith.constant 0 : index
    %c0_60 = arith.constant 0 : index
    %122 = vector.load %arg7[%c0_59, %c0_60] : memref<1152x128xf32, #tpu.memory_space<vmem>>, vector<1152x128xf32>
    %c0_61 = arith.constant 0 : index
    %c0_62 = arith.constant 0 : index
    %123 = vector.load %arg8[%c0_61, %c0_62] : memref<2x128xf32, #tpu.memory_space<vmem>>, vector<2x128xf32>
    %124 = vector.extract_strided_slice %121 {offsets = [0, 0, 0], sizes = [8, 8, 128], strides = [1, 1, 1]} : vector<10x10x128xf32> to vector<8x8x128xf32>
    %125 = vector.shape_cast %124 : vector<8x8x128xf32> to vector<64x128xf32>
    %126 = vector.extract_strided_slice %121 {offsets = [0, 1, 0], sizes = [8, 8, 128], strides = [1, 1, 1]} : vector<10x10x128xf32> to vector<8x8x128xf32>
    %127 = vector.shape_cast %126 : vector<8x8x128xf32> to vector<64x128xf32>
    %128 = vector.extract_strided_slice %121 {offsets = [0, 2, 0], sizes = [8, 8, 128], strides = [1, 1, 1]} : vector<10x10x128xf32> to vector<8x8x128xf32>
    %129 = vector.shape_cast %128 : vector<8x8x128xf32> to vector<64x128xf32>
    %130 = vector.extract_strided_slice %121 {offsets = [1, 0, 0], sizes = [8, 8, 128], strides = [1, 1, 1]} : vector<10x10x128xf32> to vector<8x8x128xf32>
    %131 = vector.shape_cast %130 : vector<8x8x128xf32> to vector<64x128xf32>
    %132 = vector.extract_strided_slice %121 {offsets = [1, 1, 0], sizes = [8, 8, 128], strides = [1, 1, 1]} : vector<10x10x128xf32> to vector<8x8x128xf32>
    %133 = vector.shape_cast %132 : vector<8x8x128xf32> to vector<64x128xf32>
    %134 = vector.extract_strided_slice %121 {offsets = [1, 2, 0], sizes = [8, 8, 128], strides = [1, 1, 1]} : vector<10x10x128xf32> to vector<8x8x128xf32>
    %135 = vector.shape_cast %134 : vector<8x8x128xf32> to vector<64x128xf32>
    %136 = vector.extract_strided_slice %121 {offsets = [2, 0, 0], sizes = [8, 8, 128], strides = [1, 1, 1]} : vector<10x10x128xf32> to vector<8x8x128xf32>
    %137 = vector.shape_cast %136 : vector<8x8x128xf32> to vector<64x128xf32>
    %138 = vector.extract_strided_slice %121 {offsets = [2, 1, 0], sizes = [8, 8, 128], strides = [1, 1, 1]} : vector<10x10x128xf32> to vector<8x8x128xf32>
    %139 = vector.shape_cast %138 : vector<8x8x128xf32> to vector<64x128xf32>
    %140 = vector.extract_strided_slice %121 {offsets = [2, 2, 0], sizes = [8, 8, 128], strides = [1, 1, 1]} : vector<10x10x128xf32> to vector<8x8x128xf32>
    %141 = vector.shape_cast %140 : vector<8x8x128xf32> to vector<64x128xf32>
    %142 = tpu.concatenate %125, %127, %129, %131, %133, %135, %137, %139, %141 in 1 : vector<64x128xf32>, vector<64x128xf32>, vector<64x128xf32>, vector<64x128xf32>, vector<64x128xf32>, vector<64x128xf32>, vector<64x128xf32>, vector<64x128xf32>, vector<64x128xf32> -> vector<64x1152xf32>
    %cst_63 = arith.constant dense<0.000000e+00> : vector<64x128xf32>
    %143 = tpu.matmul %142, %122, %cst_63 {dimension_numbers = #tpu.dot_dimension_numbers<[1], [0], [0], [1], [0, 0, 1, 1], [], []>} : vector<64x1152xf32>, vector<1152x128xf32>, vector<64x128xf32> -> vector<64x128xf32>
    %144 = vector.extract_strided_slice %123 {offsets = [0, 0], sizes = [1, 128], strides = [1, 1]} : vector<2x128xf32> to vector<1x128xf32>
    %145 = vector.broadcast %144 : vector<1x128xf32> to vector<64x128xf32>
    %146 = arith.mulf %143, %145 : vector<64x128xf32>
    %147 = vector.extract_strided_slice %123 {offsets = [1, 0], sizes = [1, 128], strides = [1, 1]} : vector<2x128xf32> to vector<1x128xf32>
    %148 = vector.broadcast %147 : vector<1x128xf32> to vector<64x128xf32>
    %149 = arith.addf %146, %148 : vector<64x128xf32>
    %cst_64 = arith.constant 0.000000e+00 : f32
    %150 = vector.broadcast %cst_64 : f32 to vector<64x128xf32>
    %151 = arith.maximumf %149, %150 : vector<64x128xf32>
    %152 = vector.shape_cast %151 : vector<64x128xf32> to vector<1x64x128xf32>
    %c0_65 = arith.constant 0 : index
    %c0_66 = arith.constant 0 : index
    %c0_67 = arith.constant 0 : index
    %153 = vector.load %arg9[%c0_65, %c0_66, %c0_67] : memref<6x64x128xf32, #tpu.memory_space<vmem>>, vector<6x64x128xf32>
    %154 = vector.broadcast %152 : vector<1x64x128xf32> to vector<6x64x128xf32>
    %155 = arith.mulf %154, %153 : vector<6x64x128xf32>
    %cst_68 = arith.constant dense<0.000000e+00> : vector<6x128xf32>
    %156 = vector.multi_reduction <add>, %155, %cst_68 [1] : vector<6x64x128xf32> to vector<6x128xf32>
    %cst_69 = arith.constant dense<0.000000e+00> : vector<6xf32>
    %157 = vector.multi_reduction <add>, %156, %cst_69 [1] : vector<6x128xf32> to vector<6xf32>
    %158 = vector.shape_cast %157 : vector<6xf32> to vector<6x1xf32>
    %c0_70 = arith.constant 0 : index
    %c0_71 = arith.constant 0 : index
    %159 = vector.load %arg10[%c0_70, %c0_71] : memref<6x1xf32, #tpu.memory_space<vmem>>, vector<6x1xf32>
    %160 = arith.addf %158, %159 : vector<6x1xf32>
    %161 = vector.shape_cast %160 : vector<6x1xf32> to vector<1x6x1xf32>
    %c0_72 = arith.constant 0 : index
    %c0_73 = arith.constant 0 : index
    %c0_74 = arith.constant 0 : index
    %162 = vector.load %arg11[%c0_72, %c0_73, %c0_74] : memref<1x6x1xf32, #tpu.memory_space<vmem>>, vector<1x6x1xf32>
    tpu.vector_store %arg11[%c0_72, %c0_73, %c0_74], %161 {strides = array<i32>} : memref<1x6x1xf32, #tpu.memory_space<vmem>>, vector<1x6x1xf32>,
    return
  }
  func.func @transform_0(%arg0: i32) -> (i32, i32, i32, i32) {
    %c0_i32 = arith.constant 0 : i32
    %c0_i32_0 = arith.constant 0 : i32
    %c0_i32_1 = arith.constant 0 : i32
    %c0_i32_2 = arith.constant 0 : i32
    return %arg0, %c0_i32, %c0_i32_0, %c0_i32_1 : i32, i32, i32, i32
  }
  func.func @transform_1(%arg0: i32) -> (i32, i32, i32) {
    %c0_i32 = arith.constant 0 : i32
    %c0_i32_0 = arith.constant 0 : i32
    %c0_i32_1 = arith.constant 0 : i32
    %c0_i32_2 = arith.constant 0 : i32
    return %c0_i32, %c0_i32_0, %c0_i32_1 : i32, i32, i32
  }
  func.func @transform_2(%arg0: i32) -> (i32, i32) {
    %c0_i32 = arith.constant 0 : i32
    %c0_i32_0 = arith.constant 0 : i32
    %c0_i32_1 = arith.constant 0 : i32
    return %c0_i32, %c0_i32_0 : i32, i32
  }
  func.func @transform_3(%arg0: i32) -> (i32, i32, i32) {
    %c0_i32 = arith.constant 0 : i32
    %c0_i32_0 = arith.constant 0 : i32
    %c0_i32_1 = arith.constant 0 : i32
    %c0_i32_2 = arith.constant 0 : i32
    return %c0_i32, %c0_i32_0, %c0_i32_1 : i32, i32, i32
  }
  func.func @transform_4(%arg0: i32) -> (i32, i32) {
    %c0_i32 = arith.constant 0 : i32
    %c0_i32_0 = arith.constant 0 : i32
    %c0_i32_1 = arith.constant 0 : i32
    return %c0_i32, %c0_i32_0 : i32, i32
  }
  func.func @transform_5(%arg0: i32) -> (i32, i32) {
    %c0_i32 = arith.constant 0 : i32
    %c0_i32_0 = arith.constant 0 : i32
    %c0_i32_1 = arith.constant 0 : i32
    return %c0_i32, %c0_i32_0 : i32, i32
  }
  func.func @transform_6(%arg0: i32) -> (i32, i32) {
    %c0_i32 = arith.constant 0 : i32
    %c0_i32_0 = arith.constant 0 : i32
    %c0_i32_1 = arith.constant 0 : i32
    return %c0_i32, %c0_i32_0 : i32, i32
  }
  func.func @transform_7(%arg0: i32) -> (i32, i32) {
    %c0_i32 = arith.constant 0 : i32
    %c0_i32_0 = arith.constant 0 : i32
    %c0_i32_1 = arith.constant 0 : i32
    return %c0_i32, %c0_i32_0 : i32, i32
  }
  func.func @transform_8(%arg0: i32) -> (i32, i32, i32) {
    %c0_i32 = arith.constant 0 : i32
    %c0_i32_0 = arith.constant 0 : i32
    %c0_i32_1 = arith.constant 0 : i32
    %c0_i32_2 = arith.constant 0 : i32
    return %c0_i32, %c0_i32_0, %c0_i32_1 : i32, i32, i32
  }
  func.func @transform_9(%arg0: i32) -> (i32, i32) {
    %c0_i32 = arith.constant 0 : i32
    %c0_i32_0 = arith.constant 0 : i32
    %c0_i32_1 = arith.constant 0 : i32
    return %c0_i32, %c0_i32_0 : i32, i32
  }
  func.func @transform_10(%arg0: i32) -> (i32, i32, i32) {
    %c0_i32 = arith.constant 0 : i32
    %c0_i32_0 = arith.constant 0 : i32
    %c0_i32_1 = arith.constant 0 : i32
    return %arg0, %c0_i32, %c0_i32_0 : i32, i32, i32
  }
}

</mosaic_0001>

<llo_original>
// kernel: convnet_forward.1
$region0: #{convnet_forward.1}
  #allocation0 [shape = 'u32[]', space=smem, size = 0x4, offset = 0x4, fixed_abs, tag = 'smem constant byte address 0x4 - core index']
  #allocation1 [shape = 'u32[144,128]{1,0:T(1,128)}', space=vmem, size = 0x12000, scoped, tag = 'internal scratch']
  #allocation2 [shape = 'f32[18,18,3]{2,1,0:T(8,128)}', space=vmem, size = 0x36000, scoped, tag = 'scratch operand']
  #allocation3 [shape = 'f32[10,10,128]{2,1,0:T(8,128)}', space=vmem, size = 0x14000, scoped, tag = 'scratch operand']
  #allocation4 [shape = 'f32[10,10,128]{2,1,0:T(8,128)}', space=vmem, size = 0x14000, scoped, tag = 'scratch operand']
  %s0 = inlined_call_operand.vmem [shape: f32[2,16,16,3], index: 0, kind: input, shape index: {}]
  %s1 = inlined_call_operand.vmem [shape: f32[9,3,128], index: 1, kind: input, shape index: {}]
  %s2 = inlined_call_operand.vmem [shape: f32[2,128], index: 2, kind: input, shape index: {}]
  %s3 = inlined_call_operand.vmem [shape: f32[2,64,128], index: 3, kind: input, shape index: {}]
  %s4 = inlined_call_operand.hbm [shape: f32[1152,128], index: 4, kind: input, shape index: {}]
  %s5 = inlined_call_operand.vmem [shape: f32[2,128], index: 5, kind: input, shape index: {}]
  %s6 = inlined_call_operand.hbm [shape: f32[1152,128], index: 6, kind: input, shape index: {}]
  %s7 = inlined_call_operand.vmem [shape: f32[2,128], index: 7, kind: input, shape index: {}]
  %s8 = inlined_call_operand.vmem [shape: f32[6,64,128], index: 8, kind: input, shape index: {}]
  %s9 = inlined_call_operand.vmem [shape: f32[6,1], index: 9, kind: input, shape index: {}]
  %s10 = inlined_call_operand.vmem [shape: f32[2,6,1], index: 10, kind: output, shape index: {}]
  %s11 = sld [smem:[#allocation0]]
  $region81: #{convnet_forward.1} parent=0
    _
  %s13 = ssub.s32 1, %s11
  %s14 = scalar_select 0, %s13, %s11
  $region1: #{convnet_forward.1} parent=0
    #allocation5 [shape = 'u8[589824]{0}', space=vmem, size = 0x90000, scoped, tag = 'input window, operand 4, single buffered']
    #allocation6 [shape = 's32[2]{0}', space=sflag, size = 0x8, scoped, tag = 'scoped memory for convnet_forward.1']
    #allocation7 [shape = 'u8[589824]{0}', space=vmem, size = 0x90000, scoped, tag = 'input window, operand 6, single buffered']
    #allocation8 [shape = 's32[1]{0}', space=sflag, size = 0x4, scoped, tag = 'scoped memory for convnet_forward.1']
    %15 = vsyncpa [#allocation6], 0
    %16 = vsyncpa [#allocation8], 0
    loop: start=0, step=1, limit=4
    $region2: #{convnet_forward.1} parent=1 // loop_pre_header
      _
    $region3: #{convnet_forward.1} parent=1 // loop_header
      %s18 = sphi 0, %s22
      %p19 = scmp.ge.s32.totalorder %s18, 4
      %s28 = sphi 0, %s30
      %s31 = sphi 0, %s28
      %s32 = sphi 0, %s31
      %s48 = sphi 0, %s32
      %s52 = sphi 0, %s52
      %s54 = sphi 0, %s52
      %s55 = sphi 0, %s54
      %s69 = sphi 0, %s55
      %s73 = sphi 0, %s73
      %s75 = sphi 0, %s73
      %s76 = sphi 0, %s75
      %s90 = sphi 0, %s76
      %s94 = sphi 0, %s94
      %s96 = sphi 0, %s94
      %s97 = sphi 0, %s96
      %s111 = sphi 0, %s97
      %s115 = sphi 0, %s115
      %s117 = sphi 0, %s115
      %s118 = sphi 0, %s117
      %s132 = sphi 0, %s118
      %s136 = sphi 0, %s136
      %s138 = sphi 0, %s136
      %s139 = sphi 0, %s138
      %s153 = sphi 0, %s139
      %s157 = sphi 0, %s157
      %s159 = sphi 0, %s157
      %s160 = sphi 0, %s159
      %s174 = sphi 0, %s160
      %s178 = sphi 0, %s178
      %s180 = sphi 0, %s178
      %s181 = sphi 0, %s180
      %s195 = sphi 0, %s181
      %s199 = sphi 0, %s199
      %s201 = sphi 0, %s199
      %s202 = sphi 0, %s201
      %s216 = sphi 0, %s202
      %s220 = sphi 0, %s220
      %s222 = sphi 0, %s220
      %s223 = sphi 0, %s222
      %s237 = sphi 0, %s223
      %s243 = sphi 0, %s245
      %s246 = sphi 0, %s243
      %s247 = sphi 0, %s246
      %s263 = sphi 0, %s247
    $region4: #{convnet_forward.1} parent=1 // loop_header_branch
      %21 = sbr.rel (%p19) target = $region8
    $region5: #{convnet_forward.1} parent=1 // loop_body
      %s23 = ssub.s32 %s18, 1
      %s24 = ssub.s32 %s18, 2
      %s25 = sadd.s32 %s18, 1
      %s26 = ssub.s32 %s18, %s25
      %p27 = scmp.eq.s32.totalorder %s26, 0
      %s29 = sadd.s32 %s28, 1
      %s30 = scalar_select %p27, %s28, %s29
      %p33 = pneg %p27
      %p34 = scmp.eq.s32.totalorder %s18, 1
      %p35 = por %p33, %p34
      %p36 = scmp.ne.s32.totalorder %s28, %s31
      %p37 = scmp.eq.s32.totalorder %s18, 0
      %p38 = por %p36, %p37
      %p39 = scmp.ne.s32.totalorder %s28, %s31
      %p40 = scmp.eq.s32.totalorder %s23, 1
      %p41 = por %p39, %p40
      %p42 = scmp.ne.s32.totalorder %s31, %s32
      %p43 = scmp.eq.s32.totalorder %s23, 0
      %p44 = por %p42, %p43
      %p45 = scmp.ne.s32.totalorder %s31, %s32
      %p46 = scmp.eq.s32.totalorder %s24, 1
      %p47 = por %p45, %p46
      %p49 = scmp.ne.s32.totalorder %s32, %s48
      %p50 = scmp.eq.s32.totalorder %s24, 0
      %p51 = por %p49, %p50
      %s53 = sadd.s32 %s52, 1
      %p56 = scmp.eq.s32.totalorder %s18, 1
      %p57 = scmp.ne.s32.totalorder %s52, %s54
      %p58 = scmp.eq.s32.totalorder %s18, 0
      %p59 = por %p57, %p58
      %p60 = scmp.ne.s32.totalorder %s52, %s54
      %p61 = scmp.eq.s32.totalorder %s23, 1
      %p62 = por %p60, %p61
      %p63 = scmp.ne.s32.totalorder %s54, %s55
      %p64 = scmp.eq.s32.totalorder %s23, 0
      %p65 = por %p63, %p64
      %p66 = scmp.ne.s32.totalorder %s54, %s55
      %p67 = scmp.eq.s32.totalorder %s24, 1
      %p68 = por %p66, %p67
      %p70 = scmp.ne.s32.totalorder %s55, %s69
      %p71 = scmp.eq.s32.totalorder %s24, 0
      %p72 = por %p70, %p71
      %s74 = sadd.s32 %s73, 1
      %p77 = scmp.eq.s32.totalorder %s18, 1
      %p78 = scmp.ne.s32.totalorder %s73, %s75
      %p79 = scmp.eq.s32.totalorder %s18, 0
      %p80 = por %p78, %p79
      %p81 = scmp.ne.s32.totalorder %s73, %s75
      %p82 = scmp.eq.s32.totalorder %s23, 1
      %p83 = por %p81, %p82
      %p84 = scmp.ne.s32.totalorder %s75, %s76
      %p85 = scmp.eq.s32.totalorder %s23, 0
      %p86 = por %p84, %p85
      %p87 = scmp.ne.s32.totalorder %s75, %s76
      %p88 = scmp.eq.s32.totalorder %s24, 1
      %p89 = por %p87, %p88
      %p91 = scmp.ne.s32.totalorder %s76, %s90
      %p92 = scmp.eq.s32.totalorder %s24, 0
      %p93 = por %p91, %p92
      %s95 = sadd.s32 %s94, 1
      %p98 = scmp.eq.s32.totalorder %s18, 1
      %p99 = scmp.ne.s32.totalorder %s94, %s96
      %p100 = scmp.eq.s32.totalorder %s18, 0
      %p101 = por %p99, %p100
      %p102 = scmp.ne.s32.totalorder %s94, %s96
      %p103 = scmp.eq.s32.totalorder %s23, 1
      %p104 = por %p102, %p103
      %p105 = scmp.ne.s32.totalorder %s96, %s97
      %p106 = scmp.eq.s32.totalorder %s23, 0
      %p107 = por %p105, %p106
      %p108 = scmp.ne.s32.totalorder %s96, %s97
      %p109 = scmp.eq.s32.totalorder %s24, 1
      %p110 = por %p108, %p109
      %p112 = scmp.ne.s32.totalorder %s97, %s111
      %p113 = scmp.eq.s32.totalorder %s24, 0
      %p114 = por %p112, %p113
      %s116 = sadd.s32 %s115, 1
      %p119 = scmp.eq.s32.totalorder %s18, 1
      %p120 = scmp.ne.s32.totalorder %s115, %s117
      %p121 = scmp.eq.s32.totalorder %s18, 0
      %p122 = por %p120, %p121
      %p123 = scmp.ne.s32.totalorder %s115, %s117
      %p124 = scmp.eq.s32.totalorder %s23, 1
      %p125 = por %p123, %p124
      %p126 = scmp.ne.s32.totalorder %s117, %s118
      %p127 = scmp.eq.s32.totalorder %s23, 0
      %p128 = por %p126, %p127
      %p129 = scmp.ne.s32.totalorder %s117, %s118
      %p130 = scmp.eq.s32.totalorder %s24, 1
      %p131 = por %p129, %p130
      %p133 = scmp.ne.s32.totalorder %s118, %s132
      %p134 = scmp.eq.s32.totalorder %s24, 0
      %p135 = por %p133, %p134
      %s137 = sadd.s32 %s136, 1
      %p140 = scmp.eq.s32.totalorder %s18, 1
      %p141 = scmp.ne.s32.totalorder %s136, %s138
      %p142 = scmp.eq.s32.totalorder %s18, 0
      %p143 = por %p141, %p142
      %p144 = scmp.ne.s32.totalorder %s136, %s138
      %p145 = scmp.eq.s32.totalorder %s23, 1
      %p146 = por %p144, %p145
      %p147 = scmp.ne.s32.totalorder %s138, %s139
      %p148 = scmp.eq.s32.totalorder %s23, 0
      %p149 = por %p147, %p148
      %p150 = scmp.ne.s32.totalorder %s138, %s139
      %p151 = scmp.eq.s32.totalorder %s24, 1
      %p152 = por %p150, %p151
      %p154 = scmp.ne.s32.totalorder %s139, %s153
      %p155 = scmp.eq.s32.totalorder %s24, 0
      %p156 = por %p154, %p155
      %s158 = sadd.s32 %s157, 1
      %p161 = scmp.eq.s32.totalorder %s18, 1
      %p162 = scmp.ne.s32.totalorder %s157, %s159
      %p163 = scmp.eq.s32.totalorder %s18, 0
      %p164 = por %p162, %p163
      %p165 = scmp.ne.s32.totalorder %s157, %s159
      %p166 = scmp.eq.s32.totalorder %s23, 1
      %p167 = por %p165, %p166
      %p168 = scmp.ne.s32.totalorder %s159, %s160
      %p169 = scmp.eq.s32.totalorder %s23, 0
      %p170 = por %p168, %p169
      %p171 = scmp.ne.s32.totalorder %s159, %s160
      %p172 = scmp.eq.s32.totalorder %s24, 1
      %p173 = por %p171, %p172
      %p175 = scmp.ne.s32.totalorder %s160, %s174
      %p176 = scmp.eq.s32.totalorder %s24, 0
      %p177 = por %p175, %p176
      %s179 = sadd.s32 %s178, 1
      %p182 = scmp.eq.s32.totalorder %s18, 1
      %p183 = scmp.ne.s32.totalorder %s178, %s180
      %p184 = scmp.eq.s32.totalorder %s18, 0
      %p185 = por %p183, %p184
      %p186 = scmp.ne.s32.totalorder %s178, %s180
      %p187 = scmp.eq.s32.totalorder %s23, 1
      %p188 = por %p186, %p187
      %p189 = scmp.ne.s32.totalorder %s180, %s181
      %p190 = scmp.eq.s32.totalorder %s23, 0
      %p191 = por %p189, %p190
      %p192 = scmp.ne.s32.totalorder %s180, %s181
      %p193 = scmp.eq.s32.totalorder %s24, 1
      %p194 = por %p192, %p193
      %p196 = scmp.ne.s32.totalorder %s181, %s195
      %p197 = scmp.eq.s32.totalorder %s24, 0
      %p198 = por %p196, %p197
      %s200 = sadd.s32 %s199, 1
      %p203 = scmp.eq.s32.totalorder %s18, 1
      %p204 = scmp.ne.s32.totalorder %s199, %s201
      %p205 = scmp.eq.s32.totalorder %s18, 0
      %p206 = por %p204, %p205
      %p207 = scmp.ne.s32.totalorder %s199, %s201
      %p208 = scmp.eq.s32.totalorder %s23, 1
      %p209 = por %p207, %p208
      %p210 = scmp.ne.s32.totalorder %s201, %s202
      %p211 = scmp.eq.s32.totalorder %s23, 0
      %p212 = por %p210, %p211
      %p213 = scmp.ne.s32.totalorder %s201, %s202
      %p214 = scmp.eq.s32.totalorder %s24, 1
      %p215 = por %p213, %p214
      %p217 = scmp.ne.s32.totalorder %s202, %s216
      %p218 = scmp.eq.s32.totalorder %s24, 0
      %p219 = por %p217, %p218
      %s221 = sadd.s32 %s220, 1
      %p224 = scmp.eq.s32.totalorder %s18, 1
      %p225 = scmp.ne.s32.totalorder %s220, %s222
      %p226 = scmp.eq.s32.totalorder %s18, 0
      %p227 = por %p225, %p226
      %p228 = scmp.ne.s32.totalorder %s220, %s222
      %p229 = scmp.eq.s32.totalorder %s23, 1
      %p230 = por %p228, %p229
      %p231 = scmp.ne.s32.totalorder %s222, %s223
      %p232 = scmp.eq.s32.totalorder %s23, 0
      %p233 = por %p231, %p232
      %p234 = scmp.ne.s32.totalorder %s222, %s223
      %p235 = scmp.eq.s32.totalorder %s24, 1
      %p236 = por %p234, %p235
      %p238 = scmp.ne.s32.totalorder %s223, %s237
      %p239 = scmp.eq.s32.totalorder %s24, 0
      %p240 = por %p238, %p239
      %s241 = ssub.s32 %s18, %s25
      %p242 = scmp.eq.s32.totalorder %s241, 0
      %s244 = sadd.s32 %s243, 1
      %s245 = scalar_select %p242, %s243, %s244
      %p248 = pneg %p242
      %p249 = scmp.eq.s32.totalorder %s18, 1
      %p250 = por %p248, %p249
      %p251 = scmp.ne.s32.totalorder %s243, %s246
      %p252 = scmp.eq.s32.totalorder %s18, 0
      %p253 = por %p251, %p252
      %p254 = scmp.ne.s32.totalorder %s243, %s246
      %p255 = scmp.eq.s32.totalorder %s23, 1
      %p256 = por %p254, %p255
      %p257 = scmp.ne.s32.totalorder %s246, %s247
      %p258 = scmp.eq.s32.totalorder %s23, 0
      %p259 = por %p257, %p258
      %p260 = scmp.ne.s32.totalorder %s246, %s247
      %p261 = scmp.eq.s32.totalorder %s24, 1
      %p262 = por %p260, %p261
      %p264 = scmp.ne.s32.totalorder %s247, %s263
      %p265 = scmp.eq.s32.totalorder %s24, 0
      %p266 = por %p264, %p265
      %p267 = scmp.le.s32.totalorder 1, %s18
      %p268 = scmp.lt.s32.totalorder %s18, 3
      %p269 = pnand %p267, %p268
      %p270 = pneg %p269
      // Predicated region
      $region9: #{convnet_forward.1} parent=5 // pred_check
        _
      $region10: #{convnet_forward.1} parent=5 // pred_check_branch
        %272 = sbr.rel (%p269) target = $region12
      $region11: #{convnet_forward.1} parent=5 // pred_region
        %s273 = ssub.s32 %s18, 1
        // Predicated region
        $region13: #{convnet_forward.1} parent=11 // pred_check
          %p274 = pneg %p65
        $region14: #{convnet_forward.1} parent=11 // pred_check_branch
          %276 = sbr.rel (%p274) target = $region16
        $region15: #{convnet_forward.1} parent=11 // pred_region
          _
        $region16: #{convnet_forward.1} parent=11 // pred_fallthru
          _
        // Predicated region
        $region17: #{convnet_forward.1} parent=11 // pred_check
          %p277 = pneg %p86
        $region18: #{convnet_forward.1} parent=11 // pred_check_branch
          %279 = sbr.rel (%p277) target = $region20
        $region19: #{convnet_forward.1} parent=11 // pred_region
          _
        $region20: #{convnet_forward.1} parent=11 // pred_fallthru
          _
        // Predicated region
        $region21: #{convnet_forward.1} parent=11 // pred_check
          %p280 = pneg %p107
        $region22: #{convnet_forward.1} parent=11 // pred_check_branch
          %282 = sbr.rel (%p280) target = $region24
        $region23: #{convnet_forward.1} parent=11 // pred_region
          _
        $region24: #{convnet_forward.1} parent=11 // pred_fallthru
          _
        // Predicated region
        $region25: #{convnet_forward.1} parent=11 // pred_check
          %p283 = pneg %p128
        $region26: #{convnet_forward.1} parent=11 // pred_check_branch
          %285 = sbr.rel (%p283) target = $region28
        $region27: #{convnet_forward.1} parent=11 // pred_region
          %s287 = ssub.s32 18432, 18432
          %288 = vsyncadd [#allocation6], %s287
          %s289 = sshll.u32 [#allocation5], 4
          %s290 = int_to_ptr.vmem [resolvable:$true] %s289
          %295 = dma.hbm_to_vmem [thread:$0]  %s4, 18432, %s290, [#allocation6], 128, 128, 8
        $region28: #{convnet_forward.1} parent=11 // pred_fallthru
          _
        // Predicated region
        $region29: #{convnet_forward.1} parent=11 // pred_check
          %p296 = pneg %p149
        $region30: #{convnet_forward.1} parent=11 // pred_check_branch
          %298 = sbr.rel (%p296) target = $region32
        $region31: #{convnet_forward.1} parent=11 // pred_region
          _
        $region32: #{convnet_forward.1} parent=11 // pred_fallthru
          _
        // Predicated region
        $region33: #{convnet_forward.1} parent=11 // pred_check
          %p299 = pneg %p170
        $region34: #{convnet_forward.1} parent=11 // pred_check_branch
          %301 = sbr.rel (%p299) target = $region36
        $region35: #{convnet_forward.1} parent=11 // pred_region
          %s303 = ssub.s32 18432, 18432
          %304 = vsyncadd [#allocation8], %s303
          %s305 = sshll.u32 [#allocation7], 4
          %s306 = int_to_ptr.vmem [resolvable:$true] %s305
          %311 = dma.hbm_to_vmem [thread:$0]  %s6, 18432, %s306, [#allocation8], 128, 128, 8
        $region36: #{convnet_forward.1} parent=11 // pred_fallthru
          _
        // Predicated region
        $region37: #{convnet_forward.1} parent=11 // pred_check
          %p312 = pneg %p191
        $region38: #{convnet_forward.1} parent=11 // pred_check_branch
          %314 = sbr.rel (%p312) target = $region40
        $region39: #{convnet_forward.1} parent=11 // pred_region
          _
        $region40: #{convnet_forward.1} parent=11 // pred_fallthru
          _
        // Predicated region
        $region41: #{convnet_forward.1} parent=11 // pred_check
          %p315 = pneg %p212
        $region42: #{convnet_forward.1} parent=11 // pred_check_branch
          %317 = sbr.rel (%p315) target = $region44
        $region43: #{convnet_forward.1} parent=11 // pred_region
          _
        $region44: #{convnet_forward.1} parent=11 // pred_fallthru
          _
        // Predicated region
        $region45: #{convnet_forward.1} parent=11 // pred_check
          %p318 = pneg %p233
        $region46: #{convnet_forward.1} parent=11 // pred_check_branch
          %320 = sbr.rel (%p318) target = $region48
        $region47: #{convnet_forward.1} parent=11 // pred_region
          _
        $region48: #{convnet_forward.1} parent=11 // pred_fallthru
          _
      $region12: #{convnet_forward.1} parent=5 // pred_fallthru
        _
      %p321 = scmp.lt.s32.totalorder %s18, 2
      // Predicated region
      $region49: #{convnet_forward.1} parent=5 // pred_check
        %p322 = pneg %p321
      $region50: #{convnet_forward.1} parent=5 // pred_check_branch
        %324 = sbr.rel (%p322) target = $region52
      $region51: #{convnet_forward.1} parent=5 // pred_region
        // Predicated region
        $region53: #{convnet_forward.1} parent=51 // pred_check
          %p325 = pneg %p38
        $region54: #{convnet_forward.1} parent=51 // pred_check_branch
          %327 = sbr.rel (%p325) target = $region56
        $region55: #{convnet_forward.1} parent=51 // pred_region
          %p328 = scmp.lt.s32.totalorder %s18, 1
          %s329 = scalar_select %p328, %s18, 1
          %s330 = smul.addr %s329, 32
          %s331 = smul.addr %s330, 8
          %s332 = scalar_lea.vmem %s0, %s331
        $region56: #{convnet_forward.1} parent=51 // pred_fallthru
          _
      $region52: #{convnet_forward.1} parent=5 // pred_fallthru
        _
      %p333 = scmp.le.s32.totalorder 1, %s18
      %p334 = scmp.lt.s32.totalorder %s18, 3
      %p335 = pnand %p333, %p334
      %p336 = pneg %p335
      // Predicated region
      $region57: #{convnet_forward.1} parent=5 // pred_check
        _
      $region58: #{convnet_forward.1} parent=5 // pred_check_branch
        %338 = sbr.rel (%p335) target = $region60
      $region59: #{convnet_forward.1} parent=5 // pred_region
        %s339 = ssub.s32 %s18, 1
        // Predicated region
        $region61: #{convnet_forward.1} parent=59 // pred_check
          %p340 = pneg %p128
        $region62: #{convnet_forward.1} parent=59 // pred_check_branch
          %342 = sbr.rel (%p340) target = $region64
        $region63: #{convnet_forward.1} parent=59 // pred_region
          %343 = dma.done [#allocation6], 18432
        $region64: #{convnet_forward.1} parent=59 // pred_fallthru
          _
        // Predicated region
        $region65: #{convnet_forward.1} parent=59 // pred_check
          %p344 = pneg %p170
        $region66: #{convnet_forward.1} parent=59 // pred_check_branch
          %346 = sbr.rel (%p344) target = $region68
        $region67: #{convnet_forward.1} parent=59 // pred_region
          %347 = dma.done [#allocation8], 18432
        $region68: #{convnet_forward.1} parent=59 // pred_fallthru
          _
        %p348 = scmp.lt.s32.totalorder %s23, 1
        %s349 = scalar_select %p348, %s23, 1
        %s350 = smul.addr %s349, 32
        %s351 = smul.addr %s350, 8
        %s352 = scalar_lea.vmem %s0, %s351
        %p353 = pneg %p44
        %p354 = pneg %p41
        %p355 = pneg %p65
        %p356 = pneg %p62
        %p357 = pneg %p86
        %p358 = pneg %p83
        %p359 = pneg %p107
        %p360 = pneg %p104
        %p361 = pneg %p128
        %p362 = pneg %p125
        %p363 = pneg %p149
        %p364 = pneg %p146
        %p365 = pneg %p170
        %p366 = pneg %p167
        %p367 = pneg %p191
        %p368 = pneg %p188
        %p369 = pneg %p212
        %p370 = pneg %p209
        %p371 = pneg %p233
        %p372 = pneg %p230
        %p373 = pneg %p259
        %p374 = pneg %p256
        %p375 = scmp.lt.s32.totalorder %s23, 1
        %s376 = scalar_select %p375, %s23, 1
        %s377 = smul.addr %s376, 8
        %s378 = scalar_lea.vmem %s10, %s377
        %p379 = scmp.lt.s32.totalorder %s23, 1
        %s380 = scalar_select %p379, %s23, 1
        %s381 = smul.addr %s380, 32
        %s382 = smul.addr %s381, 8
        %s383 = scalar_lea.vmem %s0, %s382
        %p384 = scmp.lt.s32.totalorder %s23, 1
        %s385 = scalar_select %p384, %s23, 1
        %s386 = smul.addr %s385, 8
        %s387 = scalar_lea.vmem %s10, %s386
        %vm388 = vcmask 23552
        %389 = vst.msk [vmem:[#allocation2] sm:$0xff] %vm388, 0.0
        %390 = vst.msk [vmem:[#allocation2 + $0x8] sm:$0xff] %vm388, 0.0
        %vm391 = vcmask 17408
        %392 = vst.msk [vmem:[#allocation2 + $0x10] sm:$0x3] %vm391, 0.0
        %393 = vst.msk [vmem:[#allocation2 + $0x18] sm:$0xff] %vm388, 0.0
        %394 = vst.msk [vmem:[#allocation2 + $0x20] sm:$0xff] %vm388, 0.0
        %395 = vst.msk [vmem:[#allocation2 + $0x28] sm:$0x3] %vm391, 0.0
        %396 = vst.msk [vmem:[#allocation2 + $0x30] sm:$0xff] %vm388, 0.0
        %397 = vst.msk [vmem:[#allocation2 + $0x38] sm:$0xff] %vm388, 0.0
        %398 = vst.msk [vmem:[#allocation2 + $0x40] sm:$0x3] %vm391, 0.0
        %399 = vst.msk [vmem:[#allocation2 + $0x48] sm:$0xff] %vm388, 0.0
        %400 = vst.msk [vmem:[#allocation2 + $0x50] sm:$0xff] %vm388, 0.0
        %401 = vst.msk [vmem:[#allocation2 + $0x58] sm:$0x3] %vm391, 0.0
        %402 = vst.msk [vmem:[#allocation2 + $0x60] sm:$0xff] %vm388, 0.0
        %403 = vst.msk [vmem:[#allocation2 + $0x68] sm:$0xff] %vm388, 0.0
        %404 = vst.msk [vmem:[#allocation2 + $0x70] sm:$0x3] %vm391, 0.0
        %405 = vst.msk [vmem:[#allocation2 + $0x78] sm:$0xff] %vm388, 0.0
        %406 = vst.msk [vmem:[#allocation2 + $0x80] sm:$0xff] %vm388, 0.0
        %407 = vst.msk [vmem:[#allocation2 + $0x88] sm:$0x3] %vm391, 0.0
        %408 = vst.msk [vmem:[#allocation2 + $0x90] sm:$0xff] %vm388, 0.0
        %409 = vst.msk [vmem:[#allocation2 + $0x98] sm:$0xff] %vm388, 0.0
        %410 = vst.msk [vmem:[#allocation2 + $0xa0] sm:$0x3] %vm391, 0.0
        %411 = vst.msk [vmem:[#allocation2 + $0xa8] sm:$0xff] %vm388, 0.0
        %412 = vst.msk [vmem:[#allocation2 + $0xb0] sm:$0xff] %vm388, 0.0
        %413 = vst.msk [vmem:[#allocation2 + $0xb8] sm:$0x3] %vm391, 0.0
        %414 = vst.msk [vmem:[#allocation2 + $0xc0] sm:$0xff] %vm388, 0.0
        %415 = vst.msk [vmem:[#allocation2 + $0xc8] sm:$0xff] %vm388, 0.0
        %416 = vst.msk [vmem:[#allocation2 + $0xd0] sm:$0x3] %vm391, 0.0
        %417 = vst.msk [vmem:[#allocation2 + $0xd8] sm:$0xff] %vm388, 0.0
        %418 = vst.msk [vmem:[#allocation2 + $0xe0] sm:$0xff] %vm388, 0.0
        %419 = vst.msk [vmem:[#allocation2 + $0xe8] sm:$0x3] %vm391, 0.0
        %420 = vst.msk [vmem:[#allocation2 + $0xf0] sm:$0xff] %vm388, 0.0
        %421 = vst.msk [vmem:[#allocation2 + $0xf8] sm:$0xff] %vm388, 0.0
        %422 = vst.msk [vmem:[#allocation2 + $0x100] sm:$0x3] %vm391, 0.0
        %423 = vst.msk [vmem:[#allocation2 + $0x108] sm:$0xff] %vm388, 0.0
        %424 = vst.msk [vmem:[#allocation2 + $0x110] sm:$0xff] %vm388, 0.0
        %425 = vst.msk [vmem:[#allocation2 + $0x118] sm:$0x3] %vm391, 0.0
        %426 = vst.msk [vmem:[#allocation2 + $0x120] sm:$0xff] %vm388, 0.0
        %427 = vst.msk [vmem:[#allocation2 + $0x128] sm:$0xff] %vm388, 0.0
        %428 = vst.msk [vmem:[#allocation2 + $0x130] sm:$0x3] %vm391, 0.0
        %429 = vst.msk [vmem:[#allocation2 + $0x138] sm:$0xff] %vm388, 0.0
        %430 = vst.msk [vmem:[#allocation2 + $0x140] sm:$0xff] %vm388, 0.0
        %431 = vst.msk [vmem:[#allocation2 + $0x148] sm:$0x3] %vm391, 0.0
        %432 = vst.msk [vmem:[#allocation2 + $0x150] sm:$0xff] %vm388, 0.0
        %433 = vst.msk [vmem:[#allocation2 + $0x158] sm:$0xff] %vm388, 0.0
        %434 = vst.msk [vmem:[#allocation2 + $0x160] sm:$0x3] %vm391, 0.0
        %435 = vst.msk [vmem:[#allocation2 + $0x168] sm:$0xff] %vm388, 0.0
        %436 = vst.msk [vmem:[#allocation2 + $0x170] sm:$0xff] %vm388, 0.0
        %437 = vst.msk [vmem:[#allocation2 + $0x178] sm:$0x3] %vm391, 0.0
        %438 = vst.msk [vmem:[#allocation2 + $0x180] sm:$0xff] %vm388, 0.0
        %439 = vst.msk [vmem:[#allocation2 + $0x188] sm:$0xff] %vm388, 0.0
        %440 = vst.msk [vmem:[#allocation2 + $0x190] sm:$0x3] %vm391, 0.0
        %441 = vst.msk [vmem:[#allocation2 + $0x198] sm:$0xff] %vm388, 0.0
        %442 = vst.msk [vmem:[#allocation2 + $0x1a0] sm:$0xff] %vm388, 0.0
        %443 = vst.msk [vmem:[#allocation2 + $0x1a8] sm:$0x3] %vm391, 0.0
        %v444 = vld [vmem:[%s383] sm:$0xff]
        %v445 = vld [vmem:[%s383 + $0x8] sm:$0xff]
        %v446 = vld [vmem:[%s383 + $0x10] sm:$0xff]
        %v447 = vld [vmem:[%s383 + $0x18] sm:$0xff]
        %v448 = vld [vmem:[%s383 + $0x20] sm:$0xff]
        %v449 = vld [vmem:[%s383 + $0x28] sm:$0xff]
        %v450 = vld [vmem:[%s383 + $0x30] sm:$0xff]
        %v451 = vld [vmem:[%s383 + $0x38] sm:$0xff]
        %v452 = vld [vmem:[%s383 + $0x40] sm:$0xff]
        %v453 = vld [vmem:[%s383 + $0x48] sm:$0xff]
        %v454 = vld [vmem:[%s383 + $0x50] sm:$0xff]
        %v455 = vld [vmem:[%s383 + $0x58] sm:$0xff]
        %v456 = vld [vmem:[%s383 + $0x60] sm:$0xff]
        %v457 = vld [vmem:[%s383 + $0x68] sm:$0xff]
        %v458 = vld [vmem:[%s383 + $0x70] sm:$0xff]
        %v459 = vld [vmem:[%s383 + $0x78] sm:$0xff]
        %v460 = vld [vmem:[%s383 + $0x80] sm:$0xff]
        %v461 = vld [vmem:[%s383 + $0x88] sm:$0xff]
        %v462 = vld [vmem:[%s383 + $0x90] sm:$0xff]
        %v463 = vld [vmem:[%s383 + $0x98] sm:$0xff]
        %v464 = vld [vmem:[%s383 + $0xa0] sm:$0xff]
        %v465 = vld [vmem:[%s383 + $0xa8] sm:$0xff]
        %v466 = vld [vmem:[%s383 + $0xb0] sm:$0xff]
        %v467 = vld [vmem:[%s383 + $0xb8] sm:$0xff]
        %v468 = vld [vmem:[%s383 + $0xc0] sm:$0xff]
        %v469 = vld [vmem:[%s383 + $0xc8] sm:$0xff]
        %v470 = vld [vmem:[%s383 + $0xd0] sm:$0xff]
        %v471 = vld [vmem:[%s383 + $0xd8] sm:$0xff]
        %v472 = vld [vmem:[%s383 + $0xe0] sm:$0xff]
        %v473 = vld [vmem:[%s383 + $0xe8] sm:$0xff]
        %v474 = vld [vmem:[%s383 + $0xf0] sm:$0xff]
        %v475 = vld [vmem:[%s383 + $0xf8] sm:$0xff]
        %s476 = scalar_lea.vmem [#allocation2], 24
        %477 = vst.msk [vmem:[%s476 + $0x1] sm:$0xff] %vm388, %v444
        %478 = vst.msk [vmem:[%s476 + $0x9] sm:$0xff] %vm388, %v445
        %479 = vst.msk [vmem:[%s476 + $0x19] sm:$0xff] %vm388, %v446
        %480 = vst.msk [vmem:[%s476 + $0x21] sm:$0xff] %vm388, %v447
        %481 = vst.msk [vmem:[%s476 + $0x31] sm:$0xff] %vm388, %v448
        %482 = vst.msk [vmem:[%s476 + $0x39] sm:$0xff] %vm388, %v449
        %483 = vst.msk [vmem:[%s476 + $0x49] sm:$0xff] %vm388, %v450
        %484 = vst.msk [vmem:[%s476 + $0x51] sm:$0xff] %vm388, %v451
        %485 = vst.msk [vmem:[%s476 + $0x61] sm:$0xff] %vm388, %v452
        %486 = vst.msk [vmem:[%s476 + $0x69] sm:$0xff] %vm388, %v453
        %487 = vst.msk [vmem:[%s476 + $0x79] sm:$0xff] %vm388, %v454
        %488 = vst.msk [vmem:[%s476 + $0x81] sm:$0xff] %vm388, %v455
        %489 = vst.msk [vmem:[%s476 + $0x91] sm:$0xff] %vm388, %v456
        %490 = vst.msk [vmem:[%s476 + $0x99] sm:$0xff] %vm388, %v457
        %491 = vst.msk [vmem:[%s476 + $0xa9] sm:$0xff] %vm388, %v458
        %492 = vst.msk [vmem:[%s476 + $0xb1] sm:$0xff] %vm388, %v459
        %493 = vst.msk [vmem:[%s476 + $0xc1] sm:$0xff] %vm388, %v460
        %494 = vst.msk [vmem:[%s476 + $0xc9] sm:$0xff] %vm388, %v461
        %495 = vst.msk [vmem:[%s476 + $0xd9] sm:$0xff] %vm388, %v462
        %496 = vst.msk [vmem:[%s476 + $0xe1] sm:$0xff] %vm388, %v463
        %497 = vst.msk [vmem:[%s476 + $0xf1] sm:$0xff] %vm388, %v464
        %498 = vst.msk [vmem:[%s476 + $0xf9] sm:$0xff] %vm388, %v465
        %499 = vst.msk [vmem:[%s476 + $0x109] sm:$0xff] %vm388, %v466
        %500 = vst.msk [vmem:[%s476 + $0x111] sm:$0xff] %vm388, %v467
        %501 = vst.msk [vmem:[%s476 + $0x121] sm:$0xff] %vm388, %v468
        %502 = vst.msk [vmem:[%s476 + $0x129] sm:$0xff] %vm388, %v469
        %503 = vst.msk [vmem:[%s476 + $0x139] sm:$0xff] %vm388, %v470
        %504 = vst.msk [vmem:[%s476 + $0x141] sm:$0xff] %vm388, %v471
        %505 = vst.msk [vmem:[%s476 + $0x151] sm:$0xff] %vm388, %v472
        %506 = vst.msk [vmem:[%s476 + $0x159] sm:$0xff] %vm388, %v473
        %507 = vst.msk [vmem:[%s476 + $0x169] sm:$0xff] %vm388, %v474
        %508 = vst.msk [vmem:[%s476 + $0x171] sm:$0xff] %vm388, %v475
        %v509 = vld [vmem:[#allocation2] sm:$0xff]
        %v510 = vld [vmem:[#allocation2 + $0x8] sm:$0xff]
        %v511 = vld [vmem:[#allocation2 + $0x10] sm:$0x3]
        %v512 = vld [vmem:[#allocation2 + $0x18] sm:$0xff]
        %v513 = vld [vmem:[#allocation2 + $0x20] sm:$0xff]
        %v514 = vld [vmem:[#allocation2 + $0x28] sm:$0x3]
        %v515 = vld [vmem:[#allocation2 + $0x30] sm:$0xff]
        %v516 = vld [vmem:[#allocation2 + $0x38] sm:$0xff]
        %v517 = vld [vmem:[#allocation2 + $0x40] sm:$0x3]
        %v518 = vld [vmem:[#allocation2 + $0x48] sm:$0xff]
        %v519 = vld [vmem:[#allocation2 + $0x50] sm:$0xff]
        %v520 = vld [vmem:[#allocation2 + $0x58] sm:$0x3]
        %v521 = vld [vmem:[#allocation2 + $0x60] sm:$0xff]
        %v522 = vld [vmem:[#allocation2 + $0x68] sm:$0xff]
        %v523 = vld [vmem:[#allocation2 + $0x70] sm:$0x3]
        %v524 = vld [vmem:[#allocation2 + $0x78] sm:$0xff]
        %v525 = vld [vmem:[#allocation2 + $0x80] sm:$0xff]
        %v526 = vld [vmem:[#allocation2 + $0x88] sm:$0x3]
        %v527 = vld [vmem:[#allocation2 + $0x90] sm:$0xff]
        %v528 = vld [vmem:[#allocation2 + $0x98] sm:$0xff]
        %v529 = vld [vmem:[#allocation2 + $0xa0] sm:$0x3]
        %v530 = vld [vmem:[#allocation2 + $0xa8] sm:$0xff]
        %v531 = vld [vmem:[#allocation2 + $0xb0] sm:$0xff]
        %v532 = vld [vmem:[#allocation2 + $0xb8] sm:$0x3]
        %v533 = vld [vmem:[#allocation2 + $0xc0] sm:$0xff]
        %v534 = vld [vmem:[#allocation2 + $0xc8] sm:$0xff]
        %v535 = vld [vmem:[#allocation2 + $0xd0] sm:$0x3]
        %v536 = vld [vmem:[#allocation2 + $0xd8] sm:$0xff]
        %v537 = vld [vmem:[#allocation2 + $0xe0] sm:$0xff]
        %v538 = vld [vmem:[#allocation2 + $0xe8] sm:$0x3]
        %v539 = vld [vmem:[#allocation2 + $0xf0] sm:$0xff]
        %v540 = vld [vmem:[#allocation2 + $0xf8] sm:$0xff]
        %v541 = vld [vmem:[#allocation2 + $0x100] sm:$0x3]
        %v542 = vld [vmem:[#allocation2 + $0x108] sm:$0xff]
        %v543 = vld [vmem:[#allocation2 + $0x110] sm:$0xff]
        %v544 = vld [vmem:[#allocation2 + $0x118] sm:$0x3]
        %v545 = vld [vmem:[#allocation2 + $0x120] sm:$0xff]
        %v546 = vld [vmem:[#allocation2 + $0x128] sm:$0xff]
        %v547 = vld [vmem:[#allocation2 + $0x130] sm:$0x3]
        %v548 = vld [vmem:[#allocation2 + $0x138] sm:$0xff]
        %v549 = vld [vmem:[#allocation2 + $0x140] sm:$0xff]
        %v550 = vld [vmem:[#allocation2 + $0x148] sm:$0x3]
        %v551 = vld [vmem:[#allocation2 + $0x150] sm:$0xff]
        %v552 = vld [vmem:[#allocation2 + $0x158] sm:$0xff]
        %v553 = vld [vmem:[#allocation2 + $0x160] sm:$0x3]
        %v554 = vld [vmem:[#allocation2 + $0x168] sm:$0xff]
        %v555 = vld [vmem:[#allocation2 + $0x170] sm:$0xff]
        %v556 = vld [vmem:[#allocation2 + $0x178] sm:$0x3]
        %v557 = vld [vmem:[#allocation2 + $0x180] sm:$0xff]
        %v558 = vld [vmem:[#allocation2 + $0x188] sm:$0xff]
        %v559 = vld [vmem:[#allocation2 + $0x190] sm:$0x3]
        %v560 = vld [vmem:[#allocation2 + $0x198] sm:$0xff]
        %v561 = vld [vmem:[#allocation2 + $0x1a0] sm:$0xff]
        %v562 = vld [vmem:[#allocation2 + $0x1a8] sm:$0x3]
        %v563 = vld [vmem:[%s1] sm:$0x7]
        %v564 = vld [vmem:[%s1 + $0x4] sm:$0x7]
        %v565 = vld [vmem:[%s1 + $0x8] sm:$0x7]
        %v566 = vld [vmem:[%s1 + $0xc] sm:$0x7]
        %v567 = vld [vmem:[%s1 + $0x10] sm:$0x7]
        %v568 = vld [vmem:[%s1 + $0x14] sm:$0x7]
        %v569 = vld [vmem:[%s1 + $0x18] sm:$0x7]
        %v570 = vld [vmem:[%s1 + $0x1c] sm:$0x7]
        %v571 = vld [vmem:[%s1 + $0x20] sm:$0x7]
        %v572 = vld [vmem:[%s2] sm:$0x3]
        %vm621 = vcmask 1046528
        %v622 = vrot.slane %v509, 1
        %v623 = vrot.slane %v510, 1
        %v624 = vsel %vm621, %v622, %v623
        %v625 = vrot.slane %v511, 1
        %v626 = vsel %vm621, %v623, %v625
        %v627 = vrot.slane %v512, 1
        %v628 = vrot.slane %v513, 1
        %v629 = vsel %vm621, %v627, %v628
        %v630 = vrot.slane %v514, 1
        %v631 = vsel %vm621, %v628, %v630
        %v632 = vrot.slane %v515, 1
        %v633 = vrot.slane %v516, 1
        %v634 = vsel %vm621, %v632, %v633
        %v635 = vrot.slane %v517, 1
        %v636 = vsel %vm621, %v633, %v635
        %v637 = vrot.slane %v518, 1
        %v638 = vrot.slane %v519, 1
        %v639 = vsel %vm621, %v637, %v638
        %v640 = vrot.slane %v520, 1
        %v641 = vsel %vm621, %v638, %v640
        %v642 = vrot.slane %v521, 1
        %v643 = vrot.slane %v522, 1
        %v644 = vsel %vm621, %v642, %v643
        %v645 = vrot.slane %v523, 1
        %v646 = vsel %vm621, %v643, %v645
        %v647 = vrot.slane %v524, 1
        %v648 = vrot.slane %v525, 1
        %v649 = vsel %vm621, %v647, %v648
        %v650 = vrot.slane %v526, 1
        %v651 = vsel %vm621, %v648, %v650
        %v652 = vrot.slane %v527, 1
        %v653 = vrot.slane %v528, 1
        %v654 = vsel %vm621, %v652, %v653
        %v655 = vrot.slane %v529, 1
        %v656 = vsel %vm621, %v653, %v655
        %v657 = vrot.slane %v530, 1
        %v658 = vrot.slane %v531, 1
        %v659 = vsel %vm621, %v657, %v658
        %v660 = vrot.slane %v532, 1
        %v661 = vsel %vm621, %v658, %v660
        %v662 = vrot.slane %v533, 1
        %v663 = vrot.slane %v534, 1
        %v664 = vsel %vm621, %v662, %v663
        %v665 = vrot.slane %v535, 1
        %v666 = vsel %vm621, %v663, %v665
        %v667 = vrot.slane %v536, 1
        %v668 = vrot.slane %v537, 1
        %v669 = vsel %vm621, %v667, %v668
        %v670 = vrot.slane %v538, 1
        %v671 = vsel %vm621, %v668, %v670
        %v672 = vrot.slane %v539, 1
        %v673 = vrot.slane %v540, 1
        %v674 = vsel %vm621, %v672, %v673
        %v675 = vrot.slane %v541, 1
        %v676 = vsel %vm621, %v673, %v675
        %v677 = vrot.slane %v542, 1
        %v678 = vrot.slane %v543, 1
        %v679 = vsel %vm621, %v677, %v678
        %v680 = vrot.slane %v544, 1
        %v681 = vsel %vm621, %v678, %v680
        %v682 = vrot.slane %v545, 1
        %v683 = vrot.slane %v546, 1
        %v684 = vsel %vm621, %v682, %v683
        %v685 = vrot.slane %v547, 1
        %v686 = vsel %vm621, %v683, %v685
        %v687 = vrot.slane %v548, 1
        %v688 = vrot.slane %v549, 1
        %v689 = vsel %vm621, %v687, %v688
        %v690 = vrot.slane %v550, 1
        %v691 = vsel %vm621, %v688, %v690
        %v692 = vrot.slane %v551, 1
        %v693 = vrot.slane %v552, 1
        %v694 = vsel %vm621, %v692, %v693
        %v695 = vrot.slane %v553, 1
        %v696 = vsel %vm621, %v693, %v695
        %v697 = vrot.slane %v554, 1
        %v698 = vrot.slane %v555, 1
        %v699 = vsel %vm621, %v697, %v698
        %v700 = vrot.slane %v556, 1
        %v701 = vsel %vm621, %v698, %v700
        %v702 = vsel %vm388, %v624, 0
        %v704 = vsel %vm388, %v626, 0
        %v706 = vsel %vm388, %v629, 0
        %v708 = vsel %vm388, %v631, 0
        %v710 = vsel %vm388, %v634, 0
        %v712 = vsel %vm388, %v636, 0
        %v714 = vsel %vm388, %v639, 0
        %v716 = vsel %vm388, %v641, 0
        %v718 = vsel %vm388, %v644, 0
        %v720 = vsel %vm388, %v646, 0
        %v722 = vsel %vm388, %v649, 0
        %v724 = vsel %vm388, %v651, 0
        %v726 = vsel %vm388, %v654, 0
        %v728 = vsel %vm388, %v656, 0
        %v730 = vsel %vm388, %v659, 0
        %v732 = vsel %vm388, %v661, 0
        %v734 = vsel %vm388, %v664, 0
        %v736 = vsel %vm388, %v666, 0
        %v738 = vsel %vm388, %v669, 0
        %v740 = vsel %vm388, %v671, 0
        %v742 = vsel %vm388, %v674, 0
        %v744 = vsel %vm388, %v676, 0
        %v746 = vsel %vm388, %v679, 0
        %v748 = vsel %vm388, %v681, 0
        %v750 = vsel %vm388, %v684, 0
        %v752 = vsel %vm388, %v686, 0
        %v754 = vsel %vm388, %v689, 0
        %v756 = vsel %vm388, %v691, 0
        %v758 = vsel %vm388, %v694, 0
        %v760 = vsel %vm388, %v696, 0
        %v762 = vsel %vm388, %v699, 0
        %v764 = vsel %vm388, %v701, 0
        %vm766 = vcmask 1042432
        %v768 = vsel %vm766, %v564, 0
        %770 = vmatprep.subr.mxu0 0.0
        %771 = vmatpush1.msra.mxu0 %v768
        %772 = vmatprep.subr.mxu0 0.0
        %773 = vmatpush1.msra.mxu0 0.0
        %774 = vmatprep.subr.mxu0 0.0
        %775 = vmatpush1.msra.mxu0 0.0
        %776 = vmatprep.subr.mxu0 0.0
        %777 = vmatpush1.msra.mxu0 0.0
        %778 = vmatprep.subr.mxu0 0.0
        %779 = vmatpush1.msra.mxu0 0.0
        %780 = vmatprep.subr.mxu0 0.0
        %781 = vmatpush1.msra.mxu0 0.0
        %782 = vmatprep.subr.mxu0 0.0
        %783 = vmatpush1.msra.mxu0 0.0
        %784 = vmatprep.subr.mxu0 0.0
        %785 = vmatpush1.msra.mxu0 0.0
        %786 = vmatprep.subr.mxu0 0.0
        %787 = vmatpush1.msra.mxu0 0.0
        %788 = vmatprep.subr.mxu0 0.0
        %789 = vmatpush1.msra.mxu0 0.0
        %790 = vmatprep.subr.mxu0 0.0
        %791 = vmatpush1.msra.mxu0 0.0
        %792 = vmatprep.subr.mxu0 0.0
        %793 = vmatpush1.msra.mxu0 0.0
        %794 = vmatprep.subr.mxu0 0.0
        %795 = vmatpush1.msra.mxu0 0.0
        %796 = vmatprep.subr.mxu0 0.0
        %797 = vmatpush1.msra.mxu0 0.0
        %798 = vmatprep.subr.mxu0 0.0
        %799 = vmatpush1.msra.mxu0 0.0
        %800 = vmatprep.subr.mxu0 0.0
        %801 = vmatpush1.msra.mxu0 0.0
        %802 = vmatprep.subr.mxu0 0.0
        %803 = vmatpush1.msra.mxu0 0.0
        %804 = vmatprep.subr.mxu0 0.0
        %805 = vmatpush1.msra.mxu0 0.0
        %806 = vmatprep.subr.mxu0 0.0
        %807 = vmatpush1.msra.mxu0 0.0
        %808 = vmatprep.subr.mxu0 0.0
        %809 = vmatpush1.msra.mxu0 0.0
        %810 = vmatprep.subr.mxu0 0.0
        %811 = vmatpush1.msra.mxu0 0.0
        %812 = vmatprep.subr.mxu0 0.0
        %813 = vmatpush1.msra.mxu0 0.0
        %814 = vmatprep.subr.mxu0 0.0
        %815 = vmatpush1.msra.mxu0 0.0
        %816 = vmatprep.subr.mxu0 0.0
        %817 = vmatpush1.msra.mxu0 0.0
        %818 = vmatprep.subr.mxu0 0.0
        %819 = vmatpush1.msra.mxu0 0.0
        %820 = vmatprep.subr.mxu0 0.0
        %821 = vmatpush1.msra.mxu0 0.0
        %822 = vmatprep.subr.mxu0 0.0
        %823 = vmatpush1.msra.mxu0 0.0
        %824 = vmatprep.subr.mxu0 0.0
        %825 = vmatpush1.msra.mxu0 0.0
        %826 = vmatprep.subr.mxu0 0.0
        %827 = vmatpush1.msra.mxu0 0.0
        %828 = vmatprep.subr.mxu0 0.0
        %829 = vmatpush1.msra.mxu0 0.0
        %830 = vmatprep.subr.mxu0 0.0
        %831 = vmatpush1.msra.mxu0 0.0
        %832 = vmatprep.subr.mxu0 0.0
        %833 = vmatpush1.msra.mxu0 0.0
        %834 = vmatprep.mubr.f32.mxu0 0.0
        %835 = vmatmul.mubr.f32.gmra.mrb[0].mxu0 %v702
        %v836 = vpop.f32.mrb[0].mxu0
        %v837 = vadd.f32 0.0, %v836
        %v838 = vpop.f32.mrb[0].mxu0
        %839 = vmatprep.mubr.f32.mxu0 0.0
        %840 = vmatmul.mubr.f32.gmra.mrb[0].mxu0 %v704
        %v841 = vpop.f32.mrb[0].mxu0
        %v842 = vadd.f32 0.0, %v841
        %v843 = vpop.f32.mrb[0].mxu0
        %844 = vmatprep.mubr.f32.mxu0 0.0
        %845 = vmatmul.mubr.f32.gmra.mrb[0].mxu0 %v706
        %v846 = vpop.f32.mrb[0].mxu0
        %v847 = vadd.f32 0.0, %v846
        %v848 = vpop.f32.mrb[0].mxu0
        %849 = vmatprep.mubr.f32.mxu0 0.0
        %850 = vmatmul.mubr.f32.gmra.mrb[0].mxu0 %v708
        %v851 = vpop.f32.mrb[0].mxu0
        %v852 = vadd.f32 0.0, %v851
        %v853 = vpop.f32.mrb[0].mxu0
        %854 = vmatprep.mubr.f32.mxu0 0.0
        %855 = vmatmul.mubr.f32.gmra.mrb[0].mxu0 %v710
        %v856 = vpop.f32.mrb[0].mxu0
        %v857 = vadd.f32 0.0, %v856
        %v858 = vpop.f32.mrb[0].mxu0
        %859 = vmatprep.mubr.f32.mxu0 0.0
        %860 = vmatmul.mubr.f32.gmra.mrb[0].mxu0 %v712
        %v861 = vpop.f32.mrb[0].mxu0
        %v862 = vadd.f32 0.0, %v861
        %v863 = vpop.f32.mrb[0].mxu0
        %864 = vmatprep.mubr.f32.mxu0 0.0
        %865 = vmatmul.mubr.f32.gmra.mrb[0].mxu0 %v714
        %v866 = vpop.f32.mrb[0].mxu0
        %v867 = vadd.f32 0.0, %v866
        %v868 = vpop.f32.mrb[0].mxu0
        %869 = vmatprep.mubr.f32.mxu0 0.0
        %870 = vmatmul.mubr.f32.gmra.mrb[0].mxu0 %v716
        %v871 = vpop.f32.mrb[0].mxu0
        %v872 = vadd.f32 0.0, %v871
        %v873 = vpop.f32.mrb[0].mxu0
        %874 = vmatprep.mubr.f32.mxu0 0.0
        %875 = vmatmul.mubr.f32.gmra.mrb[0].mxu0 %v718
        %v876 = vpop.f32.mrb[0].mxu0
        %v877 = vadd.f32 0.0, %v876
        %v878 = vpop.f32.mrb[0].mxu0
        %879 = vmatprep.mubr.f32.mxu0 0.0
        %880 = vmatmul.mubr.f32.gmra.mrb[0].mxu0 %v720
        %v881 = vpop.f32.mrb[0].mxu0
        %v882 = vadd.f32 0.0, %v881
        %v883 = vpop.f32.mrb[0].mxu0
        %884 = vmatprep.mubr.f32.mxu0 0.0
        %885 = vmatmul.mubr.f32.gmra.mrb[0].mxu0 %v722
        %v886 = vpop.f32.mrb[0].mxu0
        %v887 = vadd.f32 0.0, %v886
        %v888 = vpop.f32.mrb[0].mxu0
        %889 = vmatprep.mubr.f32.mxu0 0.0
        %890 = vmatmul.mubr.f32.gmra.mrb[0].mxu0 %v724
        %v891 = vpop.f32.mrb[0].mxu0
        %v892 = vadd.f32 0.0, %v891
        %v893 = vpop.f32.mrb[0].mxu0
        %894 = vmatprep.mubr.f32.mxu0 0.0
        %895 = vmatmul.mubr.f32.gmra.mrb[0].mxu0 %v726
        %v896 = vpop.f32.mrb[0].mxu0
        %v897 = vadd.f32 0.0, %v896
        %v898 = vpop.f32.mrb[0].mxu0
        %899 = vmatprep.mubr.f32.mxu0 0.0
        %900 = vmatmul.mubr.f32.gmra.mrb[0].mxu0 %v728
        %v901 = vpop.f32.mrb[0].mxu0
        %v902 = vadd.f32 0.0, %v901
        %v903 = vpop.f32.mrb[0].mxu0
        %904 = vmatprep.mubr.f32.mxu0 0.0
        %905 = vmatmul.mubr.f32.gmra.mrb[0].mxu0 %v730
        %v906 = vpop.f32.mrb[0].mxu0
        %v907 = vadd.f32 0.0, %v906
        %v908 = vpop.f32.mrb[0].mxu0
        %909 = vmatprep.mubr.f32.mxu0 0.0
        %910 = vmatmul.mubr.f32.gmra.mrb[0].mxu0 %v732
        %v911 = vpop.f32.mrb[0].mxu0
        %v912 = vadd.f32 0.0, %v911
        %v913 = vpop.f32.mrb[0].mxu0
        %914 = vmatprep.mubr.f32.mxu0 0.0
        %915 = vmatmul.mubr.f32.gmra.mrb[0].mxu0 %v734
        %v916 = vpop.f32.mrb[0].mxu0
        %v917 = vadd.f32 0.0, %v916
        %v918 = vpop.f32.mrb[0].mxu0
        %919 = vmatprep.mubr.f32.mxu0 0.0
        %920 = vmatmul.mubr.f32.gmra.mrb[0].mxu0 %v736
        %v921 = vpop.f32.mrb[0].mxu0
        %v922 = vadd.f32 0.0, %v921
        %v923 = vpop.f32.mrb[0].mxu0
        %924 = vmatprep.mubr.f32.mxu0 0.0
        %925 = vmatmul.mubr.f32.gmra.mrb[0].mxu0 %v738
        %v926 = vpop.f32.mrb[0].mxu0
        %v927 = vadd.f32 0.0, %v926
        %v928 = vpop.f32.mrb[0].mxu0
        %929 = vmatprep.mubr.f32.mxu0 0.0
        %930 = vmatmul.mubr.f32.gmra.mrb[0].mxu0 %v740
        %v931 = vpop.f32.mrb[0].mxu0
        %v932 = vadd.f32 0.0, %v931
        %v933 = vpop.f32.mrb[0].mxu0
        %934 = vmatprep.mubr.f32.mxu0 0.0
        %935 = vmatmul.mubr.f32.gmra.mrb[0].mxu0 %v742
        %v936 = vpop.f32.mrb[0].mxu0
        %v937 = vadd.f32 0.0, %v936
        %v938 = vpop.f32.mrb[0].mxu0
        %939 = vmatprep.mubr.f32.mxu0 0.0
        %940 = vmatmul.mubr.f32.gmra.mrb[0].mxu0 %v744
        %v941 = vpop.f32.mrb[0].mxu0
        %v942 = vadd.f32 0.0, %v941
        %v943 = vpop.f32.mrb[0].mxu0
        %944 = vmatprep.mubr.f32.mxu0 0.0
        %945 = vmatmul.mubr.f32.gmra.mrb[0].mxu0 %v746
        %v946 = vpop.f32.mrb[0].mxu0
        %v947 = vadd.f32 0.0, %v946
        %v948 = vpop.f32.mrb[0].mxu0
        %949 = vmatprep.mubr.f32.mxu0 0.0
        %950 = vmatmul.mubr.f32.gmra.mrb[0].mxu0 %v748
        %v951 = vpop.f32.mrb[0].mxu0
        %v952 = vadd.f32 0.0, %v951
        %v953 = vpop.f32.mrb[0].mxu0
        %954 = vmatprep.mubr.f32.mxu0 0.0
        %955 = vmatmul.mubr.f32.gmra.mrb[0].mxu0 %v750
        %v956 = vpop.f32.mrb[0].mxu0
        %v957 = vadd.f32 0.0, %v956
        %v958 = vpop.f32.mrb[0].mxu0
        %959 = vmatprep.mubr.f32.mxu0 0.0
        %960 = vmatmul.mubr.f32.gmra.mrb[0].mxu0 %v752
        %v961 = vpop.f32.mrb[0].mxu0
        %v962 = vadd.f32 0.0, %v961
        %v963 = vpop.f32.mrb[0].mxu0
        %964 = vmatprep.mubr.f32.mxu0 0.0
        %965 = vmatmul.mubr.f32.gmra.mrb[0].mxu0 %v754
        %v966 = vpop.f32.mrb[0].mxu0
        %v967 = vadd.f32 0.0, %v966
        %v968 = vpop.f32.mrb[0].mxu0
        %969 = vmatprep.mubr.f32.mxu0 0.0
        %970 = vmatmul.mubr.f32.gmra.mrb[0].mxu0 %v756
        %v971 = vpop.f32.mrb[0].mxu0
        %v972 = vadd.f32 0.0, %v971
        %v973 = vpop.f32.mrb[0].mxu0
        %974 = vmatprep.mubr.f32.mxu0 0.0
        %975 = vmatmul.mubr.f32.gmra.mrb[0].mxu0 %v758
        %v976 = vpop.f32.mrb[0].mxu0
        %v977 = vadd.f32 0.0, %v976
        %v978 = vpop.f32.mrb[0].mxu0
        %979 = vmatprep.mubr.f32.mxu0 0.0
        %980 = vmatmul.mubr.f32.gmra.mrb[0].mxu0 %v760
        %v981 = vpop.f32.mrb[0].mxu0
        %v982 = vadd.f32 0.0, %v981
        %v983 = vpop.f32.mrb[0].mxu0
        %984 = vmatprep.mubr.f32.mxu0 0.0
        %985 = vmatmul.mubr.f32.gmra.mrb[0].mxu0 %v762
        %v986 = vpop.f32.mrb[0].mxu0
        %v987 = vadd.f32 0.0, %v986
        %v988 = vpop.f32.mrb[0].mxu0
        %989 = vmatprep.mubr.f32.mxu0 0.0
        %990 = vmatmul.mubr.f32.gmra.mrb[0].mxu0 %v764
        %v991 = vpop.f32.mrb[0].mxu0
        %v992 = vadd.f32 0.0, %v991
        %v993 = vpop.f32.mrb[0].mxu0
        %994 = vdwg.mxu0
        %v995 = vsel %vm388, %v509, 0
        %v997 = vsel %vm388, %v510, 0
        %v999 = vsel %vm388, %v512, 0
        %v1001 = vsel %vm388, %v513, 0
        %v1003 = vsel %vm388, %v515, 0
        %v1005 = vsel %vm388, %v516, 0
        %v1007 = vsel %vm388, %v518, 0
        %v1009 = vsel %vm388, %v519, 0
        %v1011 = vsel %vm388, %v521, 0
        %v1013 = vsel %vm388, %v522, 0
        %v1015 = vsel %vm388, %v524, 0
        %v1017 = vsel %vm388, %v525, 0
        %v1019 = vsel %vm388, %v527, 0
        %v1021 = vsel %vm388, %v528, 0
        %v1023 = vsel %vm388, %v530, 0
        %v1025 = vsel %vm388, %v531, 0
        %v1027 = vsel %vm388, %v533, 0
        %v1029 = vsel %vm388, %v534, 0
        %v1031 = vsel %vm388, %v536, 0
        %v1033 = vsel %vm388, %v537, 0
        %v1035 = vsel %vm388, %v539, 0
        %v1037 = vsel %vm388, %v540, 0
        %v1039 = vsel %vm388, %v542, 0
        %v1041 = vsel %vm388, %v543, 0
        %v1043 = vsel %vm388, %v545, 0
        %v1045 = vsel %vm388, %v546, 0
        %v1047 = vsel %vm388, %v548, 0
        %v1049 = vsel %vm388, %v549, 0
        %v1051 = vsel %vm388, %v551, 0
        %v1053 = vsel %vm388, %v552, 0
        %v1055 = vsel %vm388, %v554, 0
        %v1057 = vsel %vm388, %v555, 0
        %v1060 = vsel %vm766, %v563, 0
        %1062 = vmatprep.subr.mxu0 0.0
        %1063 = vmatpush1.msra.mxu0 %v1060
        %1064 = vmatprep.subr.mxu0 0.0
        %1065 = vmatpush1.msra.mxu0 0.0
        %1066 = vmatprep.subr.mxu0 0.0
        %1067 = vmatpush1.msra.mxu0 0.0
        %1068 = vmatprep.subr.mxu0 0.0
        %1069 = vmatpush1.msra.mxu0 0.0
        %1070 = vmatprep.subr.mxu0 0.0
        %1071 = vmatpush1.msra.mxu0 0.0
        %1072 = vmatprep.subr.mxu0 0.0
        %1073 = vmatpush1.msra.mxu0 0.0
        %1074 = vmatprep.subr.mxu0 0.0
        %1075 = vmatpush1.msra.mxu0 0.0
        %1076 = vmatprep.subr.mxu0 0.0
        %1077 = vmatpush1.msra.mxu0 0.0
        %1078 = vmatprep.subr.mxu0 0.0
        %1079 = vmatpush1.msra.mxu0 0.0
        %1080 = vmatprep.subr.mxu0 0.0
        %1081 = vmatpush1.msra.mxu0 0.0
        %1082 = vmatprep.subr.mxu0 0.0
        %1083 = vmatpush1.msra.mxu0 0.0
        %1084 = vmatprep.subr.mxu0 0.0
        %1085 = vmatpush1.msra.mxu0 0.0
        %1086 = vmatprep.subr.mxu0 0.0
        %1087 = vmatpush1.msra.mxu0 0.0
        %1088 = vmatprep.subr.mxu0 0.0
        %1089 = vmatpush1.msra.mxu0 0.0
        %1090 = vmatprep.subr.mxu0 0.0
        %1091 = vmatpush1.msra.mxu0 0.0
        %1092 = vmatprep.subr.mxu0 0.0
        %1093 = vmatpush1.msra.mxu0 0.0
        %1094 = vmatprep.subr.mxu0 0.0
        %1095 = vmatpush1.msra.mxu0 0.0
        %1096 = vmatprep.subr.mxu0 0.0
        %1097 = vmatpush1.msra.mxu0 0.0
        %1098 = vmatprep.subr.mxu0 0.0
        %1099 = vmatpush1.msra.mxu0 0.0
        %1100 = vmatprep.subr.mxu0 0.0
        %1101 = vmatpush1.msra.mxu0 0.0
        %1102 = vmatprep.subr.mxu0 0.0
        %1103 = vmatpush1.msra.mxu0 0.0
        %1104 = vmatprep.subr.mxu0 0.0
        %1105 = vmatpush1.msra.mxu0 0.0
        %1106 = vmatprep.subr.mxu0 0.0
        %1107 = vmatpush1.msra.mxu0 0.0
        %1108 = vmatprep.subr.mxu0 0.0
        %1109 = vmatpush1.msra.mxu0 0.0
        %1110 = vmatprep.subr.mxu0 0.0
        %1111 = vmatpush1.msra.mxu0 0.0
        %1112 = vmatprep.subr.mxu0 0.0
        %1113 = vmatpush1.msra.mxu0 0.0
        %1114 = vmatprep.subr.mxu0 0.0
        %1115 = vmatpush1.msra.mxu0 0.0
        %1116 = vmatprep.subr.mxu0 0.0
        %1117 = vmatpush1.msra.mxu0 0.0
        %1118 = vmatprep.subr.mxu0 0.0
        %1119 = vmatpush1.msra.mxu0 0.0
        %1120 = vmatprep.subr.mxu0 0.0
        %1121 = vmatpush1.msra.mxu0 0.0
        %1122 = vmatprep.subr.mxu0 0.0
        %1123 = vmatpush1.msra.mxu0 0.0
        %1124 = vmatprep.subr.mxu0 0.0
        %1125 = vmatpush1.msra.mxu0 0.0
        %1126 = vmatprep.mubr.f32.mxu0 0.0
        %1127 = vmatmul.mubr.f32.gmra.mrb[0].mxu0 %v995
        %v1128 = vpop.f32.mrb[0].mxu0
        %v1129 = vadd.f32 %v837, %v1128
        %v1130 = vpop.f32.mrb[0].mxu0
        %1131 = vmatprep.mubr.f32.mxu0 0.0
        %1132 = vmatmul.mubr.f32.gmra.mrb[0].mxu0 %v997
        %v1133 = vpop.f32.mrb[0].mxu0
        %v1134 = vadd.f32 %v842, %v1133
        %v1135 = vpop.f32.mrb[0].mxu0
        %1136 = vmatprep.mubr.f32.mxu0 0.0
        %1137 = vmatmul.mubr.f32.gmra.mrb[0].mxu0 %v999
        %v1138 = vpop.f32.mrb[0].mxu0
        %v1139 = vadd.f32 %v847, %v1138
        %v1140 = vpop.f32.mrb[0].mxu0
        %1141 = vmatprep.mubr.f32.mxu0 0.0
        %1142 = vmatmul.mubr.f32.gmra.mrb[0].mxu0 %v1001
        %v1143 = vpop.f32.mrb[0].mxu0
        %v1144 = vadd.f32 %v852, %v1143
        %v1145 = vpop.f32.mrb[0].mxu0
        %1146 = vmatprep.mubr.f32.mxu0 0.0
        %1147 = vmatmul.mubr.f32.gmra.mrb[0].mxu0 %v1003
        %v1148 = vpop.f32.mrb[0].mxu0
        %v1149 = vadd.f32 %v857, %v1148
        %v1150 = vpop.f32.mrb[0].mxu0
        %1151 = vmatprep.mubr.f32.mxu0 0.0
        %1152 = vmatmul.mubr.f32.gmra.mrb[0].mxu0 %v1005
        %v1153 = vpop.f32.mrb[0].mxu0
        %v1154 = vadd.f32 %v862, %v1153
        %v1155 = vpop.f32.mrb[0].mxu0
        %1156 = vmatprep.mubr.f32.mxu0 0.0
        %1157 = vmatmul.mubr.f32.gmra.mrb[0].mxu0 %v1007
        %v1158 = vpop.f32.mrb[0].mxu0
        %v1159 = vadd.f32 %v867, %v1158
        %v1160 = vpop.f32.mrb[0].mxu0
        %1161 = vmatprep.mubr.f32.mxu0 0.0
        %1162 = vmatmul.mubr.f32.gmra.mrb[0].mxu0 %v1009
        %v1163 = vpop.f32.mrb[0].mxu0
        %v1164 = vadd.f32 %v872, %v1163
        %v1165 = vpop.f32.mrb[0].mxu0
        %1166 = vmatprep.mubr.f32.mxu0 0.0
        %1167 = vmatmul.mubr.f32.gmra.mrb[0].mxu0 %v1011
        %v1168 = vpop.f32.mrb[0].mxu0
        %v1169 = vadd.f32 %v877, %v1168
        %v1170 = vpop.f32.mrb[0].mxu0
        %1171 = vmatprep.mubr.f32.mxu0 0.0
        %1172 = vmatmul.mubr.f32.gmra.mrb[0].mxu0 %v1013
        %v1173 = vpop.f32.mrb[0].mxu0
        %v1174 = vadd.f32 %v882, %v1173
        %v1175 = vpop.f32.mrb[0].mxu0
        %1176 = vmatprep.mubr.f32.mxu0 0.0
        %1177 = vmatmul.mubr.f32.gmra.mrb[0].mxu0 %v1015
        %v1178 = vpop.f32.mrb[0].mxu0
        %v1179 = vadd.f32 %v887, %v1178
        %v1180 = vpop.f32.mrb[0].mxu0
        %1181 = vmatprep.mubr.f32.mxu0 0.0
        %1182 = vmatmul.mubr.f32.gmra.mrb[0].mxu0 %v1017
        %v1183 = vpop.f32.mrb[0].mxu0
        %v1184 = vadd.f32 %v892, %v1183
        %v1185 = vpop.f32.mrb[0].mxu0
        %1186 = vmatprep.mubr.f32.mxu0 0.0
        %1187 = vmatmul.mubr.f32.gmra.mrb[0].mxu0 %v1019
        %v1188 = vpop.f32.mrb[0].mxu0
        %v1189 = vadd.f32 %v897, %v1188
        %v1190 = vpop.f32.mrb[0].mxu0
        %1191 = vmatprep.mubr.f32.mxu0 0.0
        %1192 = vmatmul.mubr.f32.gmra.mrb[0].mxu0 %v1021
        %v1193 = vpop.f32.mrb[0].mxu0
        %v1194 = vadd.f32 %v902, %v1193
        %v1195 = vpop.f32.mrb[0].mxu0
        %1196 = vmatprep.mubr.f32.mxu0 0.0
        %1197 = vmatmul.mubr.f32.gmra.mrb[0].mxu0 %v1023
        %v1198 = vpop.f32.mrb[0].mxu0
        %v1199 = vadd.f32 %v907, %v1198
        %v1200 = vpop.f32.mrb[0].mxu0
        %1201 = vmatprep.mubr.f32.mxu0 0.0
        %1202 = vmatmul.mubr.f32.gmra.mrb[0].mxu0 %v1025
        %v1203 = vpop.f32.mrb[0].mxu0
        %v1204 = vadd.f32 %v912, %v1203
        %v1205 = vpop.f32.mrb[0].mxu0
        %1206 = vmatprep.mubr.f32.mxu0 0.0
        %1207 = vmatmul.mubr.f32.gmra.mrb[0].mxu0 %v1027
        %v1208 = vpop.f32.mrb[0].mxu0
        %v1209 = vadd.f32 %v917, %v1208
        %v1210 = vpop.f32.mrb[0].mxu0
        %1211 = vmatprep.mubr.f32.mxu0 0.0
        %1212 = vmatmul.mubr.f32.gmra.mrb[0].mxu0 %v1029
        %v1213 = vpop.f32.mrb[0].mxu0
        %v1214 = vadd.f32 %v922, %v1213
        %v1215 = vpop.f32.mrb[0].mxu0
        %1216 = vmatprep.mubr.f32.mxu0 0.0
        %1217 = vmatmul.mubr.f32.gmra.mrb[0].mxu0 %v1031
        %v1218 = vpop.f32.mrb[0].mxu0
        %v1219 = vadd.f32 %v927, %v1218
        %v1220 = vpop.f32.mrb[0].mxu0
        %1221 = vmatprep.mubr.f32.mxu0 0.0
        %1222 = vmatmul.mubr.f32.gmra.mrb[0].mxu0 %v1033
        %v1223 = vpop.f32.mrb[0].mxu0
        %v1224 = vadd.f32 %v932, %v1223
        %v1225 = vpop.f32.mrb[0].mxu0
        %1226 = vmatprep.mubr.f32.mxu0 0.0
        %1227 = vmatmul.mubr.f32.gmra.mrb[0].mxu0 %v1035
        %v1228 = vpop.f32.mrb[0].mxu0
        %v1229 = vadd.f32 %v937, %v1228
        %v1230 = vpop.f32.mrb[0].mxu0
        %1231 = vmatprep.mubr.f32.mxu0 0.0
        %1232 = vmatmul.mubr.f32.gmra.mrb[0].mxu0 %v1037
        %v1233 = vpop.f32.mrb[0].mxu0
        %v1234 = vadd.f32 %v942, %v1233
        %v1235 = vpop.f32.mrb[0].mxu0
        %1236 = vmatprep.mubr.f32.mxu0 0.0
        %1237 = vmatmul.mubr.f32.gmra.mrb[0].mxu0 %v1039
        %v1238 = vpop.f32.mrb[0].mxu0
        %v1239 = vadd.f32 %v947, %v1238
        %v1240 = vpop.f32.mrb[0].mxu0
        %1241 = vmatprep.mubr.f32.mxu0 0.0
        %1242 = vmatmul.mubr.f32.gmra.mrb[0].mxu0 %v1041
        %v1243 = vpop.f32.mrb[0].mxu0
        %v1244 = vadd.f32 %v952, %v1243
        %v1245 = vpop.f32.mrb[0].mxu0
        %1246 = vmatprep.mubr.f32.mxu0 0.0
        %1247 = vmatmul.mubr.f32.gmra.mrb[0].mxu0 %v1043
        %v1248 = vpop.f32.mrb[0].mxu0
        %v1249 = vadd.f32 %v957, %v1248
        %v1250 = vpop.f32.mrb[0].mxu0
        %1251 = vmatprep.mubr.f32.mxu0 0.0
        %1252 = vmatmul.mubr.f32.gmra.mrb[0].mxu0 %v1045
        %v1253 = vpop.f32.mrb[0].mxu0
        %v1254 = vadd.f32 %v962, %v1253
        %v1255 = vpop.f32.mrb[0].mxu0
        %1256 = vmatprep.mubr.f32.mxu0 0.0
        %1257 = vmatmul.mubr.f32.gmra.mrb[0].mxu0 %v1047
        %v1258 = vpop.f32.mrb[0].mxu0
        %v1259 = vadd.f32 %v967, %v1258
        %v1260 = vpop.f32.mrb[0].mxu0
        %1261 = vmatprep.mubr.f32.mxu0 0.0
        %1262 = vmatmul.mubr.f32.gmra.mrb[0].mxu0 %v1049
        %v1263 = vpop.f32.mrb[0].mxu0
        %v1264 = vadd.f32 %v972, %v1263
        %v1265 = vpop.f32.mrb[0].mxu0
        %1266 = vmatprep.mubr.f32.mxu0 0.0
        %1267 = vmatmul.mubr.f32.gmra.mrb[0].mxu0 %v1051
        %v1268 = vpop.f32.mrb[0].mxu0
        %v1269 = vadd.f32 %v977, %v1268
        %v1270 = vpop.f32.mrb[0].mxu0
        %1271 = vmatprep.mubr.f32.mxu0 0.0
        %1272 = vmatmul.mubr.f32.gmra.mrb[0].mxu0 %v1053
        %v1273 = vpop.f32.mrb[0].mxu0
        %v1274 = vadd.f32 %v982, %v1273
        %v1275 = vpop.f32.mrb[0].mxu0
        %1276 = vmatprep.mubr.f32.mxu0 0.0
        %1277 = vmatmul.mubr.f32.gmra.mrb[0].mxu0 %v1055
        %v1278 = vpop.f32.mrb[0].mxu0
        %v1279 = vadd.f32 %v987, %v1278
        %v1280 = vpop.f32.mrb[0].mxu0
        %1281 = vmatprep.mubr.f32.mxu0 0.0
        %1282 = vmatmul.mubr.f32.gmra.mrb[0].mxu0 %v1057
        %v1283 = vpop.f32.mrb[0].mxu0
        %v1284 = vadd.f32 %v992, %v1283
        %v1285 = vpop.f32.mrb[0].mxu0
        %1286 = vdwg.mxu0
        %vm1287 = vcmask 1045504
        %v1288 = vrot.slane %v509, 2
        %v1289 = vrot.slane %v510, 2
        %v1290 = vsel %vm1287, %v1288, %v1289
        %v1291 = vrot.slane %v511, 2
        %v1292 = vsel %vm1287, %v1289, %v1291
        %v1293 = vrot.slane %v512, 2
        %v1294 = vrot.slane %v513, 2
        %v1295 = vsel %vm1287, %v1293, %v1294
        %v1296 = vrot.slane %v514, 2
        %v1297 = vsel %vm1287, %v1294, %v1296
        %v1298 = vrot.slane %v515, 2
        %v1299 = vrot.slane %v516, 2
        %v1300 = vsel %vm1287, %v1298, %v1299
        %v1301 = vrot.slane %v517, 2
        %v1302 = vsel %vm1287, %v1299, %v1301
        %v1303 = vrot.slane %v518, 2
        %v1304 = vrot.slane %v519, 2
        %v1305 = vsel %vm1287, %v1303, %v1304
        %v1306 = vrot.slane %v520, 2
        %v1307 = vsel %vm1287, %v1304, %v1306
        %v1308 = vrot.slane %v521, 2
        %v1309 = vrot.slane %v522, 2
        %v1310 = vsel %vm1287, %v1308, %v1309
        %v1311 = vrot.slane %v523, 2
        %v1312 = vsel %vm1287, %v1309, %v1311
        %v1313 = vrot.slane %v524, 2
        %v1314 = vrot.slane %v525, 2
        %v1315 = vsel %vm1287, %v1313, %v1314
        %v1316 = vrot.slane %v526, 2
        %v1317 = vsel %vm1287, %v1314, %v1316
        %v1318 = vrot.slane %v527, 2
        %v1319 = vrot.slane %v528, 2
        %v1320 = vsel %vm1287, %v1318, %v1319
        %v1321 = vrot.slane %v529, 2
        %v1322 = vsel %vm1287, %v1319, %v1321
        %v1323 = vrot.slane %v530, 2
        %v1324 = vrot.slane %v531, 2
        %v1325 = vsel %vm1287, %v1323, %v1324
        %v1326 = vrot.slane %v532, 2
        %v1327 = vsel %vm1287, %v1324, %v1326
        %v1328 = vrot.slane %v533, 2
        %v1329 = vrot.slane %v534, 2
        %v1330 = vsel %vm1287, %v1328, %v1329
        %v1331 = vrot.slane %v535, 2
        %v1332 = vsel %vm1287, %v1329, %v1331
        %v1333 = vrot.slane %v536, 2
        %v1334 = vrot.slane %v537, 2
        %v1335 = vsel %vm1287, %v1333, %v1334
        %v1336 = vrot.slane %v538, 2
        %v1337 = vsel %vm1287, %v1334, %v1336
        %v1338 = vrot.slane %v539, 2
        %v1339 = vrot.slane %v540, 2
        %v1340 = vsel %vm1287, %v1338, %v1339
        %v1341 = vrot.slane %v541, 2
        %v1342 = vsel %vm1287, %v1339, %v1341
        %v1343 = vrot.slane %v542, 2
        %v1344 = vrot.slane %v543, 2
        %v1345 = vsel %vm1287, %v1343, %v1344
        %v1346 = vrot.slane %v544, 2
        %v1347 = vsel %vm1287, %v1344, %v1346
        %v1348 = vrot.slane %v545, 2
        %v1349 = vrot.slane %v546, 2
        %v1350 = vsel %vm1287, %v1348, %v1349
        %v1351 = vrot.slane %v547, 2
        %v1352 = vsel %vm1287, %v1349, %v1351
        %v1353 = vrot.slane %v548, 2
        %v1354 = vrot.slane %v549, 2
        %v1355 = vsel %vm1287, %v1353, %v1354
        %v1356 = vrot.slane %v550, 2
        %v1357 = vsel %vm1287, %v1354, %v1356
        %v1358 = vrot.slane %v551, 2
        %v1359 = vrot.slane %v552, 2
        %v1360 = vsel %vm1287, %v1358, %v1359
        %v1361 = vrot.slane %v553, 2
        %v1362 = vsel %vm1287, %v1359, %v1361
        %v1363 = vrot.slane %v554, 2
        %v1364 = vrot.slane %v555, 2
        %v1365 = vsel %vm1287, %v1363, %v1364
        %v1366 = vrot.slane %v556, 2
        %v1367 = vsel %vm1287, %v1364, %v1366
        %v1368 = vsel %vm388, %v1290, 0
        %v1370 = vsel %vm388, %v1292, 0
        %v1372 = vsel %vm388, %v1295, 0
        %v1374 = vsel %vm388, %v1297, 0
        %v1376 = vsel %vm388, %v1300, 0
        %v1378 = vsel %vm388, %v1302, 0
        %v1380 = vsel %vm388, %v1305, 0
        %v1382 = vsel %vm388, %v1307, 0
        %v1384 = vsel %vm388, %v1310, 0
        %v1386 = vsel %vm388, %v1312, 0
        %v1388 = vsel %vm388, %v1315, 0
        %v1390 = vsel %vm388, %v1317, 0
        %v1392 = vsel %vm388, %v1320, 0
        %v1394 = vsel %vm388, %v1322, 0
        %v1396 = vsel %vm388, %v1325, 0
        %v1398 = vsel %vm388, %v1327, 0
        %v1400 = vsel %vm388, %v1330, 0
        %v1402 = vsel %vm388, %v1332, 0
        %v1404 = vsel %vm388, %v1335, 0
        %v1406 = vsel %vm388, %v1337, 0
        %v1408 = vsel %vm388, %v1340, 0
        %v1410 = vsel %vm388, %v1342, 0
        %v1412 = vsel %vm388, %v1345, 0
        %v1414 = vsel %vm388, %v1347, 0
        %v1416 = vsel %vm388, %v1350, 0
        %v1418 = vsel %vm388, %v1352, 0
        %v1420 = vsel %vm388, %v1355, 0
        %v1422 = vsel %vm388, %v1357, 0
        %v1424 = vsel %vm388, %v1360, 0
        %v1426 = vsel %vm388, %v1362, 0
        %v1428 = vsel %vm388, %v1365, 0
        %v1430 = vsel %vm388, %v1367, 0
        %v1433 = vsel %vm766, %v565, 0
        %1435 = vmatprep.subr.mxu0 0.0
        %1436 = vmatpush1.msra.mxu0 %v1433
        %1437 = vmatprep.subr.mxu0 0.0
        %1438 = vmatpush1.msra.mxu0 0.0
        %1439 = vmatprep.subr.mxu0 0.0
        %1440 = vmatpush1.msra.mxu0 0.0
        %1441 = vmatprep.subr.mxu0 0.0
        %1442 = vmatpush1.msra.mxu0 0.0
        %1443 = vmatprep.subr.mxu0 0.0
        %1444 = vmatpush1.msra.mxu0 0.0
        %1445 = vmatprep.subr.mxu0 0.0
        %1446 = vmatpush1.msra.mxu0 0.0
        %1447 = vmatprep.subr.mxu0 0.0
        %1448 = vmatpush1.msra.mxu0 0.0
        %1449 = vmatprep.subr.mxu0 0.0
        %1450 = vmatpush1.msra.mxu0 0.0
        %1451 = vmatprep.subr.mxu0 0.0
        %1452 = vmatpush1.msra.mxu0 0.0
        %1453 = vmatprep.subr.mxu0 0.0
        %1454 = vmatpush1.msra.mxu0 0.0
        %1455 = vmatprep.subr.mxu0 0.0
        %1456 = vmatpush1.msra.mxu0 0.0
        %1457 = vmatprep.subr.mxu0 0.0
        %1458 = vmatpush1.msra.mxu0 0.0
        %1459 = vmatprep.subr.mxu0 0.0
        %1460 = vmatpush1.msra.mxu0 0.0
        %1461 = vmatprep.subr.mxu0 0.0
        %1462 = vmatpush1.msra.mxu0 0.0
        %1463 = vmatprep.subr.mxu0 0.0
        %1464 = vmatpush1.msra.mxu0 0.0
        %1465 = vmatprep.subr.mxu0 0.0
        %1466 = vmatpush1.msra.mxu0 0.0
        %1467 = vmatprep.subr.mxu0 0.0
        %1468 = vmatpush1.msra.mxu0 0.0
        %1469 = vmatprep.subr.mxu0 0.0
        %1470 = vmatpush1.msra.mxu0 0.0
        %1471 = vmatprep.subr.mxu0 0.0
        %1472 = vmatpush1.msra.mxu0 0.0
        %1473 = vmatprep.subr.mxu0 0.0
        %1474 = vmatpush1.msra.mxu0 0.0
        %1475 = vmatprep.subr.mxu0 0.0
        %1476 = vmatpush1.msra.mxu0 0.0
        %1477 = vmatprep.subr.mxu0 0.0
        %1478 = vmatpush1.msra.mxu0 0.0
        %1479 = vmatprep.subr.mxu0 0.0
        %1480 = vmatpush1.msra.mxu0 0.0
        %1481 = vmatprep.subr.mxu0 0.0
        %1482 = vmatpush1.msra.mxu0 0.0
        %1483 = vmatprep.subr.mxu0 0.0
        %1484 = vmatpush1.msra.mxu0 0.0
        %1485 = vmatprep.subr.mxu0 0.0
        %1486 = vmatpush1.msra.mxu0 0.0
        %1487 = vmatprep.subr.mxu0 0.0
        %1488 = vmatpush1.msra.mxu0 0.0
        %1489 = vmatprep.subr.mxu0 0.0
        %1490 = vmatpush1.msra.mxu0 0.0
        %1491 = vmatprep.subr.mxu0 0.0
        %1492 = vmatpush1.msra.mxu0 0.0
        %1493 = vmatprep.subr.mxu0 0.0
        %1494 = vmatpush1.msra.mxu0 0.0
        %1495 = vmatprep.subr.mxu0 0.0
        %1496 = vmatpush1.msra.mxu0 0.0
        %1497 = vmatprep.subr.mxu0 0.0
        %1498 = vmatpush1.msra.mxu0 0.0
        %1499 = vmatprep.mubr.f32.mxu0 0.0
        %1500 = vmatmul.mubr.f32.gmra.mrb[0].mxu0 %v1368
        %v1501 = vpop.f32.mrb[0].mxu0
        %v1502 = vadd.f32 0.0, %v1501
        %v1503 = vpop.f32.mrb[0].mxu0
        %1504 = vmatprep.mubr.f32.mxu0 0.0
        %1505 = vmatmul.mubr.f32.gmra.mrb[0].mxu0 %v1370
        %v1506 = vpop.f32.mrb[0].mxu0
        %v1507 = vadd.f32 0.0, %v1506
        %v1508 = vpop.f32.mrb[0].mxu0
        %1509 = vmatprep.mubr.f32.mxu0 0.0
        %1510 = vmatmul.mubr.f32.gmra.mrb[0].mxu0 %v1372
        %v1511 = vpop.f32.mrb[0].mxu0
        %v1512 = vadd.f32 0.0, %v1511
        %v1513 = vpop.f32.mrb[0].mxu0
        %1514 = vmatprep.mubr.f32.mxu0 0.0
        %1515 = vmatmul.mubr.f32.gmra.mrb[0].mxu0 %v1374
        %v1516 = vpop.f32.mrb[0].mxu0
        %v1517 = vadd.f32 0.0, %v1516
        %v1518 = vpop.f32.mrb[0].mxu0
        %1519 = vmatprep.mubr.f32.mxu0 0.0
        %1520 = vmatmul.mubr.f32.gmra.mrb[0].mxu0 %v1376
        %v1521 = vpop.f32.mrb[0].mxu0
        %v1522 = vadd.f32 0.0, %v1521
        %v1523 = vpop.f32.mrb[0].mxu0
        %1524 = vmatprep.mubr.f32.mxu0 0.0
        %1525 = vmatmul.mubr.f32.gmra.mrb[0].mxu0 %v1378
        %v1526 = vpop.f32.mrb[0].mxu0
        %v1527 = vadd.f32 0.0, %v1526
        %v1528 = vpop.f32.mrb[0].mxu0
        %1529 = vmatprep.mubr.f32.mxu0 0.0
        %1530 = vmatmul.mubr.f32.gmra.mrb[0].mxu0 %v1380
        %v1531 = vpop.f32.mrb[0].mxu0
        %v1532 = vadd.f32 0.0, %v1531
        %v1533 = vpop.f32.mrb[0].mxu0
        %1534 = vmatprep.mubr.f32.mxu0 0.0
        %1535 = vmatmul.mubr.f32.gmra.mrb[0].mxu0 %v1382
        %v1536 = vpop.f32.mrb[0].mxu0
        %v1537 = vadd.f32 0.0, %v1536
        %v1538 = vpop.f32.mrb[0].mxu0
        %1539 = vmatprep.mubr.f32.mxu0 0.0
        %1540 = vmatmul.mubr.f32.gmra.mrb[0].mxu0 %v1384
        %v1541 = vpop.f32.mrb[0].mxu0
        %v1542 = vadd.f32 0.0, %v1541
        %v1543 = vpop.f32.mrb[0].mxu0
        %1544 = vmatprep.mubr.f32.mxu0 0.0
        %1545 = vmatmul.mubr.f32.gmra.mrb[0].mxu0 %v1386
        %v1546 = vpop.f32.mrb[0].mxu0
        %v1547 = vadd.f32 0.0, %v1546
        %v1548 = vpop.f32.mrb[0].mxu0
        %1549 = vmatprep.mubr.f32.mxu0 0.0
        %1550 = vmatmul.mubr.f32.gmra.mrb[0].mxu0 %v1388
        %v1551 = vpop.f32.mrb[0].mxu0
        %v1552 = vadd.f32 0.0, %v1551
        %v1553 = vpop.f32.mrb[0].mxu0
        %1554 = vmatprep.mubr.f32.mxu0 0.0
        %1555 = vmatmul.mubr.f32.gmra.mrb[0].mxu0 %v1390
        %v1556 = vpop.f32.mrb[0].mxu0
        %v1557 = vadd.f32 0.0, %v1556
        %v1558 = vpop.f32.mrb[0].mxu0
        %1559 = vmatprep.mubr.f32.mxu0 0.0
        %1560 = vmatmul.mubr.f32.gmra.mrb[0].mxu0 %v1392
        %v1561 = vpop.f32.mrb[0].mxu0
        %v1562 = vadd.f32 0.0, %v1561
        %v1563 = vpop.f32.mrb[0].mxu0
        %1564 = vmatprep.mubr.f32.mxu0 0.0
        %1565 = vmatmul.mubr.f32.gmra.mrb[0].mxu0 %v1394
        %v1566 = vpop.f32.mrb[0].mxu0
        %v1567 = vadd.f32 0.0, %v1566
        %v1568 = vpop.f32.mrb[0].mxu0
        %1569 = vmatprep.mubr.f32.mxu0 0.0
        %1570 = vmatmul.mubr.f32.gmra.mrb[0].mxu0 %v1396
        %v1571 = vpop.f32.mrb[0].mxu0
        %v1572 = vadd.f32 0.0, %v1571
        %v1573 = vpop.f32.mrb[0].mxu0
        %1574 = vmatprep.mubr.f32.mxu0 0.0
        %1575 = vmatmul.mubr.f32.gmra.mrb[0].mxu0 %v1398
        %v1576 = vpop.f32.mrb[0].mxu0
        %v1577 = vadd.f32 0.0, %v1576
        %v1578 = vpop.f32.mrb[0].mxu0
        %1579 = vmatprep.mubr.f32.mxu0 0.0
        %1580 = vmatmul.mubr.f32.gmra.mrb[0].mxu0 %v1400
        %v1581 = vpop.f32.mrb[0].mxu0
        %v1582 = vadd.f32 0.0, %v1581
        %v1583 = vpop.f32.mrb[0].mxu0
        %1584 = vmatprep.mubr.f32.mxu0 0.0
        %1585 = vmatmul.mubr.f32.gmra.mrb[0].mxu0 %v1402
        %v1586 = vpop.f32.mrb[0].mxu0
        %v1587 = vadd.f32 0.0, %v1586
        %v1588 = vpop.f32.mrb[0].mxu0
        %1589 = vmatprep.mubr.f32.mxu0 0.0
        %1590 = vmatmul.mubr.f32.gmra.mrb[0].mxu0 %v1404
        %v1591 = vpop.f32.mrb[0].mxu0
        %v1592 = vadd.f32 0.0, %v1591
        %v1593 = vpop.f32.mrb[0].mxu0
        %1594 = vmatprep.mubr.f32.mxu0 0.0
        %1595 = vmatmul.mubr.f32.gmra.mrb[0].mxu0 %v1406
        %v1596 = vpop.f32.mrb[0].mxu0
        %v1597 = vadd.f32 0.0, %v1596
        %v1598 = vpop.f32.mrb[0].mxu0
        %1599 = vmatprep.mubr.f32.mxu0 0.0
        %1600 = vmatmul.mubr.f32.gmra.mrb[0].mxu0 %v1408
        %v1601 = vpop.f32.mrb[0].mxu0
        %v1602 = vadd.f32 0.0, %v1601
        %v1603 = vpop.f32.mrb[0].mxu0
        %1604 = vmatprep.mubr.f32.mxu0 0.0
        %1605 = vmatmul.mubr.f32.gmra.mrb[0].mxu0 %v1410
        %v1606 = vpop.f32.mrb[0].mxu0
        %v1607 = vadd.f32 0.0, %v1606
        %v1608 = vpop.f32.mrb[0].mxu0
        %1609 = vmatprep.mubr.f32.mxu0 0.0
        %1610 = vmatmul.mubr.f32.gmra.mrb[0].mxu0 %v1412
        %v1611 = vpop.f32.mrb[0].mxu0
        %v1612 = vadd.f32 0.0, %v1611
        %v1613 = vpop.f32.mrb[0].mxu0
        %1614 = vmatprep.mubr.f32.mxu0 0.0
        %1615 = vmatmul.mubr.f32.gmra.mrb[0].mxu0 %v1414
        %v1616 = vpop.f32.mrb[0].mxu0
        %v1617 = vadd.f32 0.0, %v1616
        %v1618 = vpop.f32.mrb[0].mxu0
        %1619 = vmatprep.mubr.f32.mxu0 0.0
        %1620 = vmatmul.mubr.f32.gmra.mrb[0].mxu0 %v1416
        %v1621 = vpop.f32.mrb[0].mxu0
        %v1622 = vadd.f32 0.0, %v1621
        %v1623 = vpop.f32.mrb[0].mxu0
        %1624 = vmatprep.mubr.f32.mxu0 0.0
        %1625 = vmatmul.mubr.f32.gmra.mrb[0].mxu0 %v1418
        %v1626 = vpop.f32.mrb[0].mxu0
        %v1627 = vadd.f32 0.0, %v1626
        %v1628 = vpop.f32.mrb[0].mxu0
        %1629 = vmatprep.mubr.f32.mxu0 0.0
        %1630 = vmatmul.mubr.f32.gmra.mrb[0].mxu0 %v1420
        %v1631 = vpop.f32.mrb[0].mxu0
        %v1632 = vadd.f32 0.0, %v1631
        %v1633 = vpop.f32.mrb[0].mxu0
        %1634 = vmatprep.mubr.f32.mxu0 0.0
        %1635 = vmatmul.mubr.f32.gmra.mrb[0].mxu0 %v1422
        %v1636 = vpop.f32.mrb[0].mxu0
        %v1637 = vadd.f32 0.0, %v1636
        %v1638 = vpop.f32.mrb[0].mxu0
        %1639 = vmatprep.mubr.f32.mxu0 0.0
        %1640 = vmatmul.mubr.f32.gmra.mrb[0].mxu0 %v1424
        %v1641 = vpop.f32.mrb[0].mxu0
        %v1642 = vadd.f32 0.0, %v1641
        %v1643 = vpop.f32.mrb[0].mxu0
        %1644 = vmatprep.mubr.f32.mxu0 0.0
        %1645 = vmatmul.mubr.f32.gmra.mrb[0].mxu0 %v1426
        %v1646 = vpop.f32.mrb[0].mxu0
        %v1647 = vadd.f32 0.0, %v1646
        %v1648 = vpop.f32.mrb[0].mxu0
        %1649 = vmatprep.mubr.f32.mxu0 0.0
        %1650 = vmatmul.mubr.f32.gmra.mrb[0].mxu0 %v1428
        %v1651 = vpop.f32.mrb[0].mxu0
        %v1652 = vadd.f32 0.0, %v1651
        %v1653 = vpop.f32.mrb[0].mxu0
        %1654 = vmatprep.mubr.f32.mxu0 0.0
        %1655 = vmatmul.mubr.f32.gmra.mrb[0].mxu0 %v1430
        %v1656 = vpop.f32.mrb[0].mxu0
        %v1657 = vadd.f32 0.0, %v1656
        %v1658 = vpop.f32.mrb[0].mxu0
        %1659 = vdwg.mxu0
        %v1660 = vadd.f32 %v1129, %v1502
        %v1661 = vadd.f32 %v1134, %v1507
        %v1662 = vadd.f32 %v1139, %v1512
        %v1663 = vadd.f32 %v1144, %v1517
        %v1664 = vadd.f32 %v1149, %v1522
        %v1665 = vadd.f32 %v1154, %v1527
        %v1666 = vadd.f32 %v1159, %v1532
        %v1667 = vadd.f32 %v1164, %v1537
        %v1668 = vadd.f32 %v1169, %v1542
        %v1669 = vadd.f32 %v1174, %v1547
        %v1670 = vadd.f32 %v1179, %v1552
        %v1671 = vadd.f32 %v1184, %v1557
        %v1672 = vadd.f32 %v1189, %v1562
        %v1673 = vadd.f32 %v1194, %v1567
        %v1674 = vadd.f32 %v1199, %v1572
        %v1675 = vadd.f32 %v1204, %v1577
        %v1676 = vadd.f32 %v1209, %v1582
        %v1677 = vadd.f32 %v1214, %v1587
        %v1678 = vadd.f32 %v1219, %v1592
        %v1679 = vadd.f32 %v1224, %v1597
        %v1680 = vadd.f32 %v1229, %v1602
        %v1681 = vadd.f32 %v1234, %v1607
        %v1682 = vadd.f32 %v1239, %v1612
        %v1683 = vadd.f32 %v1244, %v1617
        %v1684 = vadd.f32 %v1249, %v1622
        %v1685 = vadd.f32 %v1254, %v1627
        %v1686 = vadd.f32 %v1259, %v1632
        %v1687 = vadd.f32 %v1264, %v1637
        %v1688 = vadd.f32 %v1269, %v1642
        %v1689 = vadd.f32 %v1274, %v1647
        %v1690 = vadd.f32 %v1279, %v1652
        %v1691 = vadd.f32 %v1284, %v1657
        %v1693 = vsel %vm388, %v557, 0
        %v1696 = vsel %vm388, %v558, 0
        %v1699 = vsel %vm766, %v566, 0
        %1701 = vmatprep.subr.mxu0 0.0
        %1702 = vmatpush1.msra.mxu0 %v1699
        %1703 = vmatprep.subr.mxu0 0.0
        %1704 = vmatpush1.msra.mxu0 0.0
        %1705 = vmatprep.subr.mxu0 0.0
        %1706 = vmatpush1.msra.mxu0 0.0
        %1707 = vmatprep.subr.mxu0 0.0
        %1708 = vmatpush1.msra.mxu0 0.0
        %1709 = vmatprep.subr.mxu0 0.0
        %1710 = vmatpush1.msra.mxu0 0.0
        %1711 = vmatprep.subr.mxu0 0.0
        %1712 = vmatpush1.msra.mxu0 0.0
        %1713 = vmatprep.subr.mxu0 0.0
        %1714 = vmatpush1.msra.mxu0 0.0
        %1715 = vmatprep.subr.mxu0 0.0
        %1716 = vmatpush1.msra.mxu0 0.0
        %1717 = vmatprep.subr.mxu0 0.0
        %1718 = vmatpush1.msra.mxu0 0.0
        %1719 = vmatprep.subr.mxu0 0.0
        %1720 = vmatpush1.msra.mxu0 0.0
        %1721 = vmatprep.subr.mxu0 0.0
        %1722 = vmatpush1.msra.mxu0 0.0
        %1723 = vmatprep.subr.mxu0 0.0
        %1724 = vmatpush1.msra.mxu0 0.0
        %1725 = vmatprep.subr.mxu0 0.0
        %1726 = vmatpush1.msra.mxu0 0.0
        %1727 = vmatprep.subr.mxu0 0.0
        %1728 = vmatpush1.msra.mxu0 0.0
        %1729 = vmatprep.subr.mxu0 0.0
        %1730 = vmatpush1.msra.mxu0 0.0
        %1731 = vmatprep.subr.mxu0 0.0
        %1732 = vmatpush1.msra.mxu0 0.0
        %1733 = vmatprep.subr.mxu0 0.0
        %1734 = vmatpush1.msra.mxu0 0.0
        %1735 = vmatprep.subr.mxu0 0.0
        %1736 = vmatpush1.msra.mxu0 0.0
        %1737 = vmatprep.subr.mxu0 0.0
        %1738 = vmatpush1.msra.mxu0 0.0
        %1739 = vmatprep.subr.mxu0 0.0
        %1740 = vmatpush1.msra.mxu0 0.0
        %1741 = vmatprep.subr.mxu0 0.0
        %1742 = vmatpush1.msra.mxu0 0.0
        %1743 = vmatprep.subr.mxu0 0.0
        %1744 = vmatpush1.msra.mxu0 0.0
        %1745 = vmatprep.subr.mxu0 0.0
        %1746 = vmatpush1.msra.mxu0 0.0
        %1747 = vmatprep.subr.mxu0 0.0
        %1748 = vmatpush1.msra.mxu0 0.0
        %1749 = vmatprep.subr.mxu0 0.0
        %1750 = vmatpush1.msra.mxu0 0.0
        %1751 = vmatprep.subr.mxu0 0.0
        %1752 = vmatpush1.msra.mxu0 0.0
        %1753 = vmatprep.subr.mxu0 0.0
        %1754 = vmatpush1.msra.mxu0 0.0
        %1755 = vmatprep.subr.mxu0 0.0
        %1756 = vmatpush1.msra.mxu0 0.0
        %1757 = vmatprep.subr.mxu0 0.0
        %1758 = vmatpush1.msra.mxu0 0.0
        %1759 = vmatprep.subr.mxu0 0.0
        %1760 = vmatpush1.msra.mxu0 0.0
        %1761 = vmatprep.subr.mxu0 0.0
        %1762 = vmatpush1.msra.mxu0 0.0
        %1763 = vmatprep.subr.mxu0 0.0
        %1764 = vmatpush1.msra.mxu0 0.0
        %1765 = vmatprep.mubr.f32.mxu0 0.0
        %1766 = vmatmul.mubr.f32.gmra.mrb[0].mxu0 %v999
        %v1767 = vpop.f32.mrb[0].mxu0
        %v1768 = vadd.f32 0.0, %v1767
        %v1769 = vpop.f32.mrb[0].mxu0
        %1770 = vmatprep.mubr.f32.mxu0 0.0
        %1771 = vmatmul.mubr.f32.gmra.mrb[0].mxu0 %v1001
        %v1772 = vpop.f32.mrb[0].mxu0
        %v1773 = vadd.f32 0.0, %v1772
        %v1774 = vpop.f32.mrb[0].mxu0
        %1775 = vmatprep.mubr.f32.mxu0 0.0
        %1776 = vmatmul.mubr.f32.gmra.mrb[0].mxu0 %v1003
        %v1777 = vpop.f32.mrb[0].mxu0
        %v1778 = vadd.f32 0.0, %v1777
        %v1779 = vpop.f32.mrb[0].mxu0
        %1780 = vmatprep.mubr.f32.mxu0 0.0
        %1781 = vmatmul.mubr.f32.gmra.mrb[0].mxu0 %v1005
        %v1782 = vpop.f32.mrb[0].mxu0
        %v1783 = vadd.f32 0.0, %v1782
        %v1784 = vpop.f32.mrb[0].mxu0
        %1785 = vmatprep.mubr.f32.mxu0 0.0
        %1786 = vmatmul.mubr.f32.gmra.mrb[0].mxu0 %v1007
        %v1787 = vpop.f32.mrb[0].mxu0
        %v1788 = vadd.f32 0.0, %v1787
        %v1789 = vpop.f32.mrb[0].mxu0
        %1790 = vmatprep.mubr.f32.mxu0 0.0
        %1791 = vmatmul.mubr.f32.gmra.mrb[0].mxu0 %v1009
        %v1792 = vpop.f32.mrb[0].mxu0
        %v1793 = vadd.f32 0.0, %v1792
        %v1794 = vpop.f32.mrb[0].mxu0
        %1795 = vmatprep.mubr.f32.mxu0 0.0
        %1796 = vmatmul.mubr.f32.gmra.mrb[0].mxu0 %v1011
        %v1797 = vpop.f32.mrb[0].mxu0
        %v1798 = vadd.f32 0.0, %v1797
        %v1799 = vpop.f32.mrb[0].mxu0
        %1800 = vmatprep.mubr.f32.mxu0 0.0
        %1801 = vmatmul.mubr.f32.gmra.mrb[0].mxu0 %v1013
        %v1802 = vpop.f32.mrb[0].mxu0
        %v1803 = vadd.f32 0.0, %v1802
        %v1804 = vpop.f32.mrb[0].mxu0
        %1805 = vmatprep.mubr.f32.mxu0 0.0
        %1806 = vmatmul.mubr.f32.gmra.mrb[0].mxu0 %v1015
        %v1807 = vpop.f32.mrb[0].mxu0
        %v1808 = vadd.f32 0.0, %v1807
        %v1809 = vpop.f32.mrb[0].mxu0
        %1810 = vmatprep.mubr.f32.mxu0 0.0
        %1811 = vmatmul.mubr.f32.gmra.mrb[0].mxu0 %v1017
        %v1812 = vpop.f32.mrb[0].mxu0
        %v1813 = vadd.f32 0.0, %v1812
        %v1814 = vpop.f32.mrb[0].mxu0
        %1815 = vmatprep.mubr.f32.mxu0 0.0
        %1816 = vmatmul.mubr.f32.gmra.mrb[0].mxu0 %v1019
        %v1817 = vpop.f32.mrb[0].mxu0
        %v1818 = vadd.f32 0.0, %v1817
        %v1819 = vpop.f32.mrb[0].mxu0
        %1820 = vmatprep.mubr.f32.mxu0 0.0
        %1821 = vmatmul.mubr.f32.gmra.mrb[0].mxu0 %v1021
        %v1822 = vpop.f32.mrb[0].mxu0
        %v1823 = vadd.f32 0.0, %v1822
        %v1824 = vpop.f32.mrb[0].mxu0
        %1825 = vmatprep.mubr.f32.mxu0 0.0
        %1826 = vmatmul.mubr.f32.gmra.mrb[0].mxu0 %v1023
        %v1827 = vpop.f32.mrb[0].mxu0
        %v1828 = vadd.f32 0.0, %v1827
        %v1829 = vpop.f32.mrb[0].mxu0
        %1830 = vmatprep.mubr.f32.mxu0 0.0
        %1831 = vmatmul.mubr.f32.gmra.mrb[0].mxu0 %v1025
        %v1832 = vpop.f32.mrb[0].mxu0
        %v1833 = vadd.f32 0.0, %v1832
        %v1834 = vpop.f32.mrb[0].mxu0
        %1835 = vmatprep.mubr.f32.mxu0 0.0
        %1836 = vmatmul.mubr.f32.gmra.mrb[0].mxu0 %v1027
        %v1837 = vpop.f32.mrb[0].mxu0
        %v1838 = vadd.f32 0.0, %v1837
        %v1839 = vpop.f32.mrb[0].mxu0
        %1840 = vmatprep.mubr.f32.mxu0 0.0
        %1841 = vmatmul.mubr.f32.gmra.mrb[0].mxu0 %v1029
        %v1842 = vpop.f32.mrb[0].mxu0
        %v1843 = vadd.f32 0.0, %v1842
        %v1844 = vpop.f32.mrb[0].mxu0
        %1845 = vmatprep.mubr.f32.mxu0 0.0
        %1846 = vmatmul.mubr.f32.gmra.mrb[0].mxu0 %v1031
        %v1847 = vpop.f32.mrb[0].mxu0
        %v1848 = vadd.f32 0.0, %v1847
        %v1849 = vpop.f32.mrb[0].mxu0
        %1850 = vmatprep.mubr.f32.mxu0 0.0
        %1851 = vmatmul.mubr.f32.gmra.mrb[0].mxu0 %v1033
        %v1852 = vpop.f32.mrb[0].mxu0
        %v1853 = vadd.f32 0.0, %v1852
        %v1854 = vpop.f32.mrb[0].mxu0
        %1855 = vmatprep.mubr.f32.mxu0 0.0
        %1856 = vmatmul.mubr.f32.gmra.mrb[0].mxu0 %v1035
        %v1857 = vpop.f32.mrb[0].mxu0
        %v1858 = vadd.f32 0.0, %v1857
        %v1859 = vpop.f32.mrb[0].mxu0
        %1860 = vmatprep.mubr.f32.mxu0 0.0
        %1861 = vmatmul.mubr.f32.gmra.mrb[0].mxu0 %v1037
        %v1862 = vpop.f32.mrb[0].mxu0
        %v1863 = vadd.f32 0.0, %v1862
        %v1864 = vpop.f32.mrb[0].mxu0
        %1865 = vmatprep.mubr.f32.mxu0 0.0
        %1866 = vmatmul.mubr.f32.gmra.mrb[0].mxu0 %v1039
        %v1867 = vpop.f32.mrb[0].mxu0
        %v1868 = vadd.f32 0.0, %v1867
        %v1869 = vpop.f32.mrb[0].mxu0
        %1870 = vmatprep.mubr.f32.mxu0 0.0
        %1871 = vmatmul.mubr.f32.gmra.mrb[0].mxu0 %v1041
        %v1872 = vpop.f32.mrb[0].mxu0
        %v1873 = vadd.f32 0.0, %v1872
        %v1874 = vpop.f32.mrb[0].mxu0
        %1875 = vmatprep.mubr.f32.mxu0 0.0
        %1876 = vmatmul.mubr.f32.gmra.mrb[0].mxu0 %v1043
        %v1877 = vpop.f32.mrb[0].mxu0
        %v1878 = vadd.f32 0.0, %v1877
        %v1879 = vpop.f32.mrb[0].mxu0
        %1880 = vmatprep.mubr.f32.mxu0 0.0
        %1881 = vmatmul.mubr.f32.gmra.mrb[0].mxu0 %v1045
        %v1882 = vpop.f32.mrb[0].mxu0
        %v1883 = vadd.f32 0.0, %v1882
        %v1884 = vpop.f32.mrb[0].mxu0
        %1885 = vmatprep.mubr.f32.mxu0 0.0
        %1886 = vmatmul.mubr.f32.gmra.mrb[0].mxu0 %v1047
        %v1887 = vpop.f32.mrb[0].mxu0
        %v1888 = vadd.f32 0.0, %v1887
        %v1889 = vpop.f32.mrb[0].mxu0
        %1890 = vmatprep.mubr.f32.mxu0 0.0
        %1891 = vmatmul.mubr.f32.gmra.mrb[0].mxu0 %v1049
        %v1892 = vpop.f32.mrb[0].mxu0
        %v1893 = vadd.f32 0.0, %v1892
        %v1894 = vpop.f32.mrb[0].mxu0
        %1895 = vmatprep.mubr.f32.mxu0 0.0
        %1896 = vmatmul.mubr.f32.gmra.mrb[0].mxu0 %v1051
        %v1897 = vpop.f32.mrb[0].mxu0
        %v1898 = vadd.f32 0.0, %v1897
        %v1899 = vpop.f32.mrb[0].mxu0
        %1900 = vmatprep.mubr.f32.mxu0 0.0
        %1901 = vmatmul.mubr.f32.gmra.mrb[0].mxu0 %v1053
        %v1902 = vpop.f32.mrb[0].mxu0
        %v1903 = vadd.f32 0.0, %v1902
        %v1904 = vpop.f32.mrb[0].mxu0
        %1905 = vmatprep.mubr.f32.mxu0 0.0
        %1906 = vmatmul.mubr.f32.gmra.mrb[0].mxu0 %v1055
        %v1907 = vpop.f32.mrb[0].mxu0
        %v1908 = vadd.f32 0.0, %v1907
        %v1909 = vpop.f32.mrb[0].mxu0
        %1910 = vmatprep.mubr.f32.mxu0 0.0
        %1911 = vmatmul.mubr.f32.gmra.mrb[0].mxu0 %v1057
        %v1912 = vpop.f32.mrb[0].mxu0
        %v1913 = vadd.f32 0.0, %v1912
        %v1914 = vpop.f32.mrb[0].mxu0
        %1915 = vmatprep.mubr.f32.mxu0 0.0
        %1916 = vmatmul.mubr.f32.gmra.mrb[0].mxu0 %v1693
        %v1917 = vpop.f32.mrb[0].mxu0
        %v1918 = vadd.f32 0.0, %v1917
        %v1919 = vpop.f32.mrb[0].mxu0
        %1920 = vmatprep.mubr.f32.mxu0 0.0
        %1921 = vmatmul.mubr.f32.gmra.mrb[0].mxu0 %v1696
        %v1922 = vpop.f32.mrb[0].mxu0
        %v1923 = vadd.f32 0.0, %v1922
        %v1924 = vpop.f32.mrb[0].mxu0
        %1925 = vdwg.mxu0
        %v1926 = vadd.f32 %v1660, %v1768
        %v1927 = vadd.f32 %v1661, %v1773
        %v1928 = vadd.f32 %v1662, %v1778
        %v1929 = vadd.f32 %v1663, %v1783
        %v1930 = vadd.f32 %v1664, %v1788
        %v1931 = vadd.f32 %v1665, %v1793
        %v1932 = vadd.f32 %v1666, %v1798
        %v1933 = vadd.f32 %v1667, %v1803
        %v1934 = vadd.f32 %v1668, %v1808
        %v1935 = vadd.f32 %v1669, %v1813
        %v1936 = vadd.f32 %v1670, %v1818
        %v1937 = vadd.f32 %v1671, %v1823
        %v1938 = vadd.f32 %v1672, %v1828
        %v1939 = vadd.f32 %v1673, %v1833
        %v1940 = vadd.f32 %v1674, %v1838
        %v1941 = vadd.f32 %v1675, %v1843
        %v1942 = vadd.f32 %v1676, %v1848
        %v1943 = vadd.f32 %v1677, %v1853
        %v1944 = vadd.f32 %v1678, %v1858
        %v1945 = vadd.f32 %v1679, %v1863
        %v1946 = vadd.f32 %v1680, %v1868
        %v1947 = vadd.f32 %v1681, %v1873
        %v1948 = vadd.f32 %v1682, %v1878
        %v1949 = vadd.f32 %v1683, %v1883
        %v1950 = vadd.f32 %v1684, %v1888
        %v1951 = vadd.f32 %v1685, %v1893
        %v1952 = vadd.f32 %v1686, %v1898
        %v1953 = vadd.f32 %v1687, %v1903
        %v1954 = vadd.f32 %v1688, %v1908
        %v1955 = vadd.f32 %v1689, %v1913
        %v1956 = vadd.f32 %v1690, %v1918
        %v1957 = vadd.f32 %v1691, %v1923
        %v1959 = vrot.slane %v557, 1
        %v1960 = vrot.slane %v558, 1
        %v1961 = vsel %vm621, %v1959, %v1960
        %v1962 = vrot.slane %v559, 1
        %v1963 = vsel %vm621, %v1960, %v1962
        %v1964 = vsel %vm388, %v1961, 0
        %v1966 = vsel %vm388, %v1963, 0
        %v1969 = vsel %vm766, %v567, 0
        %1971 = vmatprep.subr.mxu0 0.0
        %1972 = vmatpush1.msra.mxu0 %v1969
        %1973 = vmatprep.subr.mxu0 0.0
        %1974 = vmatpush1.msra.mxu0 0.0
        %1975 = vmatprep.subr.mxu0 0.0
        %1976 = vmatpush1.msra.mxu0 0.0
        %1977 = vmatprep.subr.mxu0 0.0
        %1978 = vmatpush1.msra.mxu0 0.0
        %1979 = vmatprep.subr.mxu0 0.0
        %1980 = vmatpush1.msra.mxu0 0.0
        %1981 = vmatprep.subr.mxu0 0.0
        %1982 = vmatpush1.msra.mxu0 0.0
        %1983 = vmatprep.subr.mxu0 0.0
        %1984 = vmatpush1.msra.mxu0 0.0
        %1985 = vmatprep.subr.mxu0 0.0
        %1986 = vmatpush1.msra.mxu0 0.0
        %1987 = vmatprep.subr.mxu0 0.0
        %1988 = vmatpush1.msra.mxu0 0.0
        %1989 = vmatprep.subr.mxu0 0.0
        %1990 = vmatpush1.msra.mxu0 0.0
        %1991 = vmatprep.subr.mxu0 0.0
        %1992 = vmatpush1.msra.mxu0 0.0
        %1993 = vmatprep.subr.mxu0 0.0
        %1994 = vmatpush1.msra.mxu0 0.0
        %1995 = vmatprep.subr.mxu0 0.0
        %1996 = vmatpush1.msra.mxu0 0.0
        %1997 = vmatprep.subr.mxu0 0.0
        %1998 = vmatpush1.msra.mxu0 0.0
        %1999 = vmatprep.subr.mxu0 0.0
        %2000 = vmatpush1.msra.mxu0 0.0
        %2001 = vmatprep.subr.mxu0 0.0
        %2002 = vmatpush1.msra.mxu0 0.0
        %2003 = vmatprep.subr.mxu0 0.0
        %2004 = vmatpush1.msra.mxu0 0.0
        %2005 = vmatprep.subr.mxu0 0.0
        %2006 = vmatpush1.msra.mxu0 0.0
        %2007 = vmatprep.subr.mxu0 0.0
        %2008 = vmatpush1.msra.mxu0 0.0
        %2009 = vmatprep.subr.mxu0 0.0
        %2010 = vmatpush1.msra.mxu0 0.0
        %2011 = vmatprep.subr.mxu0 0.0
        %2012 = vmatpush1.msra.mxu0 0.0
        %2013 = vmatprep.subr.mxu0 0.0
        %2014 = vmatpush1.msra.mxu0 0.0
        %2015 = vmatprep.subr.mxu0 0.0
        %2016 = vmatpush1.msra.mxu0 0.0
        %2017 = vmatprep.subr.mxu0 0.0
        %2018 = vmatpush1.msra.mxu0 0.0
        %2019 = vmatprep.subr.mxu0 0.0
        %2020 = vmatpush1.msra.mxu0 0.0
        %2021 = vmatprep.subr.mxu0 0.0
        %2022 = vmatpush1.msra.mxu0 0.0
        %2023 = vmatprep.subr.mxu0 0.0
        %2024 = vmatpush1.msra.mxu0 0.0
        %2025 = vmatprep.subr.mxu0 0.0
        %2026 = vmatpush1.msra.mxu0 0.0
        %2027 = vmatprep.subr.mxu0 0.0
        %2028 = vmatpush1.msra.mxu0 0.0
        %2029 = vmatprep.subr.mxu0 0.0
        %2030 = vmatpush1.msra.mxu0 0.0
        %2031 = vmatprep.subr.mxu0 0.0
        %2032 = vmatpush1.msra.mxu0 0.0
        %2033 = vmatprep.subr.mxu0 0.0
        %2034 = vmatpush1.msra.mxu0 0.0
        %2035 = vmatprep.mubr.f32.mxu0 0.0
        %2036 = vmatmul.mubr.f32.gmra.mrb[0].mxu0 %v706
        %v2037 = vpop.f32.mrb[0].mxu0
        %v2038 = vadd.f32 0.0, %v2037
        %v2039 = vpop.f32.mrb[0].mxu0
        %2040 = vmatprep.mubr.f32.mxu0 0.0
        %2041 = vmatmul.mubr.f32.gmra.mrb[0].mxu0 %v708
        %v2042 = vpop.f32.mrb[0].mxu0
        %v2043 = vadd.f32 0.0, %v2042
        %v2044 = vpop.f32.mrb[0].mxu0
        %2045 = vmatprep.mubr.f32.mxu0 0.0
        %2046 = vmatmul.mubr.f32.gmra.mrb[0].mxu0 %v710
        %v2047 = vpop.f32.mrb[0].mxu0
        %v2048 = vadd.f32 0.0, %v2047
        %v2049 = vpop.f32.mrb[0].mxu0
        %2050 = vmatprep.mubr.f32.mxu0 0.0
        %2051 = vmatmul.mubr.f32.gmra.mrb[0].mxu0 %v712
        %v2052 = vpop.f32.mrb[0].mxu0
        %v2053 = vadd.f32 0.0, %v2052
        %v2054 = vpop.f32.mrb[0].mxu0
        %2055 = vmatprep.mubr.f32.mxu0 0.0
        %2056 = vmatmul.mubr.f32.gmra.mrb[0].mxu0 %v714
        %v2057 = vpop.f32.mrb[0].mxu0
        %v2058 = vadd.f32 0.0, %v2057
        %v2059 = vpop.f32.mrb[0].mxu0
        %2060 = vmatprep.mubr.f32.mxu0 0.0
        %2061 = vmatmul.mubr.f32.gmra.mrb[0].mxu0 %v716
        %v2062 = vpop.f32.mrb[0].mxu0
        %v2063 = vadd.f32 0.0, %v2062
        %v2064 = vpop.f32.mrb[0].mxu0
        %2065 = vmatprep.mubr.f32.mxu0 0.0
        %2066 = vmatmul.mubr.f32.gmra.mrb[0].mxu0 %v718
        %v2067 = vpop.f32.mrb[0].mxu0
        %v2068 = vadd.f32 0.0, %v2067
        %v2069 = vpop.f32.mrb[0].mxu0
        %2070 = vmatprep.mubr.f32.mxu0 0.0
        %2071 = vmatmul.mubr.f32.gmra.mrb[0].mxu0 %v720
        %v2072 = vpop.f32.mrb[0].mxu0
        %v2073 = vadd.f32 0.0, %v2072
        %v2074 = vpop.f32.mrb[0].mxu0
        %2075 = vmatprep.mubr.f32.mxu0 0.0
        %2076 = vmatmul.mubr.f32.gmra.mrb[0].mxu0 %v722
        %v2077 = vpop.f32.mrb[0].mxu0
        %v2078 = vadd.f32 0.0, %v2077
        %v2079 = vpop.f32.mrb[0].mxu0
        %2080 = vmatprep.mubr.f32.mxu0 0.0
        %2081 = vmatmul.mubr.f32.gmra.mrb[0].mxu0 %v724
        %v2082 = vpop.f32.mrb[0].mxu0
        %v2083 = vadd.f32 0.0, %v2082
        %v2084 = vpop.f32.mrb[0].mxu0
        %2085 = vmatprep.mubr.f32.mxu0 0.0
        %2086 = vmatmul.mubr.f32.gmra.mrb[0].mxu0 %v726
        %v2087 = vpop.f32.mrb[0].mxu0
        %v2088 = vadd.f32 0.0, %v2087
        %v2089 = vpop.f32.mrb[0].mxu0
        %2090 = vmatprep.mubr.f32.mxu0 0.0
        %2091 = vmatmul.mubr.f32.gmra.mrb[0].mxu0 %v728
        %v2092 = vpop.f32.mrb[0].mxu0
        %v2093 = vadd.f32 0.0, %v2092
        %v2094 = vpop.f32.mrb[0].mxu0
        %2095 = vmatprep.mubr.f32.mxu0 0.0
        %2096 = vmatmul.mubr.f32.gmra.mrb[0].mxu0 %v730
        %v2097 = vpop.f32.mrb[0].mxu0
        %v2098 = vadd.f32 0.0, %v2097
        %v2099 = vpop.f32.mrb[0].mxu0
        %2100 = vmatprep.mubr.f32.mxu0 0.0
        %2101 = vmatmul.mubr.f32.gmra.mrb[0].mxu0 %v732
        %v2102 = vpop.f32.mrb[0].mxu0
        %v2103 = vadd.f32 0.0, %v2102
        %v2104 = vpop.f32.mrb[0].mxu0
        %2105 = vmatprep.mubr.f32.mxu0 0.0
        %2106 = vmatmul.mubr.f32.gmra.mrb[0].mxu0 %v734
        %v2107 = vpop.f32.mrb[0].mxu0
        %v2108 = vadd.f32 0.0, %v2107
        %v2109 = vpop.f32.mrb[0].mxu0
        %2110 = vmatprep.mubr.f32.mxu0 0.0
        %2111 = vmatmul.mubr.f32.gmra.mrb[0].mxu0 %v736
        %v2112 = vpop.f32.mrb[0].mxu0
        %v2113 = vadd.f32 0.0, %v2112
        %v2114 = vpop.f32.mrb[0].mxu0
        %2115 = vmatprep.mubr.f32.mxu0 0.0
        %2116 = vmatmul.mubr.f32.gmra.mrb[0].mxu0 %v738
        %v2117 = vpop.f32.mrb[0].mxu0
        %v2118 = vadd.f32 0.0, %v2117
        %v2119 = vpop.f32.mrb[0].mxu0
        %2120 = vmatprep.mubr.f32.mxu0 0.0
        %2121 = vmatmul.mubr.f32.gmra.mrb[0].mxu0 %v740
        %v2122 = vpop.f32.mrb[0].mxu0
        %v2123 = vadd.f32 0.0, %v2122
        %v2124 = vpop.f32.mrb[0].mxu0
        %2125 = vmatprep.mubr.f32.mxu0 0.0
        %2126 = vmatmul.mubr.f32.gmra.mrb[0].mxu0 %v742
        %v2127 = vpop.f32.mrb[0].mxu0
        %v2128 = vadd.f32 0.0, %v2127
        %v2129 = vpop.f32.mrb[0].mxu0
        %2130 = vmatprep.mubr.f32.mxu0 0.0
        %2131 = vmatmul.mubr.f32.gmra.mrb[0].mxu0 %v744
        %v2132 = vpop.f32.mrb[0].mxu0
        %v2133 = vadd.f32 0.0, %v2132
        %v2134 = vpop.f32.mrb[0].mxu0
        %2135 = vmatprep.mubr.f32.mxu0 0.0
        %2136 = vmatmul.mubr.f32.gmra.mrb[0].mxu0 %v746
        %v2137 = vpop.f32.mrb[0].mxu0
        %v2138 = vadd.f32 0.0, %v2137
        %v2139 = vpop.f32.mrb[0].mxu0
        %2140 = vmatprep.mubr.f32.mxu0 0.0
        %2141 = vmatmul.mubr.f32.gmra.mrb[0].mxu0 %v748
        %v2142 = vpop.f32.mrb[0].mxu0
        %v2143 = vadd.f32 0.0, %v2142
        %v2144 = vpop.f32.mrb[0].mxu0
        %2145 = vmatprep.mubr.f32.mxu0 0.0
        %2146 = vmatmul.mubr.f32.gmra.mrb[0].mxu0 %v750
        %v2147 = vpop.f32.mrb[0].mxu0
        %v2148 = vadd.f32 0.0, %v2147
        %v2149 = vpop.f32.mrb[0].mxu0
        %2150 = vmatprep.mubr.f32.mxu0 0.0
        %2151 = vmatmul.mubr.f32.gmra.mrb[0].mxu0 %v752
        %v2152 = vpop.f32.mrb[0].mxu0
        %v2153 = vadd.f32 0.0, %v2152
        %v2154 = vpop.f32.mrb[0].mxu0
        %2155 = vmatprep.mubr.f32.mxu0 0.0
        %2156 = vmatmul.mubr.f32.gmra.mrb[0].mxu0 %v754
        %v2157 = vpop.f32.mrb[0].mxu0
        %v2158 = vadd.f32 0.0, %v2157
        %v2159 = vpop.f32.mrb[0].mxu0
        %2160 = vmatprep.mubr.f32.mxu0 0.0
        %2161 = vmatmul.mubr.f32.gmra.mrb[0].mxu0 %v756
        %v2162 = vpop.f32.mrb[0].mxu0
        %v2163 = vadd.f32 0.0, %v2162
        %v2164 = vpop.f32.mrb[0].mxu0
        %2165 = vmatprep.mubr.f32.mxu0 0.0
        %2166 = vmatmul.mubr.f32.gmra.mrb[0].mxu0 %v758
        %v2167 = vpop.f32.mrb[0].mxu0
        %v2168 = vadd.f32 0.0, %v2167
        %v2169 = vpop.f32.mrb[0].mxu0
        %2170 = vmatprep.mubr.f32.mxu0 0.0
        %2171 = vmatmul.mubr.f32.gmra.mrb[0].mxu0 %v760
        %v2172 = vpop.f32.mrb[0].mxu0
        %v2173 = vadd.f32 0.0, %v2172
        %v2174 = vpop.f32.mrb[0].mxu0
        %2175 = vmatprep.mubr.f32.mxu0 0.0
        %2176 = vmatmul.mubr.f32.gmra.mrb[0].mxu0 %v762
        %v2177 = vpop.f32.mrb[0].mxu0
        %v2178 = vadd.f32 0.0, %v2177
        %v2179 = vpop.f32.mrb[0].mxu0
        %2180 = vmatprep.mubr.f32.mxu0 0.0
        %2181 = vmatmul.mubr.f32.gmra.mrb[0].mxu0 %v764
        %v2182 = vpop.f32.mrb[0].mxu0
        %v2183 = vadd.f32 0.0, %v2182
        %v2184 = vpop.f32.mrb[0].mxu0
        %2185 = vmatprep.mubr.f32.mxu0 0.0
        %2186 = vmatmul.mubr.f32.gmra.mrb[0].mxu0 %v1964
        %v2187 = vpop.f32.mrb[0].mxu0
        %v2188 = vadd.f32 0.0, %v2187
        %v2189 = vpop.f32.mrb[0].mxu0
        %2190 = vmatprep.mubr.f32.mxu0 0.0
        %2191 = vmatmul.mubr.f32.gmra.mrb[0].mxu0 %v1966
        %v2192 = vpop.f32.mrb[0].mxu0
        %v2193 = vadd.f32 0.0, %v2192
        %v2194 = vpop.f32.mrb[0].mxu0
        %2195 = vdwg.mxu0
        %v2196 = vadd.f32 %v1926, %v2038
        %v2197 = vadd.f32 %v1927, %v2043
        %v2198 = vadd.f32 %v1928, %v2048
        %v2199 = vadd.f32 %v1929, %v2053
        %v2200 = vadd.f32 %v1930, %v2058
        %v2201 = vadd.f32 %v1931, %v2063
        %v2202 = vadd.f32 %v1932, %v2068
        %v2203 = vadd.f32 %v1933, %v2073
        %v2204 = vadd.f32 %v1934, %v2078
        %v2205 = vadd.f32 %v1935, %v2083
        %v2206 = vadd.f32 %v1936, %v2088
        %v2207 = vadd.f32 %v1937, %v2093
        %v2208 = vadd.f32 %v1938, %v2098
        %v2209 = vadd.f32 %v1939, %v2103
        %v2210 = vadd.f32 %v1940, %v2108
        %v2211 = vadd.f32 %v1941, %v2113
        %v2212 = vadd.f32 %v1942, %v2118
        %v2213 = vadd.f32 %v1943, %v2123
        %v2214 = vadd.f32 %v1944, %v2128
        %v2215 = vadd.f32 %v1945, %v2133
        %v2216 = vadd.f32 %v1946, %v2138
        %v2217 = vadd.f32 %v1947, %v2143
        %v2218 = vadd.f32 %v1948, %v2148
        %v2219 = vadd.f32 %v1949, %v2153
        %v2220 = vadd.f32 %v1950, %v2158
        %v2221 = vadd.f32 %v1951, %v2163
        %v2222 = vadd.f32 %v1952, %v2168
        %v2223 = vadd.f32 %v1953, %v2173
        %v2224 = vadd.f32 %v1954, %v2178
        %v2225 = vadd.f32 %v1955, %v2183
        %v2226 = vadd.f32 %v1956, %v2188
        %v2227 = vadd.f32 %v1957, %v2193
        %v2228 = vrot.slane %v557, 2
        %v2229 = vrot.slane %v558, 2
        %v2230 = vsel %vm1287, %v2228, %v2229
        %v2231 = vrot.slane %v559, 2
        %v2232 = vsel %vm1287, %v2229, %v2231
        %v2233 = vsel %vm388, %v2230, 0
        %v2235 = vsel %vm388, %v2232, 0
        %v2238 = vsel %vm766, %v568, 0
        %2240 = vmatprep.subr.mxu0 0.0
        %2241 = vmatpush1.msra.mxu0 %v2238
        %2242 = vmatprep.subr.mxu0 0.0
        %2243 = vmatpush1.msra.mxu0 0.0
        %2244 = vmatprep.subr.mxu0 0.0
        %2245 = vmatpush1.msra.mxu0 0.0
        %2246 = vmatprep.subr.mxu0 0.0
        %2247 = vmatpush1.msra.mxu0 0.0
        %2248 = vmatprep.subr.mxu0 0.0
        %2249 = vmatpush1.msra.mxu0 0.0
        %2250 = vmatprep.subr.mxu0 0.0
        %2251 = vmatpush1.msra.mxu0 0.0
        %2252 = vmatprep.subr.mxu0 0.0
        %2253 = vmatpush1.msra.mxu0 0.0
        %2254 = vmatprep.subr.mxu0 0.0
        %2255 = vmatpush1.msra.mxu0 0.0
        %2256 = vmatprep.subr.mxu0 0.0
        %2257 = vmatpush1.msra.mxu0 0.0
        %2258 = vmatprep.subr.mxu0 0.0
        %2259 = vmatpush1.msra.mxu0 0.0
        %2260 = vmatprep.subr.mxu0 0.0
        %2261 = vmatpush1.msra.mxu0 0.0
        %2262 = vmatprep.subr.mxu0 0.0
        %2263 = vmatpush1.msra.mxu0 0.0
        %2264 = vmatprep.subr.mxu0 0.0
        %2265 = vmatpush1.msra.mxu0 0.0
        %2266 = vmatprep.subr.mxu0 0.0
        %2267 = vmatpush1.msra.mxu0 0.0
        %2268 = vmatprep.subr.mxu0 0.0
        %2269 = vmatpush1.msra.mxu0 0.0
        %2270 = vmatprep.subr.mxu0 0.0
        %2271 = vmatpush1.msra.mxu0 0.0
        %2272 = vmatprep.subr.mxu0 0.0
        %2273 = vmatpush1.msra.mxu0 0.0
        %2274 = vmatprep.subr.mxu0 0.0
        %2275 = vmatpush1.msra.mxu0 0.0
        %2276 = vmatprep.subr.mxu0 0.0
        %2277 = vmatpush1.msra.mxu0 0.0
        %2278 = vmatprep.subr.mxu0 0.0
        %2279 = vmatpush1.msra.mxu0 0.0
        %2280 = vmatprep.subr.mxu0 0.0
        %2281 = vmatpush1.msra.mxu0 0.0
        %2282 = vmatprep.subr.mxu0 0.0
        %2283 = vmatpush1.msra.mxu0 0.0
        %2284 = vmatprep.subr.mxu0 0.0
        %2285 = vmatpush1.msra.mxu0 0.0
        %2286 = vmatprep.subr.mxu0 0.0
        %2287 = vmatpush1.msra.mxu0 0.0
        %2288 = vmatprep.subr.mxu0 0.0
        %2289 = vmatpush1.msra.mxu0 0.0
        %2290 = vmatprep.subr.mxu0 0.0
        %2291 = vmatpush1.msra.mxu0 0.0
        %2292 = vmatprep.subr.mxu0 0.0
        %2293 = vmatpush1.msra.mxu0 0.0
        %2294 = vmatprep.subr.mxu0 0.0
        %2295 = vmatpush1.msra.mxu0 0.0
        %2296 = vmatprep.subr.mxu0 0.0
        %2297 = vmatpush1.msra.mxu0 0.0
        %2298 = vmatprep.subr.mxu0 0.0
        %2299 = vmatpush1.msra.mxu0 0.0
        %2300 = vmatprep.subr.mxu0 0.0
        %2301 = vmatpush1.msra.mxu0 0.0
        %2302 = vmatprep.subr.mxu0 0.0
        %2303 = vmatpush1.msra.mxu0 0.0
        %2304 = vmatprep.mubr.f32.mxu0 0.0
        %2305 = vmatmul.mubr.f32.gmra.mrb[0].mxu0 %v1372
        %v2306 = vpop.f32.mrb[0].mxu0
        %v2307 = vadd.f32 0.0, %v2306
        %v2308 = vpop.f32.mrb[0].mxu0
        %2309 = vmatprep.mubr.f32.mxu0 0.0
        %2310 = vmatmul.mubr.f32.gmra.mrb[0].mxu0 %v1374
        %v2311 = vpop.f32.mrb[0].mxu0
        %v2312 = vadd.f32 0.0, %v2311
        %v2313 = vpop.f32.mrb[0].mxu0
        %2314 = vmatprep.mubr.f32.mxu0 0.0
        %2315 = vmatmul.mubr.f32.gmra.mrb[0].mxu0 %v1376
        %v2316 = vpop.f32.mrb[0].mxu0
        %v2317 = vadd.f32 0.0, %v2316
        %v2318 = vpop.f32.mrb[0].mxu0
        %2319 = vmatprep.mubr.f32.mxu0 0.0
        %2320 = vmatmul.mubr.f32.gmra.mrb[0].mxu0 %v1378
        %v2321 = vpop.f32.mrb[0].mxu0
        %v2322 = vadd.f32 0.0, %v2321
        %v2323 = vpop.f32.mrb[0].mxu0
        %2324 = vmatprep.mubr.f32.mxu0 0.0
        %2325 = vmatmul.mubr.f32.gmra.mrb[0].mxu0 %v1380
        %v2326 = vpop.f32.mrb[0].mxu0
        %v2327 = vadd.f32 0.0, %v2326
        %v2328 = vpop.f32.mrb[0].mxu0
        %2329 = vmatprep.mubr.f32.mxu0 0.0
        %2330 = vmatmul.mubr.f32.gmra.mrb[0].mxu0 %v1382
        %v2331 = vpop.f32.mrb[0].mxu0
        %v2332 = vadd.f32 0.0, %v2331
        %v2333 = vpop.f32.mrb[0].mxu0
        %2334 = vmatprep.mubr.f32.mxu0 0.0
        %2335 = vmatmul.mubr.f32.gmra.mrb[0].mxu0 %v1384
        %v2336 = vpop.f32.mrb[0].mxu0
        %v2337 = vadd.f32 0.0, %v2336
        %v2338 = vpop.f32.mrb[0].mxu0
        %2339 = vmatprep.mubr.f32.mxu0 0.0
        %2340 = vmatmul.mubr.f32.gmra.mrb[0].mxu0 %v1386
        %v2341 = vpop.f32.mrb[0].mxu0
        %v2342 = vadd.f32 0.0, %v2341
        %v2343 = vpop.f32.mrb[0].mxu0
        %2344 = vmatprep.mubr.f32.mxu0 0.0
        %2345 = vmatmul.mubr.f32.gmra.mrb[0].mxu0 %v1388
        %v2346 = vpop.f32.mrb[0].mxu0
        %v2347 = vadd.f32 0.0, %v2346
        %v2348 = vpop.f32.mrb[0].mxu0
        %2349 = vmatprep.mubr.f32.mxu0 0.0
        %2350 = vmatmul.mubr.f32.gmra.mrb[0].mxu0 %v1390
        %v2351 = vpop.f32.mrb[0].mxu0
        %v2352 = vadd.f32 0.0, %v2351
        %v2353 = vpop.f32.mrb[0].mxu0
        %2354 = vmatprep.mubr.f32.mxu0 0.0
        %2355 = vmatmul.mubr.f32.gmra.mrb[0].mxu0 %v1392
        %v2356 = vpop.f32.mrb[0].mxu0
        %v2357 = vadd.f32 0.0, %v2356
        %v2358 = vpop.f32.mrb[0].mxu0
        %2359 = vmatprep.mubr.f32.mxu0 0.0
        %2360 = vmatmul.mubr.f32.gmra.mrb[0].mxu0 %v1394
        %v2361 = vpop.f32.mrb[0].mxu0
        %v2362 = vadd.f32 0.0, %v2361
        %v2363 = vpop.f32.mrb[0].mxu0
        %2364 = vmatprep.mubr.f32.mxu0 0.0
        %2365 = vmatmul.mubr.f32.gmra.mrb[0].mxu0 %v1396
        %v2366 = vpop.f32.mrb[0].mxu0
        %v2367 = vadd.f32 0.0, %v2366
        %v2368 = vpop.f32.mrb[0].mxu0
        %2369 = vmatprep.mubr.f32.mxu0 0.0
        %2370 = vmatmul.mubr.f32.gmra.mrb[0].mxu0 %v1398
        %v2371 = vpop.f32.mrb[0].mxu0
        %v2372 = vadd.f32 0.0, %v2371
        %v2373 = vpop.f32.mrb[0].mxu0
        %2374 = vmatprep.mubr.f32.mxu0 0.0
        %2375 = vmatmul.mubr.f32.gmra.mrb[0].mxu0 %v1400
        %v2376 = vpop.f32.mrb[0].mxu0
        %v2377 = vadd.f32 0.0, %v2376
        %v2378 = vpop.f32.mrb[0].mxu0
        %2379 = vmatprep.mubr.f32.mxu0 0.0
        %2380 = vmatmul.mubr.f32.gmra.mrb[0].mxu0 %v1402
        %v2381 = vpop.f32.mrb[0].mxu0
        %v2382 = vadd.f32 0.0, %v2381
        %v2383 = vpop.f32.mrb[0].mxu0
        %2384 = vmatprep.mubr.f32.mxu0 0.0
        %2385 = vmatmul.mubr.f32.gmra.mrb[0].mxu0 %v1404
        %v2386 = vpop.f32.mrb[0].mxu0
        %v2387 = vadd.f32 0.0, %v2386
        %v2388 = vpop.f32.mrb[0].mxu0
        %2389 = vmatprep.mubr.f32.mxu0 0.0
        %2390 = vmatmul.mubr.f32.gmra.mrb[0].mxu0 %v1406
        %v2391 = vpop.f32.mrb[0].mxu0
        %v2392 = vadd.f32 0.0, %v2391
        %v2393 = vpop.f32.mrb[0].mxu0
        %2394 = vmatprep.mubr.f32.mxu0 0.0
        %2395 = vmatmul.mubr.f32.gmra.mrb[0].mxu0 %v1408
        %v2396 = vpop.f32.mrb[0].mxu0
        %v2397 = vadd.f32 0.0, %v2396
        %v2398 = vpop.f32.mrb[0].mxu0
        %2399 = vmatprep.mubr.f32.mxu0 0.0
        %2400 = vmatmul.mubr.f32.gmra.mrb[0].mxu0 %v1410
        %v2401 = vpop.f32.mrb[0].mxu0
        %v2402 = vadd.f32 0.0, %v2401
        %v2403 = vpop.f32.mrb[0].mxu0
        %2404 = vmatprep.mubr.f32.mxu0 0.0
        %2405 = vmatmul.mubr.f32.gmra.mrb[0].mxu0 %v1412
        %v2406 = vpop.f32.mrb[0].mxu0
        %v2407 = vadd.f32 0.0, %v2406
        %v2408 = vpop.f32.mrb[0].mxu0
        %2409 = vmatprep.mubr.f32.mxu0 0.0
        %2410 = vmatmul.mubr.f32.gmra.mrb[0].mxu0 %v1414
        %v2411 = vpop.f32.mrb[0].mxu0
        %v2412 = vadd.f32 0.0, %v2411
        %v2413 = vpop.f32.mrb[0].mxu0
        %2414 = vmatprep.mubr.f32.mxu0 0.0
        %2415 = vmatmul.mubr.f32.gmra.mrb[0].mxu0 %v1416
        %v2416 = vpop.f32.mrb[0].mxu0
        %v2417 = vadd.f32 0.0, %v2416
        %v2418 = vpop.f32.mrb[0].mxu0
        %2419 = vmatprep.mubr.f32.mxu0 0.0
        %2420 = vmatmul.mubr.f32.gmra.mrb[0].mxu0 %v1418
        %v2421 = vpop.f32.mrb[0].mxu0
        %v2422 = vadd.f32 0.0, %v2421
        %v2423 = vpop.f32.mrb[0].mxu0
        %2424 = vmatprep.mubr.f32.mxu0 0.0
        %2425 = vmatmul.mubr.f32.gmra.mrb[0].mxu0 %v1420
        %v2426 = vpop.f32.mrb[0].mxu0
        %v2427 = vadd.f32 0.0, %v2426
        %v2428 = vpop.f32.mrb[0].mxu0
        %2429 = vmatprep.mubr.f32.mxu0 0.0
        %2430 = vmatmul.mubr.f32.gmra.mrb[0].mxu0 %v1422
        %v2431 = vpop.f32.mrb[0].mxu0
        %v2432 = vadd.f32 0.0, %v2431
        %v2433 = vpop.f32.mrb[0].mxu0
        %2434 = vmatprep.mubr.f32.mxu0 0.0
        %2435 = vmatmul.mubr.f32.gmra.mrb[0].mxu0 %v1424
        %v2436 = vpop.f32.mrb[0].mxu0
        %v2437 = vadd.f32 0.0, %v2436
        %v2438 = vpop.f32.mrb[0].mxu0
        %2439 = vmatprep.mubr.f32.mxu0 0.0
        %2440 = vmatmul.mubr.f32.gmra.mrb[0].mxu0 %v1426
        %v2441 = vpop.f32.mrb[0].mxu0
        %v2442 = vadd.f32 0.0, %v2441
        %v2443 = vpop.f32.mrb[0].mxu0
        %2444 = vmatprep.mubr.f32.mxu0 0.0
        %2445 = vmatmul.mubr.f32.gmra.mrb[0].mxu0 %v1428
        %v2446 = vpop.f32.mrb[0].mxu0
        %v2447 = vadd.f32 0.0, %v2446
        %v2448 = vpop.f32.mrb[0].mxu0
        %2449 = vmatprep.mubr.f32.mxu0 0.0
        %2450 = vmatmul.mubr.f32.gmra.mrb[0].mxu0 %v1430
        %v2451 = vpop.f32.mrb[0].mxu0
        %v2452 = vadd.f32 0.0, %v2451
        %v2453 = vpop.f32.mrb[0].mxu0
        %2454 = vmatprep.mubr.f32.mxu0 0.0
        %2455 = vmatmul.mubr.f32.gmra.mrb[0].mxu0 %v2233
        %v2456 = vpop.f32.mrb[0].mxu0
        %v2457 = vadd.f32 0.0, %v2456
        %v2458 = vpop.f32.mrb[0].mxu0
        %2459 = vmatprep.mubr.f32.mxu0 0.0
        %2460 = vmatmul.mubr.f32.gmra.mrb[0].mxu0 %v2235
        %v2461 = vpop.f32.mrb[0].mxu0
        %v2462 = vadd.f32 0.0, %v2461
        %v2463 = vpop.f32.mrb[0].mxu0
        %2464 = vdwg.mxu0
        %v2465 = vadd.f32 %v2196, %v2307
        %v2466 = vadd.f32 %v2197, %v2312
        %v2467 = vadd.f32 %v2198, %v2317
        %v2468 = vadd.f32 %v2199, %v2322
        %v2469 = vadd.f32 %v2200, %v2327
        %v2470 = vadd.f32 %v2201, %v2332
        %v2471 = vadd.f32 %v2202, %v2337
        %v2472 = vadd.f32 %v2203, %v2342
        %v2473 = vadd.f32 %v2204, %v2347
        %v2474 = vadd.f32 %v2205, %v2352
        %v2475 = vadd.f32 %v2206, %v2357
        %v2476 = vadd.f32 %v2207, %v2362
        %v2477 = vadd.f32 %v2208, %v2367
        %v2478 = vadd.f32 %v2209, %v2372
        %v2479 = vadd.f32 %v2210, %v2377
        %v2480 = vadd.f32 %v2211, %v2382
        %v2481 = vadd.f32 %v2212, %v2387
        %v2482 = vadd.f32 %v2213, %v2392
        %v2483 = vadd.f32 %v2214, %v2397
        %v2484 = vadd.f32 %v2215, %v2402
        %v2485 = vadd.f32 %v2216, %v2407
        %v2486 = vadd.f32 %v2217, %v2412
        %v2487 = vadd.f32 %v2218, %v2417
        %v2488 = vadd.f32 %v2219, %v2422
        %v2489 = vadd.f32 %v2220, %v2427
        %v2490 = vadd.f32 %v2221, %v2432
        %v2491 = vadd.f32 %v2222, %v2437
        %v2492 = vadd.f32 %v2223, %v2442
        %v2493 = vadd.f32 %v2224, %v2447
        %v2494 = vadd.f32 %v2225, %v2452
        %v2495 = vadd.f32 %v2226, %v2457
        %v2496 = vadd.f32 %v2227, %v2462
        %v2498 = vsel %vm388, %v560, 0
        %v2501 = vsel %vm388, %v561, 0
        %v2504 = vsel %vm766, %v569, 0
        %2506 = vmatprep.subr.mxu0 0.0
        %2507 = vmatpush1.msra.mxu0 %v2504
        %2508 = vmatprep.subr.mxu0 0.0
        %2509 = vmatpush1.msra.mxu0 0.0
        %2510 = vmatprep.subr.mxu0 0.0
        %2511 = vmatpush1.msra.mxu0 0.0
        %2512 = vmatprep.subr.mxu0 0.0
        %2513 = vmatpush1.msra.mxu0 0.0
        %2514 = vmatprep.subr.mxu0 0.0
        %2515 = vmatpush1.msra.mxu0 0.0
        %2516 = vmatprep.subr.mxu0 0.0
        %2517 = vmatpush1.msra.mxu0 0.0
        %2518 = vmatprep.subr.mxu0 0.0
        %2519 = vmatpush1.msra.mxu0 0.0
        %2520 = vmatprep.subr.mxu0 0.0
        %2521 = vmatpush1.msra.mxu0 0.0
        %2522 = vmatprep.subr.mxu0 0.0
        %2523 = vmatpush1.msra.mxu0 0.0
        %2524 = vmatprep.subr.mxu0 0.0
        %2525 = vmatpush1.msra.mxu0 0.0
        %2526 = vmatprep.subr.mxu0 0.0
        %2527 = vmatpush1.msra.mxu0 0.0
        %2528 = vmatprep.subr.mxu0 0.0
        %2529 = vmatpush1.msra.mxu0 0.0
        %2530 = vmatprep.subr.mxu0 0.0
        %2531 = vmatpush1.msra.mxu0 0.0
        %2532 = vmatprep.subr.mxu0 0.0
        %2533 = vmatpush1.msra.mxu0 0.0
        %2534 = vmatprep.subr.mxu0 0.0
        %2535 = vmatpush1.msra.mxu0 0.0
        %2536 = vmatprep.subr.mxu0 0.0
        %2537 = vmatpush1.msra.mxu0 0.0
        %2538 = vmatprep.subr.mxu0 0.0
        %2539 = vmatpush1.msra.mxu0 0.0
        %2540 = vmatprep.subr.mxu0 0.0
        %2541 = vmatpush1.msra.mxu0 0.0
        %2542 = vmatprep.subr.mxu0 0.0
        %2543 = vmatpush1.msra.mxu0 0.0
        %2544 = vmatprep.subr.mxu0 0.0
        %2545 = vmatpush1.msra.mxu0 0.0
        %2546 = vmatprep.subr.mxu0 0.0
        %2547 = vmatpush1.msra.mxu0 0.0
        %2548 = vmatprep.subr.mxu0 0.0
        %2549 = vmatpush1.msra.mxu0 0.0
        %2550 = vmatprep.subr.mxu0 0.0
        %2551 = vmatpush1.msra.mxu0 0.0
        %2552 = vmatprep.subr.mxu0 0.0
        %2553 = vmatpush1.msra.mxu0 0.0
        %2554 = vmatprep.subr.mxu0 0.0
        %2555 = vmatpush1.msra.mxu0 0.0
        %2556 = vmatprep.subr.mxu0 0.0
        %2557 = vmatpush1.msra.mxu0 0.0
        %2558 = vmatprep.subr.mxu0 0.0
        %2559 = vmatpush1.msra.mxu0 0.0
        %2560 = vmatprep.subr.mxu0 0.0
        %2561 = vmatpush1.msra.mxu0 0.0
        %2562 = vmatprep.subr.mxu0 0.0
        %2563 = vmatpush1.msra.mxu0 0.0
        %2564 = vmatprep.subr.mxu0 0.0
        %2565 = vmatpush1.msra.mxu0 0.0
        %2566 = vmatprep.subr.mxu0 0.0
        %2567 = vmatpush1.msra.mxu0 0.0
        %2568 = vmatprep.subr.mxu0 0.0
        %2569 = vmatpush1.msra.mxu0 0.0
        %2570 = vmatprep.mubr.f32.mxu0 0.0
        %2571 = vmatmul.mubr.f32.gmra.mrb[0].mxu0 %v1003
        %v2572 = vpop.f32.mrb[0].mxu0
        %v2573 = vadd.f32 0.0, %v2572
        %v2574 = vpop.f32.mrb[0].mxu0
        %2575 = vmatprep.mubr.f32.mxu0 0.0
        %2576 = vmatmul.mubr.f32.gmra.mrb[0].mxu0 %v1005
        %v2577 = vpop.f32.mrb[0].mxu0
        %v2578 = vadd.f32 0.0, %v2577
        %v2579 = vpop.f32.mrb[0].mxu0
        %2580 = vmatprep.mubr.f32.mxu0 0.0
        %2581 = vmatmul.mubr.f32.gmra.mrb[0].mxu0 %v1007
        %v2582 = vpop.f32.mrb[0].mxu0
        %v2583 = vadd.f32 0.0, %v2582
        %v2584 = vpop.f32.mrb[0].mxu0
        %2585 = vmatprep.mubr.f32.mxu0 0.0
        %2586 = vmatmul.mubr.f32.gmra.mrb[0].mxu0 %v1009
        %v2587 = vpop.f32.mrb[0].mxu0
        %v2588 = vadd.f32 0.0, %v2587
        %v2589 = vpop.f32.mrb[0].mxu0
        %2590 = vmatprep.mubr.f32.mxu0 0.0
        %2591 = vmatmul.mubr.f32.gmra.mrb[0].mxu0 %v1011
        %v2592 = vpop.f32.mrb[0].mxu0
        %v2593 = vadd.f32 0.0, %v2592
        %v2594 = vpop.f32.mrb[0].mxu0
        %2595 = vmatprep.mubr.f32.mxu0 0.0
        %2596 = vmatmul.mubr.f32.gmra.mrb[0].mxu0 %v1013
        %v2597 = vpop.f32.mrb[0].mxu0
        %v2598 = vadd.f32 0.0, %v2597
        %v2599 = vpop.f32.mrb[0].mxu0
        %2600 = vmatprep.mubr.f32.mxu0 0.0
        %2601 = vmatmul.mubr.f32.gmra.mrb[0].mxu0 %v1015
        %v2602 = vpop.f32.mrb[0].mxu0
        %v2603 = vadd.f32 0.0, %v2602
        %v2604 = vpop.f32.mrb[0].mxu0
        %2605 = vmatprep.mubr.f32.mxu0 0.0
        %2606 = vmatmul.mubr.f32.gmra.mrb[0].mxu0 %v1017
        %v2607 = vpop.f32.mrb[0].mxu0
        %v2608 = vadd.f32 0.0, %v2607
        %v2609 = vpop.f32.mrb[0].mxu0
        %2610 = vmatprep.mubr.f32.mxu0 0.0
        %2611 = vmatmul.mubr.f32.gmra.mrb[0].mxu0 %v1019
        %v2612 = vpop.f32.mrb[0].mxu0
        %v2613 = vadd.f32 0.0, %v2612
        %v2614 = vpop.f32.mrb[0].mxu0
        %2615 = vmatprep.mubr.f32.mxu0 0.0
        %2616 = vmatmul.mubr.f32.gmra.mrb[0].mxu0 %v1021
        %v2617 = vpop.f32.mrb[0].mxu0
        %v2618 = vadd.f32 0.0, %v2617
        %v2619 = vpop.f32.mrb[0].mxu0
        %2620 = vmatprep.mubr.f32.mxu0 0.0
        %2621 = vmatmul.mubr.f32.gmra.mrb[0].mxu0 %v1023
        %v2622 = vpop.f32.mrb[0].mxu0
        %v2623 = vadd.f32 0.0, %v2622
        %v2624 = vpop.f32.mrb[0].mxu0
        %2625 = vmatprep.mubr.f32.mxu0 0.0
        %2626 = vmatmul.mubr.f32.gmra.mrb[0].mxu0 %v1025
        %v2627 = vpop.f32.mrb[0].mxu0
        %v2628 = vadd.f32 0.0, %v2627
        %v2629 = vpop.f32.mrb[0].mxu0
        %2630 = vmatprep.mubr.f32.mxu0 0.0
        %2631 = vmatmul.mubr.f32.gmra.mrb[0].mxu0 %v1027
        %v2632 = vpop.f32.mrb[0].mxu0
        %v2633 = vadd.f32 0.0, %v2632
        %v2634 = vpop.f32.mrb[0].mxu0
        %2635 = vmatprep.mubr.f32.mxu0 0.0
        %2636 = vmatmul.mubr.f32.gmra.mrb[0].mxu0 %v1029
        %v2637 = vpop.f32.mrb[0].mxu0
        %v2638 = vadd.f32 0.0, %v2637
        %v2639 = vpop.f32.mrb[0].mxu0
        %2640 = vmatprep.mubr.f32.mxu0 0.0
        %2641 = vmatmul.mubr.f32.gmra.mrb[0].mxu0 %v1031
        %v2642 = vpop.f32.mrb[0].mxu0
        %v2643 = vadd.f32 0.0, %v2642
        %v2644 = vpop.f32.mrb[0].mxu0
        %2645 = vmatprep.mubr.f32.mxu0 0.0
        %2646 = vmatmul.mubr.f32.gmra.mrb[0].mxu0 %v1033
        %v2647 = vpop.f32.mrb[0].mxu0
        %v2648 = vadd.f32 0.0, %v2647
        %v2649 = vpop.f32.mrb[0].mxu0
        %2650 = vmatprep.mubr.f32.mxu0 0.0
        %2651 = vmatmul.mubr.f32.gmra.mrb[0].mxu0 %v1035
        %v2652 = vpop.f32.mrb[0].mxu0
        %v2653 = vadd.f32 0.0, %v2652
        %v2654 = vpop.f32.mrb[0].mxu0
        %2655 = vmatprep.mubr.f32.mxu0 0.0
        %2656 = vmatmul.mubr.f32.gmra.mrb[0].mxu0 %v1037
        %v2657 = vpop.f32.mrb[0].mxu0
        %v2658 = vadd.f32 0.0, %v2657
        %v2659 = vpop.f32.mrb[0].mxu0
        %2660 = vmatprep.mubr.f32.mxu0 0.0
        %2661 = vmatmul.mubr.f32.gmra.mrb[0].mxu0 %v1039
        %v2662 = vpop.f32.mrb[0].mxu0
        %v2663 = vadd.f32 0.0, %v2662
        %v2664 = vpop.f32.mrb[0].mxu0
        %2665 = vmatprep.mubr.f32.mxu0 0.0
        %2666 = vmatmul.mubr.f32.gmra.mrb[0].mxu0 %v1041
        %v2667 = vpop.f32.mrb[0].mxu0
        %v2668 = vadd.f32 0.0, %v2667
        %v2669 = vpop.f32.mrb[0].mxu0
        %2670 = vmatprep.mubr.f32.mxu0 0.0
        %2671 = vmatmul.mubr.f32.gmra.mrb[0].mxu0 %v1043
        %v2672 = vpop.f32.mrb[0].mxu0
        %v2673 = vadd.f32 0.0, %v2672
        %v2674 = vpop.f32.mrb[0].mxu0
        %2675 = vmatprep.mubr.f32.mxu0 0.0
        %2676 = vmatmul.mubr.f32.gmra.mrb[0].mxu0 %v1045
        %v2677 = vpop.f32.mrb[0].mxu0
        %v2678 = vadd.f32 0.0, %v2677
        %v2679 = vpop.f32.mrb[0].mxu0
        %2680 = vmatprep.mubr.f32.mxu0 0.0
        %2681 = vmatmul.mubr.f32.gmra.mrb[0].mxu0 %v1047
        %v2682 = vpop.f32.mrb[0].mxu0
        %v2683 = vadd.f32 0.0, %v2682
        %v2684 = vpop.f32.mrb[0].mxu0
        %2685 = vmatprep.mubr.f32.mxu0 0.0
        %2686 = vmatmul.mubr.f32.gmra.mrb[0].mxu0 %v1049
        %v2687 = vpop.f32.mrb[0].mxu0
        %v2688 = vadd.f32 0.0, %v2687
        %v2689 = vpop.f32.mrb[0].mxu0
        %2690 = vmatprep.mubr.f32.mxu0 0.0
        %2691 = vmatmul.mubr.f32.gmra.mrb[0].mxu0 %v1051
        %v2692 = vpop.f32.mrb[0].mxu0
        %v2693 = vadd.f32 0.0, %v2692
        %v2694 = vpop.f32.mrb[0].mxu0
        %2695 = vmatprep.mubr.f32.mxu0 0.0
        %2696 = vmatmul.mubr.f32.gmra.mrb[0].mxu0 %v1053
        %v2697 = vpop.f32.mrb[0].mxu0
        %v2698 = vadd.f32 0.0, %v2697
        %v2699 = vpop.f32.mrb[0].mxu0
        %2700 = vmatprep.mubr.f32.mxu0 0.0
        %2701 = vmatmul.mubr.f32.gmra.mrb[0].mxu0 %v1055
        %v2702 = vpop.f32.mrb[0].mxu0
        %v2703 = vadd.f32 0.0, %v2702
        %v2704 = vpop.f32.mrb[0].mxu0
        %2705 = vmatprep.mubr.f32.mxu0 0.0
        %2706 = vmatmul.mubr.f32.gmra.mrb[0].mxu0 %v1057
        %v2707 = vpop.f32.mrb[0].mxu0
        %v2708 = vadd.f32 0.0, %v2707
        %v2709 = vpop.f32.mrb[0].mxu0
        %2710 = vmatprep.mubr.f32.mxu0 0.0
        %2711 = vmatmul.mubr.f32.gmra.mrb[0].mxu0 %v1693
        %v2712 = vpop.f32.mrb[0].mxu0
        %v2713 = vadd.f32 0.0, %v2712
        %v2714 = vpop.f32.mrb[0].mxu0
        %2715 = vmatprep.mubr.f32.mxu0 0.0
        %2716 = vmatmul.mubr.f32.gmra.mrb[0].mxu0 %v1696
        %v2717 = vpop.f32.mrb[0].mxu0
        %v2718 = vadd.f32 0.0, %v2717
        %v2719 = vpop.f32.mrb[0].mxu0
        %2720 = vmatprep.mubr.f32.mxu0 0.0
        %2721 = vmatmul.mubr.f32.gmra.mrb[0].mxu0 %v2498
        %v2722 = vpop.f32.mrb[0].mxu0
        %v2723 = vadd.f32 0.0, %v2722
        %v2724 = vpop.f32.mrb[0].mxu0
        %2725 = vmatprep.mubr.f32.mxu0 0.0
        %2726 = vmatmul.mubr.f32.gmra.mrb[0].mxu0 %v2501
        %v2727 = vpop.f32.mrb[0].mxu0
        %v2728 = vadd.f32 0.0, %v2727
        %v2729 = vpop.f32.mrb[0].mxu0
        %2730 = vdwg.mxu0
        %v2731 = vadd.f32 %v2465, %v2573
        %v2732 = vadd.f32 %v2466, %v2578
        %v2733 = vadd.f32 %v2467, %v2583
        %v2734 = vadd.f32 %v2468, %v2588
        %v2735 = vadd.f32 %v2469, %v2593
        %v2736 = vadd.f32 %v2470, %v2598
        %v2737 = vadd.f32 %v2471, %v2603
        %v2738 = vadd.f32 %v2472, %v2608
        %v2739 = vadd.f32 %v2473, %v2613
        %v2740 = vadd.f32 %v2474, %v2618
        %v2741 = vadd.f32 %v2475, %v2623
        %v2742 = vadd.f32 %v2476, %v2628
        %v2743 = vadd.f32 %v2477, %v2633
        %v2744 = vadd.f32 %v2478, %v2638
        %v2745 = vadd.f32 %v2479, %v2643
        %v2746 = vadd.f32 %v2480, %v2648
        %v2747 = vadd.f32 %v2481, %v2653
        %v2748 = vadd.f32 %v2482, %v2658
        %v2749 = vadd.f32 %v2483, %v2663
        %v2750 = vadd.f32 %v2484, %v2668
        %v2751 = vadd.f32 %v2485, %v2673
        %v2752 = vadd.f32 %v2486, %v2678
        %v2753 = vadd.f32 %v2487, %v2683
        %v2754 = vadd.f32 %v2488, %v2688
        %v2755 = vadd.f32 %v2489, %v2693
        %v2756 = vadd.f32 %v2490, %v2698
        %v2757 = vadd.f32 %v2491, %v2703
        %v2758 = vadd.f32 %v2492, %v2708
        %v2759 = vadd.f32 %v2493, %v2713
        %v2760 = vadd.f32 %v2494, %v2718
        %v2761 = vadd.f32 %v2495, %v2723
        %v2762 = vadd.f32 %v2496, %v2728
        %v2764 = vrot.slane %v560, 1
        %v2765 = vrot.slane %v561, 1
        %v2766 = vsel %vm621, %v2764, %v2765
        %v2767 = vrot.slane %v562, 1
        %v2768 = vsel %vm621, %v2765, %v2767
        %v2769 = vsel %vm388, %v2766, 0
        %v2771 = vsel %vm388, %v2768, 0
        %v2774 = vsel %vm766, %v570, 0
        %2776 = vmatprep.subr.mxu0 0.0
        %2777 = vmatpush1.msra.mxu0 %v2774
        %2778 = vmatprep.subr.mxu0 0.0
        %2779 = vmatpush1.msra.mxu0 0.0
        %2780 = vmatprep.subr.mxu0 0.0
        %2781 = vmatpush1.msra.mxu0 0.0
        %2782 = vmatprep.subr.mxu0 0.0
        %2783 = vmatpush1.msra.mxu0 0.0
        %2784 = vmatprep.subr.mxu0 0.0
        %2785 = vmatpush1.msra.mxu0 0.0
        %2786 = vmatprep.subr.mxu0 0.0
        %2787 = vmatpush1.msra.mxu0 0.0
        %2788 = vmatprep.subr.mxu0 0.0
        %2789 = vmatpush1.msra.mxu0 0.0
        %2790 = vmatprep.subr.mxu0 0.0
        %2791 = vmatpush1.msra.mxu0 0.0
        %2792 = vmatprep.subr.mxu0 0.0
        %2793 = vmatpush1.msra.mxu0 0.0
        %2794 = vmatprep.subr.mxu0 0.0
        %2795 = vmatpush1.msra.mxu0 0.0
        %2796 = vmatprep.subr.mxu0 0.0
        %2797 = vmatpush1.msra.mxu0 0.0
        %2798 = vmatprep.subr.mxu0 0.0
        %2799 = vmatpush1.msra.mxu0 0.0
        %2800 = vmatprep.subr.mxu0 0.0
        %2801 = vmatpush1.msra.mxu0 0.0
        %2802 = vmatprep.subr.mxu0 0.0
        %2803 = vmatpush1.msra.mxu0 0.0
        %2804 = vmatprep.subr.mxu0 0.0
        %2805 = vmatpush1.msra.mxu0 0.0
        %2806 = vmatprep.subr.mxu0 0.0
        %2807 = vmatpush1.msra.mxu0 0.0
        %2808 = vmatprep.subr.mxu0 0.0
        %2809 = vmatpush1.msra.mxu0 0.0
        %2810 = vmatprep.subr.mxu0 0.0
        %2811 = vmatpush1.msra.mxu0 0.0
        %2812 = vmatprep.subr.mxu0 0.0
        %2813 = vmatpush1.msra.mxu0 0.0
        %2814 = vmatprep.subr.mxu0 0.0
        %2815 = vmatpush1.msra.mxu0 0.0
        %2816 = vmatprep.subr.mxu0 0.0
        %2817 = vmatpush1.msra.mxu0 0.0
        %2818 = vmatprep.subr.mxu0 0.0
        %2819 = vmatpush1.msra.mxu0 0.0
        %2820 = vmatprep.subr.mxu0 0.0
        %2821 = vmatpush1.msra.mxu0 0.0
        %2822 = vmatprep.subr.mxu0 0.0
        %2823 = vmatpush1.msra.mxu0 0.0
        %2824 = vmatprep.subr.mxu0 0.0
        %2825 = vmatpush1.msra.mxu0 0.0
        %2826 = vmatprep.subr.mxu0 0.0
        %2827 = vmatpush1.msra.mxu0 0.0
        %2828 = vmatprep.subr.mxu0 0.0
        %2829 = vmatpush1.msra.mxu0 0.0
        %2830 = vmatprep.subr.mxu0 0.0
        %2831 = vmatpush1.msra.mxu0 0.0
        %2832 = vmatprep.subr.mxu0 0.0
        %2833 = vmatpush1.msra.mxu0 0.0
        %2834 = vmatprep.subr.mxu0 0.0
        %2835 = vmatpush1.msra.mxu0 0.0
        %2836 = vmatprep.subr.mxu0 0.0
        %2837 = vmatpush1.msra.mxu0 0.0
        %2838 = vmatprep.subr.mxu0 0.0
        %2839 = vmatpush1.msra.mxu0 0.0
        %2840 = vmatprep.mubr.f32.mxu0 0.0
        %2841 = vmatmul.mubr.f32.gmra.mrb[0].mxu0 %v710
        %v2842 = vpop.f32.mrb[0].mxu0
        %v2843 = vadd.f32 0.0, %v2842
        %v2844 = vpop.f32.mrb[0].mxu0
        %2845 = vmatprep.mubr.f32.mxu0 0.0
        %2846 = vmatmul.mubr.f32.gmra.mrb[0].mxu0 %v712
        %v2847 = vpop.f32.mrb[0].mxu0
        %v2848 = vadd.f32 0.0, %v2847
        %v2849 = vpop.f32.mrb[0].mxu0
        %2850 = vmatprep.mubr.f32.mxu0 0.0
        %2851 = vmatmul.mubr.f32.gmra.mrb[0].mxu0 %v714
        %v2852 = vpop.f32.mrb[0].mxu0
        %v2853 = vadd.f32 0.0, %v2852
        %v2854 = vpop.f32.mrb[0].mxu0
        %2855 = vmatprep.mubr.f32.mxu0 0.0
        %2856 = vmatmul.mubr.f32.gmra.mrb[0].mxu0 %v716
        %v2857 = vpop.f32.mrb[0].mxu0
        %v2858 = vadd.f32 0.0, %v2857
        %v2859 = vpop.f32.mrb[0].mxu0
        %2860 = vmatprep.mubr.f32.mxu0 0.0
        %2861 = vmatmul.mubr.f32.gmra.mrb[0].mxu0 %v718
        %v2862 = vpop.f32.mrb[0].mxu0
        %v2863 = vadd.f32 0.0, %v2862
        %v2864 = vpop.f32.mrb[0].mxu0
        %2865 = vmatprep.mubr.f32.mxu0 0.0
        %2866 = vmatmul.mubr.f32.gmra.mrb[0].mxu0 %v720
        %v2867 = vpop.f32.mrb[0].mxu0
        %v2868 = vadd.f32 0.0, %v2867
        %v2869 = vpop.f32.mrb[0].mxu0
        %2870 = vmatprep.mubr.f32.mxu0 0.0
        %2871 = vmatmul.mubr.f32.gmra.mrb[0].mxu0 %v722
        %v2872 = vpop.f32.mrb[0].mxu0
        %v2873 = vadd.f32 0.0, %v2872
        %v2874 = vpop.f32.mrb[0].mxu0
        %2875 = vmatprep.mubr.f32.mxu0 0.0
        %2876 = vmatmul.mubr.f32.gmra.mrb[0].mxu0 %v724
        %v2877 = vpop.f32.mrb[0].mxu0
        %v2878 = vadd.f32 0.0, %v2877
        %v2879 = vpop.f32.mrb[0].mxu0
        %2880 = vmatprep.mubr.f32.mxu0 0.0
        %2881 = vmatmul.mubr.f32.gmra.mrb[0].mxu0 %v726
        %v2882 = vpop.f32.mrb[0].mxu0
        %v2883 = vadd.f32 0.0, %v2882
        %v2884 = vpop.f32.mrb[0].mxu0
        %2885 = vmatprep.mubr.f32.mxu0 0.0
        %2886 = vmatmul.mubr.f32.gmra.mrb[0].mxu0 %v728
        %v2887 = vpop.f32.mrb[0].mxu0
        %v2888 = vadd.f32 0.0, %v2887
        %v2889 = vpop.f32.mrb[0].mxu0
        %2890 = vmatprep.mubr.f32.mxu0 0.0
        %2891 = vmatmul.mubr.f32.gmra.mrb[0].mxu0 %v730
        %v2892 = vpop.f32.mrb[0].mxu0
        %v2893 = vadd.f32 0.0, %v2892
        %v2894 = vpop.f32.mrb[0].mxu0
        %2895 = vmatprep.mubr.f32.mxu0 0.0
        %2896 = vmatmul.mubr.f32.gmra.mrb[0].mxu0 %v732
        %v2897 = vpop.f32.mrb[0].mxu0
        %v2898 = vadd.f32 0.0, %v2897
        %v2899 = vpop.f32.mrb[0].mxu0
        %2900 = vmatprep.mubr.f32.mxu0 0.0
        %2901 = vmatmul.mubr.f32.gmra.mrb[0].mxu0 %v734
        %v2902 = vpop.f32.mrb[0].mxu0
        %v2903 = vadd.f32 0.0, %v2902
        %v2904 = vpop.f32.mrb[0].mxu0
        %2905 = vmatprep.mubr.f32.mxu0 0.0
        %2906 = vmatmul.mubr.f32.gmra.mrb[0].mxu0 %v736
        %v2907 = vpop.f32.mrb[0].mxu0
        %v2908 = vadd.f32 0.0, %v2907
        %v2909 = vpop.f32.mrb[0].mxu0
        %2910 = vmatprep.mubr.f32.mxu0 0.0
        %2911 = vmatmul.mubr.f32.gmra.mrb[0].mxu0 %v738
        %v2912 = vpop.f32.mrb[0].mxu0
        %v2913 = vadd.f32 0.0, %v2912
        %v2914 = vpop.f32.mrb[0].mxu0
        %2915 = vmatprep.mubr.f32.mxu0 0.0
        %2916 = vmatmul.mubr.f32.gmra.mrb[0].mxu0 %v740
        %v2917 = vpop.f32.mrb[0].mxu0
        %v2918 = vadd.f32 0.0, %v2917
        %v2919 = vpop.f32.mrb[0].mxu0
        %2920 = vmatprep.mubr.f32.mxu0 0.0
        %2921 = vmatmul.mubr.f32.gmra.mrb[0].mxu0 %v742
        %v2922 = vpop.f32.mrb[0].mxu0
        %v2923 = vadd.f32 0.0, %v2922
        %v2924 = vpop.f32.mrb[0].mxu0
        %2925 = vmatprep.mubr.f32.mxu0 0.0
        %2926 = vmatmul.mubr.f32.gmra.mrb[0].mxu0 %v744
        %v2927 = vpop.f32.mrb[0].mxu0
        %v2928 = vadd.f32 0.0, %v2927
        %v2929 = vpop.f32.mrb[0].mxu0
        %2930 = vmatprep.mubr.f32.mxu0 0.0
        %2931 = vmatmul.mubr.f32.gmra.mrb[0].mxu0 %v746
        %v2932 = vpop.f32.mrb[0].mxu0
        %v2933 = vadd.f32 0.0, %v2932
        %v2934 = vpop.f32.mrb[0].mxu0
        %2935 = vmatprep.mubr.f32.mxu0 0.0
        %2936 = vmatmul.mubr.f32.gmra.mrb[0].mxu0 %v748
        %v2937 = vpop.f32.mrb[0].mxu0
        %v2938 = vadd.f32 0.0, %v2937
        %v2939 = vpop.f32.mrb[0].mxu0
        %2940 = vmatprep.mubr.f32.mxu0 0.0
        %2941 = vmatmul.mubr.f32.gmra.mrb[0].mxu0 %v750
        %v2942 = vpop.f32.mrb[0].mxu0
        %v2943 = vadd.f32 0.0, %v2942
        %v2944 = vpop.f32.mrb[0].mxu0
        %2945 = vmatprep.mubr.f32.mxu0 0.0
        %2946 = vmatmul.mubr.f32.gmra.mrb[0].mxu0 %v752
        %v2947 = vpop.f32.mrb[0].mxu0
        %v2948 = vadd.f32 0.0, %v2947
        %v2949 = vpop.f32.mrb[0].mxu0
        %2950 = vmatprep.mubr.f32.mxu0 0.0
        %2951 = vmatmul.mubr.f32.gmra.mrb[0].mxu0 %v754
        %v2952 = vpop.f32.mrb[0].mxu0
        %v2953 = vadd.f32 0.0, %v2952
        %v2954 = vpop.f32.mrb[0].mxu0
        %2955 = vmatprep.mubr.f32.mxu0 0.0
        %2956 = vmatmul.mubr.f32.gmra.mrb[0].mxu0 %v756
        %v2957 = vpop.f32.mrb[0].mxu0
        %v2958 = vadd.f32 0.0, %v2957
        %v2959 = vpop.f32.mrb[0].mxu0
        %2960 = vmatprep.mubr.f32.mxu0 0.0
        %2961 = vmatmul.mubr.f32.gmra.mrb[0].mxu0 %v758
        %v2962 = vpop.f32.mrb[0].mxu0
        %v2963 = vadd.f32 0.0, %v2962
        %v2964 = vpop.f32.mrb[0].mxu0
        %2965 = vmatprep.mubr.f32.mxu0 0.0
        %2966 = vmatmul.mubr.f32.gmra.mrb[0].mxu0 %v760
        %v2967 = vpop.f32.mrb[0].mxu0
        %v2968 = vadd.f32 0.0, %v2967
        %v2969 = vpop.f32.mrb[0].mxu0
        %2970 = vmatprep.mubr.f32.mxu0 0.0
        %2971 = vmatmul.mubr.f32.gmra.mrb[0].mxu0 %v762
        %v2972 = vpop.f32.mrb[0].mxu0
        %v2973 = vadd.f32 0.0, %v2972
        %v2974 = vpop.f32.mrb[0].mxu0
        %2975 = vmatprep.mubr.f32.mxu0 0.0
        %2976 = vmatmul.mubr.f32.gmra.mrb[0].mxu0 %v764
        %v2977 = vpop.f32.mrb[0].mxu0
        %v2978 = vadd.f32 0.0, %v2977
        %v2979 = vpop.f32.mrb[0].mxu0
        %2980 = vmatprep.mubr.f32.mxu0 0.0
        %2981 = vmatmul.mubr.f32.gmra.mrb[0].mxu0 %v1964
        %v2982 = vpop.f32.mrb[0].mxu0
        %v2983 = vadd.f32 0.0, %v2982
        %v2984 = vpop.f32.mrb[0].mxu0
        %2985 = vmatprep.mubr.f32.mxu0 0.0
        %2986 = vmatmul.mubr.f32.gmra.mrb[0].mxu0 %v1966
        %v2987 = vpop.f32.mrb[0].mxu0
        %v2988 = vadd.f32 0.0, %v2987
        %v2989 = vpop.f32.mrb[0].mxu0
        %2990 = vmatprep.mubr.f32.mxu0 0.0
        %2991 = vmatmul.mubr.f32.gmra.mrb[0].mxu0 %v2769
        %v2992 = vpop.f32.mrb[0].mxu0
        %v2993 = vadd.f32 0.0, %v2992
        %v2994 = vpop.f32.mrb[0].mxu0
        %2995 = vmatprep.mubr.f32.mxu0 0.0
        %2996 = vmatmul.mubr.f32.gmra.mrb[0].mxu0 %v2771
        %v2997 = vpop.f32.mrb[0].mxu0
        %v2998 = vadd.f32 0.0, %v2997
        %v2999 = vpop.f32.mrb[0].mxu0
        %3000 = vdwg.mxu0
        %v3001 = vadd.f32 %v2731, %v2843
        %v3002 = vadd.f32 %v2732, %v2848
        %v3003 = vadd.f32 %v2733, %v2853
        %v3004 = vadd.f32 %v2734, %v2858
        %v3005 = vadd.f32 %v2735, %v2863
        %v3006 = vadd.f32 %v2736, %v2868
        %v3007 = vadd.f32 %v2737, %v2873
        %v3008 = vadd.f32 %v2738, %v2878
        %v3009 = vadd.f32 %v2739, %v2883
        %v3010 = vadd.f32 %v2740, %v2888
        %v3011 = vadd.f32 %v2741, %v2893
        %v3012 = vadd.f32 %v2742, %v2898
        %v3013 = vadd.f32 %v2743, %v2903
        %v3014 = vadd.f32 %v2744, %v2908
        %v3015 = vadd.f32 %v2745, %v2913
        %v3016 = vadd.f32 %v2746, %v2918
        %v3017 = vadd.f32 %v2747, %v2923
        %v3018 = vadd.f32 %v2748, %v2928
        %v3019 = vadd.f32 %v2749, %v2933
        %v3020 = vadd.f32 %v2750, %v2938
        %v3021 = vadd.f32 %v2751, %v2943
        %v3022 = vadd.f32 %v2752, %v2948
        %v3023 = vadd.f32 %v2753, %v2953
        %v3024 = vadd.f32 %v2754, %v2958
        %v3025 = vadd.f32 %v2755, %v2963
        %v3026 = vadd.f32 %v2756, %v2968
        %v3027 = vadd.f32 %v2757, %v2973
        %v3028 = vadd.f32 %v2758, %v2978
        %v3029 = vadd.f32 %v2759, %v2983
        %v3030 = vadd.f32 %v2760, %v2988
        %v3031 = vadd.f32 %v2761, %v2993
        %v3032 = vadd.f32 %v2762, %v2998
        %v3033 = vrot.slane %v560, 2
        %v3034 = vrot.slane %v561, 2
        %v3035 = vsel %vm1287, %v3033, %v3034
        %v3036 = vrot.slane %v562, 2
        %v3037 = vsel %vm1287, %v3034, %v3036
        %v3038 = vsel %vm388, %v3035, 0
        %v3040 = vsel %vm388, %v3037, 0
        %v3043 = vsel %vm766, %v571, 0
        %3045 = vmatprep.subr.mxu0 0.0
        %3046 = vmatpush1.msra.mxu0 %v3043
        %3047 = vmatprep.subr.mxu0 0.0
        %3048 = vmatpush1.msra.mxu0 0.0
        %3049 = vmatprep.subr.mxu0 0.0
        %3050 = vmatpush1.msra.mxu0 0.0
        %3051 = vmatprep.subr.mxu0 0.0
        %3052 = vmatpush1.msra.mxu0 0.0
        %3053 = vmatprep.subr.mxu0 0.0
        %3054 = vmatpush1.msra.mxu0 0.0
        %3055 = vmatprep.subr.mxu0 0.0
        %3056 = vmatpush1.msra.mxu0 0.0
        %3057 = vmatprep.subr.mxu0 0.0
        %3058 = vmatpush1.msra.mxu0 0.0
        %3059 = vmatprep.subr.mxu0 0.0
        %3060 = vmatpush1.msra.mxu0 0.0
        %3061 = vmatprep.subr.mxu0 0.0
        %3062 = vmatpush1.msra.mxu0 0.0
        %3063 = vmatprep.subr.mxu0 0.0
        %3064 = vmatpush1.msra.mxu0 0.0
        %3065 = vmatprep.subr.mxu0 0.0
        %3066 = vmatpush1.msra.mxu0 0.0
        %3067 = vmatprep.subr.mxu0 0.0
        %3068 = vmatpush1.msra.mxu0 0.0
        %3069 = vmatprep.subr.mxu0 0.0
        %3070 = vmatpush1.msra.mxu0 0.0
        %3071 = vmatprep.subr.mxu0 0.0
        %3072 = vmatpush1.msra.mxu0 0.0
        %3073 = vmatprep.subr.mxu0 0.0
        %3074 = vmatpush1.msra.mxu0 0.0
        %3075 = vmatprep.subr.mxu0 0.0
        %3076 = vmatpush1.msra.mxu0 0.0
        %3077 = vmatprep.subr.mxu0 0.0
        %3078 = vmatpush1.msra.mxu0 0.0
        %3079 = vmatprep.subr.mxu0 0.0
        %3080 = vmatpush1.msra.mxu0 0.0
        %3081 = vmatprep.subr.mxu0 0.0
        %3082 = vmatpush1.msra.mxu0 0.0
        %3083 = vmatprep.subr.mxu0 0.0
        %3084 = vmatpush1.msra.mxu0 0.0
        %3085 = vmatprep.subr.mxu0 0.0
        %3086 = vmatpush1.msra.mxu0 0.0
        %3087 = vmatprep.subr.mxu0 0.0
        %3088 = vmatpush1.msra.mxu0 0.0
        %3089 = vmatprep.subr.mxu0 0.0
        %3090 = vmatpush1.msra.mxu0 0.0
        %3091 = vmatprep.subr.mxu0 0.0
        %3092 = vmatpush1.msra.mxu0 0.0
        %3093 = vmatprep.subr.mxu0 0.0
        %3094 = vmatpush1.msra.mxu0 0.0
        %3095 = vmatprep.subr.mxu0 0.0
        %3096 = vmatpush1.msra.mxu0 0.0
        %3097 = vmatprep.subr.mxu0 0.0
        %3098 = vmatpush1.msra.mxu0 0.0
        %3099 = vmatprep.subr.mxu0 0.0
        %3100 = vmatpush1.msra.mxu0 0.0
        %3101 = vmatprep.subr.mxu0 0.0
        %3102 = vmatpush1.msra.mxu0 0.0
        %3103 = vmatprep.subr.mxu0 0.0
        %3104 = vmatpush1.msra.mxu0 0.0
        %3105 = vmatprep.subr.mxu0 0.0
        %3106 = vmatpush1.msra.mxu0 0.0
        %3107 = vmatprep.subr.mxu0 0.0
        %3108 = vmatpush1.msra.mxu0 0.0
        %3109 = vmatprep.mubr.f32.mxu0 0.0
        %3110 = vmatmul.mubr.f32.gmra.mrb[0].mxu0 %v1376
        %v3111 = vpop.f32.mrb[0].mxu0
        %v3112 = vadd.f32 0.0, %v3111
        %v3113 = vpop.f32.mrb[0].mxu0
        %3114 = vmatprep.mubr.f32.mxu0 0.0
        %3115 = vmatmul.mubr.f32.gmra.mrb[0].mxu0 %v1378
        %v3116 = vpop.f32.mrb[0].mxu0
        %v3117 = vadd.f32 0.0, %v3116
        %v3118 = vpop.f32.mrb[0].mxu0
        %3119 = vmatprep.mubr.f32.mxu0 0.0
        %3120 = vmatmul.mubr.f32.gmra.mrb[0].mxu0 %v1380
        %v3121 = vpop.f32.mrb[0].mxu0
        %v3122 = vadd.f32 0.0, %v3121
        %v3123 = vpop.f32.mrb[0].mxu0
        %3124 = vmatprep.mubr.f32.mxu0 0.0
        %3125 = vmatmul.mubr.f32.gmra.mrb[0].mxu0 %v1382
        %v3126 = vpop.f32.mrb[0].mxu0
        %v3127 = vadd.f32 0.0, %v3126
        %v3128 = vpop.f32.mrb[0].mxu0
        %3129 = vmatprep.mubr.f32.mxu0 0.0
        %3130 = vmatmul.mubr.f32.gmra.mrb[0].mxu0 %v1384
        %v3131 = vpop.f32.mrb[0].mxu0
        %v3132 = vadd.f32 0.0, %v3131
        %v3133 = vpop.f32.mrb[0].mxu0
        %3134 = vmatprep.mubr.f32.mxu0 0.0
        %3135 = vmatmul.mubr.f32.gmra.mrb[0].mxu0 %v1386
        %v3136 = vpop.f32.mrb[0].mxu0
        %v3137 = vadd.f32 0.0, %v3136
        %v3138 = vpop.f32.mrb[0].mxu0
        %3139 = vmatprep.mubr.f32.mxu0 0.0
        %3140 = vmatmul.mubr.f32.gmra.mrb[0].mxu0 %v1388
        %v3141 = vpop.f32.mrb[0].mxu0
        %v3142 = vadd.f32 0.0, %v3141
        %v3143 = vpop.f32.mrb[0].mxu0
        %3144 = vmatprep.mubr.f32.mxu0 0.0
        %3145 = vmatmul.mubr.f32.gmra.mrb[0].mxu0 %v1390
        %v3146 = vpop.f32.mrb[0].mxu0
        %v3147 = vadd.f32 0.0, %v3146
        %v3148 = vpop.f32.mrb[0].mxu0
        %3149 = vmatprep.mubr.f32.mxu0 0.0
        %3150 = vmatmul.mubr.f32.gmra.mrb[0].mxu0 %v1392
        %v3151 = vpop.f32.mrb[0].mxu0
        %v3152 = vadd.f32 0.0, %v3151
        %v3153 = vpop.f32.mrb[0].mxu0
        %3154 = vmatprep.mubr.f32.mxu0 0.0
        %3155 = vmatmul.mubr.f32.gmra.mrb[0].mxu0 %v1394
        %v3156 = vpop.f32.mrb[0].mxu0
        %v3157 = vadd.f32 0.0, %v3156
        %v3158 = vpop.f32.mrb[0].mxu0
        %3159 = vmatprep.mubr.f32.mxu0 0.0
        %3160 = vmatmul.mubr.f32.gmra.mrb[0].mxu0 %v1396
        %v3161 = vpop.f32.mrb[0].mxu0
        %v3162 = vadd.f32 0.0, %v3161
        %v3163 = vpop.f32.mrb[0].mxu0
        %3164 = vmatprep.mubr.f32.mxu0 0.0
        %3165 = vmatmul.mubr.f32.gmra.mrb[0].mxu0 %v1398
        %v3166 = vpop.f32.mrb[0].mxu0
        %v3167 = vadd.f32 0.0, %v3166
        %v3168 = vpop.f32.mrb[0].mxu0
        %3169 = vmatprep.mubr.f32.mxu0 0.0
        %3170 = vmatmul.mubr.f32.gmra.mrb[0].mxu0 %v1400
        %v3171 = vpop.f32.mrb[0].mxu0
        %v3172 = vadd.f32 0.0, %v3171
        %v3173 = vpop.f32.mrb[0].mxu0
        %3174 = vmatprep.mubr.f32.mxu0 0.0
        %3175 = vmatmul.mubr.f32.gmra.mrb[0].mxu0 %v1402
        %v3176 = vpop.f32.mrb[0].mxu0
        %v3177 = vadd.f32 0.0, %v3176
        %v3178 = vpop.f32.mrb[0].mxu0
        %3179 = vmatprep.mubr.f32.mxu0 0.0
        %3180 = vmatmul.mubr.f32.gmra.mrb[0].mxu0 %v1404
        %v3181 = vpop.f32.mrb[0].mxu0
        %v3182 = vadd.f32 0.0, %v3181
        %v3183 = vpop.f32.mrb[0].mxu0
        %3184 = vmatprep.mubr.f32.mxu0 0.0
        %3185 = vmatmul.mubr.f32.gmra.mrb[0].mxu0 %v1406
        %v3186 = vpop.f32.mrb[0].mxu0
        %v3187 = vadd.f32 0.0, %v3186
        %v3188 = vpop.f32.mrb[0].mxu0
        %3189 = vmatprep.mubr.f32.mxu0 0.0
        %3190 = vmatmul.mubr.f32.gmra.mrb[0].mxu0 %v1408
        %v3191 = vpop.f32.mrb[0].mxu0
        %v3192 = vadd.f32 0.0, %v3191
        %v3193 = vpop.f32.mrb[0].mxu0
        %3194 = vmatprep.mubr.f32.mxu0 0.0
        %3195 = vmatmul.mubr.f32.gmra.mrb[0].mxu0 %v1410
        %v3196 = vpop.f32.mrb[0].mxu0
        %v3197 = vadd.f32 0.0, %v3196
        %v3198 = vpop.f32.mrb[0].mxu0
        %3199 = vmatprep.mubr.f32.mxu0 0.0
        %3200 = vmatmul.mubr.f32.gmra.mrb[0].mxu0 %v1412
        %v3201 = vpop.f32.mrb[0].mxu0
        %v3202 = vadd.f32 0.0, %v3201
        %v3203 = vpop.f32.mrb[0].mxu0
        %3204 = vmatprep.mubr.f32.mxu0 0.0
        %3205 = vmatmul.mubr.f32.gmra.mrb[0].mxu0 %v1414
        %v3206 = vpop.f32.mrb[0].mxu0
        %v3207 = vadd.f32 0.0, %v3206
        %v3208 = vpop.f32.mrb[0].mxu0
        %3209 = vmatprep.mubr.f32.mxu0 0.0
        %3210 = vmatmul.mubr.f32.gmra.mrb[0].mxu0 %v1416
        %v3211 = vpop.f32.mrb[0].mxu0
        %v3212 = vadd.f32 0.0, %v3211
        %v3213 = vpop.f32.mrb[0].mxu0
        %3214 = vmatprep.mubr.f32.mxu0 0.0
        %3215 = vmatmul.mubr.f32.gmra.mrb[0].mxu0 %v1418
        %v3216 = vpop.f32.mrb[0].mxu0
        %v3217 = vadd.f32 0.0, %v3216
        %v3218 = vpop.f32.mrb[0].mxu0
        %3219 = vmatprep.mubr.f32.mxu0 0.0
        %3220 = vmatmul.mubr.f32.gmra.mrb[0].mxu0 %v1420
        %v3221 = vpop.f32.mrb[0].mxu0
        %v3222 = vadd.f32 0.0, %v3221
        %v3223 = vpop.f32.mrb[0].mxu0
        %3224 = vmatprep.mubr.f32.mxu0 0.0
        %3225 = vmatmul.mubr.f32.gmra.mrb[0].mxu0 %v1422
        %v3226 = vpop.f32.mrb[0].mxu0
        %v3227 = vadd.f32 0.0, %v3226
        %v3228 = vpop.f32.mrb[0].mxu0
        %3229 = vmatprep.mubr.f32.mxu0 0.0
        %3230 = vmatmul.mubr.f32.gmra.mrb[0].mxu0 %v1424
        %v3231 = vpop.f32.mrb[0].mxu0
        %v3232 = vadd.f32 0.0, %v3231
        %v3233 = vpop.f32.mrb[0].mxu0
        %3234 = vmatprep.mubr.f32.mxu0 0.0
        %3235 = vmatmul.mubr.f32.gmra.mrb[0].mxu0 %v1426
        %v3236 = vpop.f32.mrb[0].mxu0
        %v3237 = vadd.f32 0.0, %v3236
        %v3238 = vpop.f32.mrb[0].mxu0
        %3239 = vmatprep.mubr.f32.mxu0 0.0
        %3240 = vmatmul.mubr.f32.gmra.mrb[0].mxu0 %v1428
        %v3241 = vpop.f32.mrb[0].mxu0
        %v3242 = vadd.f32 0.0, %v3241
        %v3243 = vpop.f32.mrb[0].mxu0
        %3244 = vmatprep.mubr.f32.mxu0 0.0
        %3245 = vmatmul.mubr.f32.gmra.mrb[0].mxu0 %v1430
        %v3246 = vpop.f32.mrb[0].mxu0
        %v3247 = vadd.f32 0.0, %v3246
        %v3248 = vpop.f32.mrb[0].mxu0
        %3249 = vmatprep.mubr.f32.mxu0 0.0
        %3250 = vmatmul.mubr.f32.gmra.mrb[0].mxu0 %v2233
        %v3251 = vpop.f32.mrb[0].mxu0
        %v3252 = vadd.f32 0.0, %v3251
        %v3253 = vpop.f32.mrb[0].mxu0
        %3254 = vmatprep.mubr.f32.mxu0 0.0
        %3255 = vmatmul.mubr.f32.gmra.mrb[0].mxu0 %v2235
        %v3256 = vpop.f32.mrb[0].mxu0
        %v3257 = vadd.f32 0.0, %v3256
        %v3258 = vpop.f32.mrb[0].mxu0
        %3259 = vmatprep.mubr.f32.mxu0 0.0
        %3260 = vmatmul.mubr.f32.gmra.mrb[0].mxu0 %v3038
        %v3261 = vpop.f32.mrb[0].mxu0
        %v3262 = vadd.f32 0.0, %v3261
        %v3263 = vpop.f32.mrb[0].mxu0
        %3264 = vmatprep.mubr.f32.mxu0 0.0
        %3265 = vmatmul.mubr.f32.gmra.mrb[0].mxu0 %v3040
        %v3266 = vpop.f32.mrb[0].mxu0
        %v3267 = vadd.f32 0.0, %v3266
        %v3268 = vpop.f32.mrb[0].mxu0
        %3269 = vdwg.mxu0
        %v3270 = vadd.f32 %v3001, %v3112
        %v3271 = vadd.f32 %v3002, %v3117
        %v3272 = vadd.f32 %v3003, %v3122
        %v3273 = vadd.f32 %v3004, %v3127
        %v3274 = vadd.f32 %v3005, %v3132
        %v3275 = vadd.f32 %v3006, %v3137
        %v3276 = vadd.f32 %v3007, %v3142
        %v3277 = vadd.f32 %v3008, %v3147
        %v3278 = vadd.f32 %v3009, %v3152
        %v3279 = vadd.f32 %v3010, %v3157
        %v3280 = vadd.f32 %v3011, %v3162
        %v3281 = vadd.f32 %v3012, %v3167
        %v3282 = vadd.f32 %v3013, %v3172
        %v3283 = vadd.f32 %v3014, %v3177
        %v3284 = vadd.f32 %v3015, %v3182
        %v3285 = vadd.f32 %v3016, %v3187
        %v3286 = vadd.f32 %v3017, %v3192
        %v3287 = vadd.f32 %v3018, %v3197
        %v3288 = vadd.f32 %v3019, %v3202
        %v3289 = vadd.f32 %v3020, %v3207
        %v3290 = vadd.f32 %v3021, %v3212
        %v3291 = vadd.f32 %v3022, %v3217
        %v3292 = vadd.f32 %v3023, %v3222
        %v3293 = vadd.f32 %v3024, %v3227
        %v3294 = vadd.f32 %v3025, %v3232
        %v3295 = vadd.f32 %v3026, %v3237
        %v3296 = vadd.f32 %v3027, %v3242
        %v3297 = vadd.f32 %v3028, %v3247
        %v3298 = vadd.f32 %v3029, %v3252
        %v3299 = vadd.f32 %v3030, %v3257
        %v3300 = vadd.f32 %v3031, %v3262
        %v3301 = vadd.f32 %v3032, %v3267
        %v3302 = vlaneseq
        %v3303 = vshrl.u32 %v3302, 7
        %v3304 = vsub.s32 0, %v3303
        %v3305 = vrot.slane %v572, %v3304
        %v3306 = vmul.f32 %v3270, %v3305
        %v3307 = vmul.f32 %v3271, %v3305
        %v3308 = vmul.f32 %v3272, %v3305
        %v3309 = vmul.f32 %v3273, %v3305
        %v3310 = vmul.f32 %v3274, %v3305
        %v3311 = vmul.f32 %v3275, %v3305
        %v3312 = vmul.f32 %v3276, %v3305
        %v3313 = vmul.f32 %v3277, %v3305
        %v3314 = vmul.f32 %v3278, %v3305
        %v3315 = vmul.f32 %v3279, %v3305
        %v3316 = vmul.f32 %v3280, %v3305
        %v3317 = vmul.f32 %v3281, %v3305
        %v3318 = vmul.f32 %v3282, %v3305
        %v3319 = vmul.f32 %v3283, %v3305
        %v3320 = vmul.f32 %v3284, %v3305
        %v3321 = vmul.f32 %v3285, %v3305
        %v3322 = vmul.f32 %v3286, %v3305
        %v3323 = vmul.f32 %v3287, %v3305
        %v3324 = vmul.f32 %v3288, %v3305
        %v3325 = vmul.f32 %v3289, %v3305
        %v3326 = vmul.f32 %v3290, %v3305
        %v3327 = vmul.f32 %v3291, %v3305
        %v3328 = vmul.f32 %v3292, %v3305
        %v3329 = vmul.f32 %v3293, %v3305
        %v3330 = vmul.f32 %v3294, %v3305
        %v3331 = vmul.f32 %v3295, %v3305
        %v3332 = vmul.f32 %v3296, %v3305
        %v3333 = vmul.f32 %v3297, %v3305
        %v3334 = vmul.f32 %v3298, %v3305
        %v3335 = vmul.f32 %v3299, %v3305
        %v3336 = vmul.f32 %v3300, %v3305
        %v3337 = vmul.f32 %v3301, %v3305
        %v3338 = vlaneseq
        %v3339 = vshrl.u32 %v3338, 7
        %v3340 = vsub.s32 1, %v3339
        %v3341 = vrot.slane %v572, %v3340
        %v3342 = vadd.f32 %v3306, %v3341
        %v3343 = vadd.f32 %v3307, %v3341
        %v3344 = vadd.f32 %v3308, %v3341
        %v3345 = vadd.f32 %v3309, %v3341
        %v3346 = vadd.f32 %v3310, %v3341
        %v3347 = vadd.f32 %v3311, %v3341
        %v3348 = vadd.f32 %v3312, %v3341
        %v3349 = vadd.f32 %v3313, %v3341
        %v3350 = vadd.f32 %v3314, %v3341
        %v3351 = vadd.f32 %v3315, %v3341
        %v3352 = vadd.f32 %v3316, %v3341
        %v3353 = vadd.f32 %v3317, %v3341
        %v3354 = vadd.f32 %v3318, %v3341
        %v3355 = vadd.f32 %v3319, %v3341
        %v3356 = vadd.f32 %v3320, %v3341
        %v3357 = vadd.f32 %v3321, %v3341
        %v3358 = vadd.f32 %v3322, %v3341
        %v3359 = vadd.f32 %v3323, %v3341
        %v3360 = vadd.f32 %v3324, %v3341
        %v3361 = vadd.f32 %v3325, %v3341
        %v3362 = vadd.f32 %v3326, %v3341
        %v3363 = vadd.f32 %v3327, %v3341
        %v3364 = vadd.f32 %v3328, %v3341
        %v3365 = vadd.f32 %v3329, %v3341
        %v3366 = vadd.f32 %v3330, %v3341
        %v3367 = vadd.f32 %v3331, %v3341
        %v3368 = vadd.f32 %v3332, %v3341
        %v3369 = vadd.f32 %v3333, %v3341
        %v3370 = vadd.f32 %v3334, %v3341
        %v3371 = vadd.f32 %v3335, %v3341
        %v3372 = vadd.f32 %v3336, %v3341
        %v3373 = vadd.f32 %v3337, %v3341
        %v3374 = vmax.f32 %v3342, 0.0
        %v3375 = vmax.f32 %v3343, 0.0
        %v3376 = vmax.f32 %v3344, 0.0
        %v3377 = vmax.f32 %v3345, 0.0
        %v3378 = vmax.f32 %v3346, 0.0
        %v3379 = vmax.f32 %v3347, 0.0
        %v3380 = vmax.f32 %v3348, 0.0
        %v3381 = vmax.f32 %v3349, 0.0
        %v3382 = vmax.f32 %v3350, 0.0
        %v3383 = vmax.f32 %v3351, 0.0
        %v3384 = vmax.f32 %v3352, 0.0
        %v3385 = vmax.f32 %v3353, 0.0
        %v3386 = vmax.f32 %v3354, 0.0
        %v3387 = vmax.f32 %v3355, 0.0
        %v3388 = vmax.f32 %v3356, 0.0
        %v3389 = vmax.f32 %v3357, 0.0
        %v3390 = vmax.f32 %v3358, 0.0
        %v3391 = vmax.f32 %v3359, 0.0
        %v3392 = vmax.f32 %v3360, 0.0
        %v3393 = vmax.f32 %v3361, 0.0
        %v3394 = vmax.f32 %v3362, 0.0
        %v3395 = vmax.f32 %v3363, 0.0
        %v3396 = vmax.f32 %v3364, 0.0
        %v3397 = vmax.f32 %v3365, 0.0
        %v3398 = vmax.f32 %v3366, 0.0
        %v3399 = vmax.f32 %v3367, 0.0
        %v3400 = vmax.f32 %v3368, 0.0
        %v3401 = vmax.f32 %v3369, 0.0
        %v3402 = vmax.f32 %v3370, 0.0
        %v3403 = vmax.f32 %v3371, 0.0
        %v3404 = vmax.f32 %v3372, 0.0
        %v3405 = vmax.f32 %v3373, 0.0
        %v3406 = vmax.f32 %v3374, %v3376
        %v3407 = vmax.f32 %v3375, %v3377
        %v3408 = vmax.f32 %v3378, %v3380
        %v3409 = vmax.f32 %v3379, %v3381
        %v3410 = vmax.f32 %v3382, %v3384
        %v3411 = vmax.f32 %v3383, %v3385
        %v3412 = vmax.f32 %v3386, %v3388
        %v3413 = vmax.f32 %v3387, %v3389
        %v3414 = vmax.f32 %v3390, %v3392
        %v3415 = vmax.f32 %v3391, %v3393
        %v3416 = vmax.f32 %v3394, %v3396
        %v3417 = vmax.f32 %v3395, %v3397
        %v3418 = vmax.f32 %v3398, %v3400
        %v3419 = vmax.f32 %v3399, %v3401
        %v3420 = vmax.f32 %v3402, %v3404
        %v3421 = vmax.f32 %v3403, %v3405
        %v3422 = vld [vmem:[%s3] sm:$0xff]
        %v3423 = vld [vmem:[%s3 + $0x8] sm:$0xff]
        %v3424 = vld [vmem:[%s3 + $0x10] sm:$0xff]
        %v3425 = vld [vmem:[%s3 + $0x18] sm:$0xff]
        %v3426 = vld [vmem:[%s3 + $0x20] sm:$0xff]
        %v3427 = vld [vmem:[%s3 + $0x28] sm:$0xff]
        %v3428 = vld [vmem:[%s3 + $0x30] sm:$0xff]
        %v3429 = vld [vmem:[%s3 + $0x38] sm:$0xff]
        %v3430 = vld [vmem:[%s3 + $0x40] sm:$0xff]
        %v3431 = vld [vmem:[%s3 + $0x48] sm:$0xff]
        %v3432 = vld [vmem:[%s3 + $0x50] sm:$0xff]
        %v3433 = vld [vmem:[%s3 + $0x58] sm:$0xff]
        %v3434 = vld [vmem:[%s3 + $0x60] sm:$0xff]
        %v3435 = vld [vmem:[%s3 + $0x68] sm:$0xff]
        %v3436 = vld [vmem:[%s3 + $0x70] sm:$0xff]
        %v3437 = vld [vmem:[%s3 + $0x78] sm:$0xff]
        %3438 = vmatprep.subr.mxu0 0.0
        %3439 = vmatpush1.msra.mxu0 %v3406
        %3440 = vmatprep.subr.mxu0 0.0
        %3441 = vmatpush1.msra.mxu0 %v3407
        %3442 = vmatprep.subr.mxu0 0.0
        %3443 = vmatpush1.msra.mxu0 %v3408
        %3444 = vmatprep.subr.mxu0 0.0
        %3445 = vmatpush1.msra.mxu0 %v3409
        %3446 = vmatprep.subr.mxu0 0.0
        %3447 = vmatpush1.msra.mxu0 %v3410
        %3448 = vmatprep.subr.mxu0 0.0
        %3449 = vmatpush1.msra.mxu0 %v3411
        %3450 = vmatprep.subr.mxu0 0.0
        %3451 = vmatpush1.msra.mxu0 %v3412
        %3452 = vmatprep.subr.mxu0 0.0
        %3453 = vmatpush1.msra.mxu0 %v3413
        %3454 = vmatprep.subr.mxu0 0.0
        %3455 = vmatpush1.msra.mxu0 %v3414
        %3456 = vmatprep.subr.mxu0 0.0
        %3457 = vmatpush1.msra.mxu0 %v3415
        %3458 = vmatprep.subr.mxu0 0.0
        %3459 = vmatpush1.msra.mxu0 %v3416
        %3460 = vmatprep.subr.mxu0 0.0
        %3461 = vmatpush1.msra.mxu0 %v3417
        %3462 = vmatprep.subr.mxu0 0.0
        %3463 = vmatpush1.msra.mxu0 %v3418
        %3464 = vmatprep.subr.mxu0 0.0
        %3465 = vmatpush1.msra.mxu0 %v3419
        %3466 = vmatprep.subr.mxu0 0.0
        %3467 = vmatpush1.msra.mxu0 %v3420
        %3468 = vmatprep.subr.mxu0 0.0
        %3469 = vmatpush1.msra.mxu0 %v3421
        %3470 = vmatprep.subr.mxu0 0.0
        %3471 = vmatpush1.msra.mxu0 0.0
        %3472 = vmatprep.subr.mxu0 0.0
        %3473 = vmatpush1.msra.mxu0 0.0
        %3474 = vmatprep.subr.mxu0 0.0
        %3475 = vmatpush1.msra.mxu0 0.0
        %3476 = vmatprep.subr.mxu0 0.0
        %3477 = vmatpush1.msra.mxu0 0.0
        %3478 = vmatprep.subr.mxu0 0.0
        %3479 = vmatpush1.msra.mxu0 0.0
        %3480 = vmatprep.subr.mxu0 0.0
        %3481 = vmatpush1.msra.mxu0 0.0
        %3482 = vmatprep.subr.mxu0 0.0
        %3483 = vmatpush1.msra.mxu0 0.0
        %3484 = vmatprep.subr.mxu0 0.0
        %3485 = vmatpush1.msra.mxu0 0.0
        %3486 = vmatprep.subr.mxu0 0.0
        %3487 = vmatpush1.msra.mxu0 0.0
        %3488 = vmatprep.subr.mxu0 0.0
        %3489 = vmatpush1.msra.mxu0 0.0
        %3490 = vmatprep.subr.mxu0 0.0
        %3491 = vmatpush1.msra.mxu0 0.0
        %3492 = vmatprep.subr.mxu0 0.0
        %3493 = vmatpush1.msra.mxu0 0.0
        %3494 = vmatprep.subr.mxu0 0.0
        %3495 = vmatpush1.msra.mxu0 0.0
        %3496 = vmatprep.subr.mxu0 0.0
        %3497 = vmatpush1.msra.mxu0 0.0
        %3498 = vmatprep.subr.mxu0 0.0
        %3499 = vmatpush1.msra.mxu0 0.0
        %3500 = vmatprep.subr.mxu0 0.0
        %3501 = vmatpush1.msra.mxu0 0.0
        %3502 = vmatprep.mubr.f32.mxu0 0.0
        %3503 = vmatmul.mubr.f32.gmra.mrb[0].mxu0 %v3422
        %v3504 = vpop.f32.mrb[0].mxu0
        %v3505 = vadd.f32 0.0, %v3504
        %v3506 = vpop.f32.mrb[0].mxu0
        %3507 = vmatprep.mubr.f32.mxu0 0.0
        %3508 = vmatmul.mubr.f32.gmra.mrb[0].mxu0 %v3423
        %v3509 = vpop.f32.mrb[0].mxu0
        %v3510 = vadd.f32 0.0, %v3509
        %v3511 = vpop.f32.mrb[0].mxu0
        %3512 = vmatprep.mubr.f32.mxu0 0.0
        %3513 = vmatmul.mubr.f32.gmra.mrb[0].mxu0 %v3424
        %v3514 = vpop.f32.mrb[0].mxu0
        %v3515 = vadd.f32 0.0, %v3514
        %v3516 = vpop.f32.mrb[0].mxu0
        %3517 = vmatprep.mubr.f32.mxu0 0.0
        %3518 = vmatmul.mubr.f32.gmra.mrb[0].mxu0 %v3425
        %v3519 = vpop.f32.mrb[0].mxu0
        %v3520 = vadd.f32 0.0, %v3519
        %v3521 = vpop.f32.mrb[0].mxu0
        %3522 = vmatprep.mubr.f32.mxu0 0.0
        %3523 = vmatmul.mubr.f32.gmra.mrb[0].mxu0 %v3426
        %v3524 = vpop.f32.mrb[0].mxu0
        %v3525 = vadd.f32 0.0, %v3524
        %v3526 = vpop.f32.mrb[0].mxu0
        %3527 = vmatprep.mubr.f32.mxu0 0.0
        %3528 = vmatmul.mubr.f32.gmra.mrb[0].mxu0 %v3427
        %v3529 = vpop.f32.mrb[0].mxu0
        %v3530 = vadd.f32 0.0, %v3529
        %v3531 = vpop.f32.mrb[0].mxu0
        %3532 = vmatprep.mubr.f32.mxu0 0.0
        %3533 = vmatmul.mubr.f32.gmra.mrb[0].mxu0 %v3428
        %v3534 = vpop.f32.mrb[0].mxu0
        %v3535 = vadd.f32 0.0, %v3534
        %v3536 = vpop.f32.mrb[0].mxu0
        %3537 = vmatprep.mubr.f32.mxu0 0.0
        %3538 = vmatmul.mubr.f32.gmra.mrb[0].mxu0 %v3429
        %v3539 = vpop.f32.mrb[0].mxu0
        %v3540 = vadd.f32 0.0, %v3539
        %v3541 = vpop.f32.mrb[0].mxu0
        %3542 = vdwg.mxu0
        %3543 = vmatprep.subr.mxu0 0.0
        %3544 = vmatpush1.msra.mxu0 %v3406
        %3545 = vmatprep.subr.mxu0 0.0
        %3546 = vmatpush1.msra.mxu0 %v3407
        %3547 = vmatprep.subr.mxu0 0.0
        %3548 = vmatpush1.msra.mxu0 %v3408
        %3549 = vmatprep.subr.mxu0 0.0
        %3550 = vmatpush1.msra.mxu0 %v3409
        %3551 = vmatprep.subr.mxu0 0.0
        %3552 = vmatpush1.msra.mxu0 %v3410
        %3553 = vmatprep.subr.mxu0 0.0
        %3554 = vmatpush1.msra.mxu0 %v3411
        %3555 = vmatprep.subr.mxu0 0.0
        %3556 = vmatpush1.msra.mxu0 %v3412
        %3557 = vmatprep.subr.mxu0 0.0
        %3558 = vmatpush1.msra.mxu0 %v3413
        %3559 = vmatprep.subr.mxu0 0.0
        %3560 = vmatpush1.msra.mxu0 %v3414
        %3561 = vmatprep.subr.mxu0 0.0
        %3562 = vmatpush1.msra.mxu0 %v3415
        %3563 = vmatprep.subr.mxu0 0.0
        %3564 = vmatpush1.msra.mxu0 %v3416
        %3565 = vmatprep.subr.mxu0 0.0
        %3566 = vmatpush1.msra.mxu0 %v3417
        %3567 = vmatprep.subr.mxu0 0.0
        %3568 = vmatpush1.msra.mxu0 %v3418
        %3569 = vmatprep.subr.mxu0 0.0
        %3570 = vmatpush1.msra.mxu0 %v3419
        %3571 = vmatprep.subr.mxu0 0.0
        %3572 = vmatpush1.msra.mxu0 %v3420
        %3573 = vmatprep.subr.mxu0 0.0
        %3574 = vmatpush1.msra.mxu0 %v3421
        %3575 = vmatprep.subr.mxu0 0.0
        %3576 = vmatpush1.msra.mxu0 0.0
        %3577 = vmatprep.subr.mxu0 0.0
        %3578 = vmatpush1.msra.mxu0 0.0
        %3579 = vmatprep.subr.mxu0 0.0
        %3580 = vmatpush1.msra.mxu0 0.0
        %3581 = vmatprep.subr.mxu0 0.0
        %3582 = vmatpush1.msra.mxu0 0.0
        %3583 = vmatprep.subr.mxu0 0.0
        %3584 = vmatpush1.msra.mxu0 0.0
        %3585 = vmatprep.subr.mxu0 0.0
        %3586 = vmatpush1.msra.mxu0 0.0
        %3587 = vmatprep.subr.mxu0 0.0
        %3588 = vmatpush1.msra.mxu0 0.0
        %3589 = vmatprep.subr.mxu0 0.0
        %3590 = vmatpush1.msra.mxu0 0.0
        %3591 = vmatprep.subr.mxu0 0.0
        %3592 = vmatpush1.msra.mxu0 0.0
        %3593 = vmatprep.subr.mxu0 0.0
        %3594 = vmatpush1.msra.mxu0 0.0
        %3595 = vmatprep.subr.mxu0 0.0
        %3596 = vmatpush1.msra.mxu0 0.0
        %3597 = vmatprep.subr.mxu0 0.0
        %3598 = vmatpush1.msra.mxu0 0.0
        %3599 = vmatprep.subr.mxu0 0.0
        %3600 = vmatpush1.msra.mxu0 0.0
        %3601 = vmatprep.subr.mxu0 0.0
        %3602 = vmatpush1.msra.mxu0 0.0
        %3603 = vmatprep.subr.mxu0 0.0
        %3604 = vmatpush1.msra.mxu0 0.0
        %3605 = vmatprep.subr.mxu0 0.0
        %3606 = vmatpush1.msra.mxu0 0.0
        %3607 = vmatprep.mubr.f32.mxu0 0.0
        %3608 = vmatmul.mubr.f32.gmra.mrb[0].mxu0 %v3430
        %v3609 = vpop.f32.mrb[0].mxu0
        %v3610 = vadd.f32 0.0, %v3609
        %v3611 = vpop.f32.mrb[0].mxu0
        %3612 = vmatprep.mubr.f32.mxu0 0.0
        %3613 = vmatmul.mubr.f32.gmra.mrb[0].mxu0 %v3431
        %v3614 = vpop.f32.mrb[0].mxu0
        %v3615 = vadd.f32 0.0, %v3614
        %v3616 = vpop.f32.mrb[0].mxu0
        %3617 = vmatprep.mubr.f32.mxu0 0.0
        %3618 = vmatmul.mubr.f32.gmra.mrb[0].mxu0 %v3432
        %v3619 = vpop.f32.mrb[0].mxu0
        %v3620 = vadd.f32 0.0, %v3619
        %v3621 = vpop.f32.mrb[0].mxu0
        %3622 = vmatprep.mubr.f32.mxu0 0.0
        %3623 = vmatmul.mubr.f32.gmra.mrb[0].mxu0 %v3433
        %v3624 = vpop.f32.mrb[0].mxu0
        %v3625 = vadd.f32 0.0, %v3624
        %v3626 = vpop.f32.mrb[0].mxu0
        %3627 = vmatprep.mubr.f32.mxu0 0.0
        %3628 = vmatmul.mubr.f32.gmra.mrb[0].mxu0 %v3434
        %v3629 = vpop.f32.mrb[0].mxu0
        %v3630 = vadd.f32 0.0, %v3629
        %v3631 = vpop.f32.mrb[0].mxu0
        %3632 = vmatprep.mubr.f32.mxu0 0.0
        %3633 = vmatmul.mubr.f32.gmra.mrb[0].mxu0 %v3435
        %v3634 = vpop.f32.mrb[0].mxu0
        %v3635 = vadd.f32 0.0, %v3634
        %v3636 = vpop.f32.mrb[0].mxu0
        %3637 = vmatprep.mubr.f32.mxu0 0.0
        %3638 = vmatmul.mubr.f32.gmra.mrb[0].mxu0 %v3436
        %v3639 = vpop.f32.mrb[0].mxu0
        %v3640 = vadd.f32 0.0, %v3639
        %v3641 = vpop.f32.mrb[0].mxu0
        %3642 = vmatprep.mubr.f32.mxu0 0.0
        %3643 = vmatmul.mubr.f32.gmra.mrb[0].mxu0 %v3437
        %v3644 = vpop.f32.mrb[0].mxu0
        %v3645 = vadd.f32 0.0, %v3644
        %v3646 = vpop.f32.mrb[0].mxu0
        %3647 = vdwg.mxu0
        %v3648 = vmax.f32 %v3505, %v3610
        %v3649 = vmax.f32 %v3510, %v3615
        %v3650 = vmax.f32 %v3515, %v3620
        %v3651 = vmax.f32 %v3520, %v3625
        %v3652 = vmax.f32 %v3525, %v3630
        %v3653 = vmax.f32 %v3530, %v3635
        %v3654 = vmax.f32 %v3535, %v3640
        %v3655 = vmax.f32 %v3540, %v3645
        %3656 = vst [vmem:[#allocation3] sm:$0xff] 0.0
        %3657 = vst [vmem:[#allocation3 + $0x8] sm:$0x3] 0.0
        %3658 = vst [vmem:[#allocation3 + $0x10] sm:$0xff] 0.0
        %3659 = vst [vmem:[#allocation3 + $0x18] sm:$0x3] 0.0
        %3660 = vst [vmem:[#allocation3 + $0x20] sm:$0xff] 0.0
        %3661 = vst [vmem:[#allocation3 + $0x28] sm:$0x3] 0.0
        %3662 = vst [vmem:[#allocation3 + $0x30] sm:$0xff] 0.0
        %3663 = vst [vmem:[#allocation3 + $0x38] sm:$0x3] 0.0
        %3664 = vst [vmem:[#allocation3 + $0x40] sm:$0xff] 0.0
        %3665 = vst [vmem:[#allocation3 + $0x48] sm:$0x3] 0.0
        %3666 = vst [vmem:[#allocation3 + $0x50] sm:$0xff] 0.0
        %3667 = vst [vmem:[#allocation3 + $0x58] sm:$0x3] 0.0
        %3668 = vst [vmem:[#allocation3 + $0x60] sm:$0xff] 0.0
        %3669 = vst [vmem:[#allocation3 + $0x68] sm:$0x3] 0.0
        %3670 = vst [vmem:[#allocation3 + $0x70] sm:$0xff] 0.0
        %3671 = vst [vmem:[#allocation3 + $0x78] sm:$0x3] 0.0
        %3672 = vst [vmem:[#allocation3 + $0x80] sm:$0xff] 0.0
        %3673 = vst [vmem:[#allocation3 + $0x88] sm:$0x3] 0.0
        %3674 = vst [vmem:[#allocation3 + $0x90] sm:$0xff] 0.0
        %3675 = vst [vmem:[#allocation3 + $0x98] sm:$0x3] 0.0
        %s3676 = scalar_lea.vmem [#allocation3], 16
        %3677 = vst [vmem:[%s3676 + $0x1] sm:$0xff] %v3648
        %3678 = vst [vmem:[%s3676 + $0x11] sm:$0xff] %v3649
        %3679 = vst [vmem:[%s3676 + $0x21] sm:$0xff] %v3650
        %3680 = vst [vmem:[%s3676 + $0x31] sm:$0xff] %v3651
        %3681 = vst [vmem:[%s3676 + $0x41] sm:$0xff] %v3652
        %3682 = vst [vmem:[%s3676 + $0x51] sm:$0xff] %v3653
        %3683 = vst [vmem:[%s3676 + $0x61] sm:$0xff] %v3654
        %3684 = vst [vmem:[%s3676 + $0x71] sm:$0xff] %v3655
        %v3685 = vld [vmem:[#allocation3] sm:$0xff]
        %v3686 = vld [vmem:[#allocation3 + $0x8] sm:$0x3]
        %v3687 = vld [vmem:[#allocation3 + $0x10] sm:$0xff]
        %v3688 = vld [vmem:[#allocation3 + $0x18] sm:$0x3]
        %v3689 = vld [vmem:[#allocation3 + $0x20] sm:$0xff]
        %v3690 = vld [vmem:[#allocation3 + $0x28] sm:$0x3]
        %v3691 = vld [vmem:[#allocation3 + $0x30] sm:$0xff]
        %v3692 = vld [vmem:[#allocation3 + $0x38] sm:$0x3]
        %v3693 = vld [vmem:[#allocation3 + $0x40] sm:$0xff]
        %v3694 = vld [vmem:[#allocation3 + $0x48] sm:$0x3]
        %v3695 = vld [vmem:[#allocation3 + $0x50] sm:$0xff]
        %v3696 = vld [vmem:[#allocation3 + $0x58] sm:$0x3]
        %v3697 = vld [vmem:[#allocation3 + $0x60] sm:$0xff]
        %v3698 = vld [vmem:[#allocation3 + $0x68] sm:$0x3]
        %v3699 = vld [vmem:[#allocation3 + $0x70] sm:$0xff]
        %v3700 = vld [vmem:[#allocation3 + $0x78] sm:$0x3]
        %v3701 = vld [vmem:[#allocation3 + $0x80] sm:$0xff]
        %v3702 = vld [vmem:[#allocation3 + $0x88] sm:$0x3]
        %v3703 = vld [vmem:[#allocation3 + $0x90] sm:$0xff]
        %v3704 = vld [vmem:[#allocation3 + $0x98] sm:$0x3]
        %v3705 = vld [vmem:[#allocation5] sm:$0xff]
        %v3706 = vld [vmem:[#allocation5 + $0x8] sm:$0xff]
        %v3707 = vld [vmem:[#allocation5 + $0x10] sm:$0xff]
        %v3708 = vld [vmem:[#allocation5 + $0x18] sm:$0xff]
        %v3709 = vld [vmem:[#allocation5 + $0x20] sm:$0xff]
        %v3710 = vld [vmem:[#allocation5 + $0x28] sm:$0xff]
        %v3711 = vld [vmem:[#allocation5 + $0x30] sm:$0xff]
        %v3712 = vld [vmem:[#allocation5 + $0x38] sm:$0xff]
        %v3713 = vld [vmem:[#allocation5 + $0x40] sm:$0xff]
        %v3714 = vld [vmem:[#allocation5 + $0x48] sm:$0xff]
        %v3715 = vld [vmem:[#allocation5 + $0x50] sm:$0xff]
        %v3716 = vld [vmem:[#allocation5 + $0x58] sm:$0xff]
        %v3717 = vld [vmem:[#allocation5 + $0x60] sm:$0xff]
        %v3718 = vld [vmem:[#allocation5 + $0x68] sm:$0xff]
        %v3719 = vld [vmem:[#allocation5 + $0x70] sm:$0xff]
        %v3720 = vld [vmem:[#allocation5 + $0x78] sm:$0xff]
        %v3721 = vld [vmem:[#allocation5 + $0x80] sm:$0xff]
        %v3722 = vld [vmem:[#allocation5 + $0x88] sm:$0xff]
        %v3723 = vld [vmem:[#allocation5 + $0x90] sm:$0xff]
        %v3724 = vld [vmem:[#allocation5 + $0x98] sm:$0xff]
        %v3725 = vld [vmem:[#allocation5 + $0xa0] sm:$0xff]
        %v3726 = vld [vmem:[#allocation5 + $0xa8] sm:$0xff]
        %v3727 = vld [vmem:[#allocation5 + $0xb0] sm:$0xff]
        %v3728 = vld [vmem:[#allocation5 + $0xb8] sm:$0xff]
        %v3729 = vld [vmem:[#allocation5 + $0xc0] sm:$0xff]
        %v3730 = vld [vmem:[#allocation5 + $0xc8] sm:$0xff]
        %v3731 = vld [vmem:[#allocation5 + $0xd0] sm:$0xff]
        %v3732 = vld [vmem:[#allocation5 + $0xd8] sm:$0xff]
        %v3733 = vld [vmem:[#allocation5 + $0xe0] sm:$0xff]
        %v3734 = vld [vmem:[#allocation5 + $0xe8] sm:$0xff]
        %v3735 = vld [vmem:[#allocation5 + $0xf0] sm:$0xff]
        %v3736 = vld [vmem:[#allocation5 + $0xf8] sm:$0xff]
        %v3737 = vld [vmem:[#allocation5 + $0x100] sm:$0xff]
        %v3738 = vld [vmem:[#allocation5 + $0x108] sm:$0xff]
        %v3739 = vld [vmem:[#allocation5 + $0x110] sm:$0xff]
        %v3740 = vld [vmem:[#allocation5 + $0x118] sm:$0xff]
        %v3741 = vld [vmem:[#allocation5 + $0x120] sm:$0xff]
        %v3742 = vld [vmem:[#allocation5 + $0x128] sm:$0xff]
        %v3743 = vld [vmem:[#allocation5 + $0x130] sm:$0xff]
        %v3744 = vld [vmem:[#allocation5 + $0x138] sm:$0xff]
        %v3745 = vld [vmem:[#allocation5 + $0x140] sm:$0xff]
        %v3746 = vld [vmem:[#allocation5 + $0x148] sm:$0xff]
        %v3747 = vld [vmem:[#allocation5 + $0x150] sm:$0xff]
        %v3748 = vld [vmem:[#allocation5 + $0x158] sm:$0xff]
        %v3749 = vld [vmem:[#allocation5 + $0x160] sm:$0xff]
        %v3750 = vld [vmem:[#allocation5 + $0x168] sm:$0xff]
        %v3751 = vld [vmem:[#allocation5 + $0x170] sm:$0xff]
        %v3752 = vld [vmem:[#allocation5 + $0x178] sm:$0xff]
        %v3753 = vld [vmem:[#allocation5 + $0x180] sm:$0xff]
        %v3754 = vld [vmem:[#allocation5 + $0x188] sm:$0xff]
        %v3755 = vld [vmem:[#allocation5 + $0x190] sm:$0xff]
        %v3756 = vld [vmem:[#allocation5 + $0x198] sm:$0xff]
        %v3757 = vld [vmem:[#allocation5 + $0x1a0] sm:$0xff]
        %v3758 = vld [vmem:[#allocation5 + $0x1a8] sm:$0xff]
        %v3759 = vld [vmem:[#allocation5 + $0x1b0] sm:$0xff]
        %v3760 = vld [vmem:[#allocation5 + $0x1b8] sm:$0xff]
        %v3761 = vld [vmem:[#allocation5 + $0x1c0] sm:$0xff]
        %v3762 = vld [vmem:[#allocation5 + $0x1c8] sm:$0xff]
        %v3763 = vld [vmem:[#allocation5 + $0x1d0] sm:$0xff]
        %v3764 = vld [vmem:[#allocation5 + $0x1d8] sm:$0xff]
        %v3765 = vld [vmem:[#allocation5 + $0x1e0] sm:$0xff]
        %v3766 = vld [vmem:[#allocation5 + $0x1e8] sm:$0xff]
        %v3767 = vld [vmem:[#allocation5 + $0x1f0] sm:$0xff]
        %v3768 = vld [vmem:[#allocation5 + $0x1f8] sm:$0xff]
        %v3769 = vld [vmem:[#allocation5 + $0x200] sm:$0xff]
        %v3770 = vld [vmem:[#allocation5 + $0x208] sm:$0xff]
        %v3771 = vld [vmem:[#allocation5 + $0x210] sm:$0xff]
        %v3772 = vld [vmem:[#allocation5 + $0x218] sm:$0xff]
        %v3773 = vld [vmem:[#allocation5 + $0x220] sm:$0xff]
        %v3774 = vld [vmem:[#allocation5 + $0x228] sm:$0xff]
        %v3775 = vld [vmem:[#allocation5 + $0x230] sm:$0xff]
        %v3776 = vld [vmem:[#allocation5 + $0x238] sm:$0xff]
        %v3777 = vld [vmem:[#allocation5 + $0x240] sm:$0xff]
        %v3778 = vld [vmem:[#allocation5 + $0x248] sm:$0xff]
        %v3779 = vld [vmem:[#allocation5 + $0x250] sm:$0xff]
        %v3780 = vld [vmem:[#allocation5 + $0x258] sm:$0xff]
        %v3781 = vld [vmem:[#allocation5 + $0x260] sm:$0xff]
        %v3782 = vld [vmem:[#allocation5 + $0x268] sm:$0xff]
        %v3783 = vld [vmem:[#allocation5 + $0x270] sm:$0xff]
        %v3784 = vld [vmem:[#allocation5 + $0x278] sm:$0xff]
        %v3785 = vld [vmem:[#allocation5 + $0x280] sm:$0xff]
        %v3786 = vld [vmem:[#allocation5 + $0x288] sm:$0xff]
        %v3787 = vld [vmem:[#allocation5 + $0x290] sm:$0xff]
        %v3788 = vld [vmem:[#allocation5 + $0x298] sm:$0xff]
        %v3789 = vld [vmem:[#allocation5 + $0x2a0] sm:$0xff]
        %v3790 = vld [vmem:[#allocation5 + $0x2a8] sm:$0xff]
        %v3791 = vld [vmem:[#allocation5 + $0x2b0] sm:$0xff]
        %v3792 = vld [vmem:[#allocation5 + $0x2b8] sm:$0xff]
        %v3793 = vld [vmem:[#allocation5 + $0x2c0] sm:$0xff]
        %v3794 = vld [vmem:[#allocation5 + $0x2c8] sm:$0xff]
        %v3795 = vld [vmem:[#allocation5 + $0x2d0] sm:$0xff]
        %v3796 = vld [vmem:[#allocation5 + $0x2d8] sm:$0xff]
        %v3797 = vld [vmem:[#allocation5 + $0x2e0] sm:$0xff]
        %v3798 = vld [vmem:[#allocation5 + $0x2e8] sm:$0xff]
        %v3799 = vld [vmem:[#allocation5 + $0x2f0] sm:$0xff]
        %v3800 = vld [vmem:[#allocation5 + $0x2f8] sm:$0xff]
        %v3801 = vld [vmem:[#allocation5 + $0x300] sm:$0xff]
        %v3802 = vld [vmem:[#allocation5 + $0x308] sm:$0xff]
        %v3803 = vld [vmem:[#allocation5 + $0x310] sm:$0xff]
        %v3804 = vld [vmem:[#allocation5 + $0x318] sm:$0xff]
        %v3805 = vld [vmem:[#allocation5 + $0x320] sm:$0xff]
        %v3806 = vld [vmem:[#allocation5 + $0x328] sm:$0xff]
        %v3807 = vld [vmem:[#allocation5 + $0x330] sm:$0xff]
        %v3808 = vld [vmem:[#allocation5 + $0x338] sm:$0xff]
        %v3809 = vld [vmem:[#allocation5 + $0x340] sm:$0xff]
        %v3810 = vld [vmem:[#allocation5 + $0x348] sm:$0xff]
        %v3811 = vld [vmem:[#allocation5 + $0x350] sm:$0xff]
        %v3812 = vld [vmem:[#allocation5 + $0x358] sm:$0xff]
        %v3813 = vld [vmem:[#allocation5 + $0x360] sm:$0xff]
        %v3814 = vld [vmem:[#allocation5 + $0x368] sm:$0xff]
        %v3815 = vld [vmem:[#allocation5 + $0x370] sm:$0xff]
        %v3816 = vld [vmem:[#allocation5 + $0x378] sm:$0xff]
        %v3817 = vld [vmem:[#allocation5 + $0x380] sm:$0xff]
        %v3818 = vld [vmem:[#allocation5 + $0x388] sm:$0xff]
        %v3819 = vld [vmem:[#allocation5 + $0x390] sm:$0xff]
        %v3820 = vld [vmem:[#allocation5 + $0x398] sm:$0xff]
        %v3821 = vld [vmem:[#allocation5 + $0x3a0] sm:$0xff]
        %v3822 = vld [vmem:[#allocation5 + $0x3a8] sm:$0xff]
        %v3823 = vld [vmem:[#allocation5 + $0x3b0] sm:$0xff]
        %v3824 = vld [vmem:[#allocation5 + $0x3b8] sm:$0xff]
        %v3825 = vld [vmem:[#allocation5 + $0x3c0] sm:$0xff]
        %v3826 = vld [vmem:[#allocation5 + $0x3c8] sm:$0xff]
        %v3827 = vld [vmem:[#allocation5 + $0x3d0] sm:$0xff]
        %v3828 = vld [vmem:[#allocation5 + $0x3d8] sm:$0xff]
        %v3829 = vld [vmem:[#allocation5 + $0x3e0] sm:$0xff]
        %v3830 = vld [vmem:[#allocation5 + $0x3e8] sm:$0xff]
        %v3831 = vld [vmem:[#allocation5 + $0x3f0] sm:$0xff]
        %v3832 = vld [vmem:[#allocation5 + $0x3f8] sm:$0xff]
        %v3833 = vld [vmem:[#allocation5 + $0x400] sm:$0xff]
        %v3834 = vld [vmem:[#allocation5 + $0x408] sm:$0xff]
        %v3835 = vld [vmem:[#allocation5 + $0x410] sm:$0xff]
        %v3836 = vld [vmem:[#allocation5 + $0x418] sm:$0xff]
        %v3837 = vld [vmem:[#allocation5 + $0x420] sm:$0xff]
        %v3838 = vld [vmem:[#allocation5 + $0x428] sm:$0xff]
        %v3839 = vld [vmem:[#allocation5 + $0x430] sm:$0xff]
        %v3840 = vld [vmem:[#allocation5 + $0x438] sm:$0xff]
        %v3841 = vld [vmem:[#allocation5 + $0x440] sm:$0xff]
        %v3842 = vld [vmem:[#allocation5 + $0x448] sm:$0xff]
        %v3843 = vld [vmem:[#allocation5 + $0x450] sm:$0xff]
        %v3844 = vld [vmem:[#allocation5 + $0x458] sm:$0xff]
        %v3845 = vld [vmem:[#allocation5 + $0x460] sm:$0xff]
        %v3846 = vld [vmem:[#allocation5 + $0x468] sm:$0xff]
        %v3847 = vld [vmem:[#allocation5 + $0x470] sm:$0xff]
        %v3848 = vld [vmem:[#allocation5 + $0x478] sm:$0xff]
        %v3849 = vld [vmem:[%s5] sm:$0x3]
        %v3866 = vrot.slane %v3685, 1
        %v3867 = vrot.slane %v3686, 1
        %v3868 = vsel %vm621, %v3866, %v3867
        %v3869 = vrot.slane %v3687, 1
        %v3870 = vrot.slane %v3688, 1
        %v3871 = vsel %vm621, %v3869, %v3870
        %v3872 = vrot.slane %v3689, 1
        %v3873 = vrot.slane %v3690, 1
        %v3874 = vsel %vm621, %v3872, %v3873
        %v3875 = vrot.slane %v3691, 1
        %v3876 = vrot.slane %v3692, 1
        %v3877 = vsel %vm621, %v3875, %v3876
        %v3878 = vrot.slane %v3693, 1
        %v3879 = vrot.slane %v3694, 1
        %v3880 = vsel %vm621, %v3878, %v3879
        %v3881 = vrot.slane %v3695, 1
        %v3882 = vrot.slane %v3696, 1
        %v3883 = vsel %vm621, %v3881, %v3882
        %v3884 = vrot.slane %v3697, 1
        %v3885 = vrot.slane %v3698, 1
        %v3886 = vsel %vm621, %v3884, %v3885
        %v3887 = vrot.slane %v3699, 1
        %v3888 = vrot.slane %v3700, 1
        %v3889 = vsel %vm621, %v3887, %v3888
        %v3898 = vrot.slane %v3685, 2
        %v3899 = vrot.slane %v3686, 2
        %v3900 = vsel %vm1287, %v3898, %v3899
        %v3901 = vrot.slane %v3687, 2
        %v3902 = vrot.slane %v3688, 2
        %v3903 = vsel %vm1287, %v3901, %v3902
        %v3904 = vrot.slane %v3689, 2
        %v3905 = vrot.slane %v3690, 2
        %v3906 = vsel %vm1287, %v3904, %v3905
        %v3907 = vrot.slane %v3691, 2
        %v3908 = vrot.slane %v3692, 2
        %v3909 = vsel %vm1287, %v3907, %v3908
        %v3910 = vrot.slane %v3693, 2
        %v3911 = vrot.slane %v3694, 2
        %v3912 = vsel %vm1287, %v3910, %v3911
        %v3913 = vrot.slane %v3695, 2
        %v3914 = vrot.slane %v3696, 2
        %v3915 = vsel %vm1287, %v3913, %v3914
        %v3916 = vrot.slane %v3697, 2
        %v3917 = vrot.slane %v3698, 2
        %v3918 = vsel %vm1287, %v3916, %v3917
        %v3919 = vrot.slane %v3699, 2
        %v3920 = vrot.slane %v3700, 2
        %v3921 = vsel %vm1287, %v3919, %v3920
        %v3932 = vrot.slane %v3701, 1
        %v3933 = vrot.slane %v3702, 1
        %v3934 = vsel %vm621, %v3932, %v3933
        %v3936 = vrot.slane %v3701, 2
        %v3937 = vrot.slane %v3702, 2
        %v3938 = vsel %vm1287, %v3936, %v3937
        %v3942 = vrot.slane %v3703, 1
        %v3943 = vrot.slane %v3704, 1
        %v3944 = vsel %vm621, %v3942, %v3943
        %v3946 = vrot.slane %v3703, 2
        %v3947 = vrot.slane %v3704, 2
        %v3948 = vsel %vm1287, %v3946, %v3947
        %3950 = vmatprep.subr.mxu0 0.0
        %3951 = vmatpush1.msra.mxu0 %v3705
        %3952 = vmatprep.subr.mxu0 0.0
        %3953 = vmatpush1.msra.mxu0 %v3706
        %3954 = vmatprep.subr.mxu0 0.0
        %3955 = vmatpush1.msra.mxu0 %v3707
        %3956 = vmatprep.subr.mxu0 0.0
        %3957 = vmatpush1.msra.mxu0 %v3708
        %3958 = vmatprep.subr.mxu0 0.0
        %3959 = vmatpush1.msra.mxu0 %v3709
        %3960 = vmatprep.subr.mxu0 0.0
        %3961 = vmatpush1.msra.mxu0 %v3710
        %3962 = vmatprep.subr.mxu0 0.0
        %3963 = vmatpush1.msra.mxu0 %v3711
        %3964 = vmatprep.subr.mxu0 0.0
        %3965 = vmatpush1.msra.mxu0 %v3712
        %3966 = vmatprep.subr.mxu0 0.0
        %3967 = vmatpush1.msra.mxu0 %v3713
        %3968 = vmatprep.subr.mxu0 0.0
        %3969 = vmatpush1.msra.mxu0 %v3714
        %3970 = vmatprep.subr.mxu0 0.0
        %3971 = vmatpush1.msra.mxu0 %v3715
        %3972 = vmatprep.subr.mxu0 0.0
        %3973 = vmatpush1.msra.mxu0 %v3716
        %3974 = vmatprep.subr.mxu0 0.0
        %3975 = vmatpush1.msra.mxu0 %v3717
        %3976 = vmatprep.subr.mxu0 0.0
        %3977 = vmatpush1.msra.mxu0 %v3718
        %3978 = vmatprep.subr.mxu0 0.0
        %3979 = vmatpush1.msra.mxu0 %v3719
        %3980 = vmatprep.subr.mxu0 0.0
        %3981 = vmatpush1.msra.mxu0 %v3720
        %3982 = vmatprep.subr.mxu0 0.0
        %3983 = vmatpush1.msra.mxu0 %v3721
        %3984 = vmatprep.subr.mxu0 0.0
        %3985 = vmatpush1.msra.mxu0 %v3722
        %3986 = vmatprep.subr.mxu0 0.0
        %3987 = vmatpush1.msra.mxu0 %v3723
        %3988 = vmatprep.subr.mxu0 0.0
        %3989 = vmatpush1.msra.mxu0 %v3724
        %3990 = vmatprep.subr.mxu0 0.0
        %3991 = vmatpush1.msra.mxu0 %v3725
        %3992 = vmatprep.subr.mxu0 0.0
        %3993 = vmatpush1.msra.mxu0 %v3726
        %3994 = vmatprep.subr.mxu0 0.0
        %3995 = vmatpush1.msra.mxu0 %v3727
        %3996 = vmatprep.subr.mxu0 0.0
        %3997 = vmatpush1.msra.mxu0 %v3728
        %3998 = vmatprep.subr.mxu0 0.0
        %3999 = vmatpush1.msra.mxu0 %v3729
        %4000 = vmatprep.subr.mxu0 0.0
        %4001 = vmatpush1.msra.mxu0 %v3730
        %4002 = vmatprep.subr.mxu0 0.0
        %4003 = vmatpush1.msra.mxu0 %v3731
        %4004 = vmatprep.subr.mxu0 0.0
        %4005 = vmatpush1.msra.mxu0 %v3732
        %4006 = vmatprep.subr.mxu0 0.0
        %4007 = vmatpush1.msra.mxu0 %v3733
        %4008 = vmatprep.subr.mxu0 0.0
        %4009 = vmatpush1.msra.mxu0 %v3734
        %4010 = vmatprep.subr.mxu0 0.0
        %4011 = vmatpush1.msra.mxu0 %v3735
        %4012 = vmatprep.subr.mxu0 0.0
        %4013 = vmatpush1.msra.mxu0 %v3736
        %4014 = vmatprep.mubr.f32.mxu0 %v3868
        %4015 = vmatmul.mubr.f32.gmra.mrb[0].mxu0 %v3685
        %v4016 = vpop.f32.mrb[0].mxu0
        %v4017 = vadd.f32 0.0, %v4016
        %v4018 = vpop.f32.mrb[0].mxu0
        %4019 = vmatprep.mubr.f32.mxu0 %v3871
        %4020 = vmatmul.mubr.f32.gmra.mrb[0].mxu0 %v3687
        %v4021 = vpop.f32.mrb[0].mxu0
        %v4022 = vadd.f32 0.0, %v4021
        %v4023 = vpop.f32.mrb[0].mxu0
        %4024 = vmatprep.mubr.f32.mxu0 %v3874
        %4025 = vmatmul.mubr.f32.gmra.mrb[0].mxu0 %v3689
        %v4026 = vpop.f32.mrb[0].mxu0
        %v4027 = vadd.f32 0.0, %v4026
        %v4028 = vpop.f32.mrb[0].mxu0
        %4029 = vmatprep.mubr.f32.mxu0 %v3877
        %4030 = vmatmul.mubr.f32.gmra.mrb[0].mxu0 %v3691
        %v4031 = vpop.f32.mrb[0].mxu0
        %v4032 = vadd.f32 0.0, %v4031
        %v4033 = vpop.f32.mrb[0].mxu0
        %4034 = vmatprep.mubr.f32.mxu0 %v3880
        %4035 = vmatmul.mubr.f32.gmra.mrb[0].mxu0 %v3693
        %v4036 = vpop.f32.mrb[0].mxu0
        %v4037 = vadd.f32 0.0, %v4036
        %v4038 = vpop.f32.mrb[0].mxu0
        %4039 = vmatprep.mubr.f32.mxu0 %v3883
        %4040 = vmatmul.mubr.f32.gmra.mrb[0].mxu0 %v3695
        %v4041 = vpop.f32.mrb[0].mxu0
        %v4042 = vadd.f32 0.0, %v4041
        %v4043 = vpop.f32.mrb[0].mxu0
        %4044 = vmatprep.mubr.f32.mxu0 %v3886
        %4045 = vmatmul.mubr.f32.gmra.mrb[0].mxu0 %v3697
        %v4046 = vpop.f32.mrb[0].mxu0
        %v4047 = vadd.f32 0.0, %v4046
        %v4048 = vpop.f32.mrb[0].mxu0
        %4049 = vmatprep.mubr.f32.mxu0 %v3889
        %4050 = vmatmul.mubr.f32.gmra.mrb[0].mxu0 %v3699
        %v4051 = vpop.f32.mrb[0].mxu0
        %v4052 = vadd.f32 0.0, %v4051
        %v4053 = vpop.f32.mrb[0].mxu0
        %4054 = vdwg.mxu0
        %4055 = vmatprep.subr.mxu0 0.0
        %4056 = vmatpush1.msra.mxu0 %v3737
        %4057 = vmatprep.subr.mxu0 0.0
        %4058 = vmatpush1.msra.mxu0 %v3738
        %4059 = vmatprep.subr.mxu0 0.0
        %4060 = vmatpush1.msra.mxu0 %v3739
        %4061 = vmatprep.subr.mxu0 0.0
        %4062 = vmatpush1.msra.mxu0 %v3740
        %4063 = vmatprep.subr.mxu0 0.0
        %4064 = vmatpush1.msra.mxu0 %v3741
        %4065 = vmatprep.subr.mxu0 0.0
        %4066 = vmatpush1.msra.mxu0 %v3742
        %4067 = vmatprep.subr.mxu0 0.0
        %4068 = vmatpush1.msra.mxu0 %v3743
        %4069 = vmatprep.subr.mxu0 0.0
        %4070 = vmatpush1.msra.mxu0 %v3744
        %4071 = vmatprep.subr.mxu0 0.0
        %4072 = vmatpush1.msra.mxu0 %v3745
        %4073 = vmatprep.subr.mxu0 0.0
        %4074 = vmatpush1.msra.mxu0 %v3746
        %4075 = vmatprep.subr.mxu0 0.0
        %4076 = vmatpush1.msra.mxu0 %v3747
        %4077 = vmatprep.subr.mxu0 0.0
        %4078 = vmatpush1.msra.mxu0 %v3748
        %4079 = vmatprep.subr.mxu0 0.0
        %4080 = vmatpush1.msra.mxu0 %v3749
        %4081 = vmatprep.subr.mxu0 0.0
        %4082 = vmatpush1.msra.mxu0 %v3750
        %4083 = vmatprep.subr.mxu0 0.0
        %4084 = vmatpush1.msra.mxu0 %v3751
        %4085 = vmatprep.subr.mxu0 0.0
        %4086 = vmatpush1.msra.mxu0 %v3752
        %4087 = vmatprep.subr.mxu0 0.0
        %4088 = vmatpush1.msra.mxu0 %v3753
        %4089 = vmatprep.subr.mxu0 0.0
        %4090 = vmatpush1.msra.mxu0 %v3754
        %4091 = vmatprep.subr.mxu0 0.0
        %4092 = vmatpush1.msra.mxu0 %v3755
        %4093 = vmatprep.subr.mxu0 0.0
        %4094 = vmatpush1.msra.mxu0 %v3756
        %4095 = vmatprep.subr.mxu0 0.0
        %4096 = vmatpush1.msra.mxu0 %v3757
        %4097 = vmatprep.subr.mxu0 0.0
        %4098 = vmatpush1.msra.mxu0 %v3758
        %4099 = vmatprep.subr.mxu0 0.0
        %4100 = vmatpush1.msra.mxu0 %v3759
        %4101 = vmatprep.subr.mxu0 0.0
        %4102 = vmatpush1.msra.mxu0 %v3760
        %4103 = vmatprep.subr.mxu0 0.0
        %4104 = vmatpush1.msra.mxu0 %v3761
        %4105 = vmatprep.subr.mxu0 0.0
        %4106 = vmatpush1.msra.mxu0 %v3762
        %4107 = vmatprep.subr.mxu0 0.0
        %4108 = vmatpush1.msra.mxu0 %v3763
        %4109 = vmatprep.subr.mxu0 0.0
        %4110 = vmatpush1.msra.mxu0 %v3764
        %4111 = vmatprep.subr.mxu0 0.0
        %4112 = vmatpush1.msra.mxu0 %v3765
        %4113 = vmatprep.subr.mxu0 0.0
        %4114 = vmatpush1.msra.mxu0 %v3766
        %4115 = vmatprep.subr.mxu0 0.0
        %4116 = vmatpush1.msra.mxu0 %v3767
        %4117 = vmatprep.subr.mxu0 0.0
        %4118 = vmatpush1.msra.mxu0 %v3768
        %4119 = vmatprep.mubr.f32.mxu0 %v3687
        %4120 = vmatmul.mubr.f32.gmra.mrb[0].mxu0 %v3900
        %v4121 = vpop.f32.mrb[0].mxu0
        %v4122 = vadd.f32 %v4017, %v4121
        %v4123 = vpop.f32.mrb[0].mxu0
        %4124 = vmatprep.mubr.f32.mxu0 %v3689
        %4125 = vmatmul.mubr.f32.gmra.mrb[0].mxu0 %v3903
        %v4126 = vpop.f32.mrb[0].mxu0
        %v4127 = vadd.f32 %v4022, %v4126
        %v4128 = vpop.f32.mrb[0].mxu0
        %4129 = vmatprep.mubr.f32.mxu0 %v3691
        %4130 = vmatmul.mubr.f32.gmra.mrb[0].mxu0 %v3906
        %v4131 = vpop.f32.mrb[0].mxu0
        %v4132 = vadd.f32 %v4027, %v4131
        %v4133 = vpop.f32.mrb[0].mxu0
        %4134 = vmatprep.mubr.f32.mxu0 %v3693
        %4135 = vmatmul.mubr.f32.gmra.mrb[0].mxu0 %v3909
        %v4136 = vpop.f32.mrb[0].mxu0
        %v4137 = vadd.f32 %v4032, %v4136
        %v4138 = vpop.f32.mrb[0].mxu0
        %4139 = vmatprep.mubr.f32.mxu0 %v3695
        %4140 = vmatmul.mubr.f32.gmra.mrb[0].mxu0 %v3912
        %v4141 = vpop.f32.mrb[0].mxu0
        %v4142 = vadd.f32 %v4037, %v4141
        %v4143 = vpop.f32.mrb[0].mxu0
        %4144 = vmatprep.mubr.f32.mxu0 %v3697
        %4145 = vmatmul.mubr.f32.gmra.mrb[0].mxu0 %v3915
        %v4146 = vpop.f32.mrb[0].mxu0
        %v4147 = vadd.f32 %v4042, %v4146
        %v4148 = vpop.f32.mrb[0].mxu0
        %4149 = vmatprep.mubr.f32.mxu0 %v3699
        %4150 = vmatmul.mubr.f32.gmra.mrb[0].mxu0 %v3918
        %v4151 = vpop.f32.mrb[0].mxu0
        %v4152 = vadd.f32 %v4047, %v4151
        %v4153 = vpop.f32.mrb[0].mxu0
        %4154 = vmatprep.mubr.f32.mxu0 %v3701
        %4155 = vmatmul.mubr.f32.gmra.mrb[0].mxu0 %v3921
        %v4156 = vpop.f32.mrb[0].mxu0
        %v4157 = vadd.f32 %v4052, %v4156
        %v4158 = vpop.f32.mrb[0].mxu0
        %4159 = vdwg.mxu0
        %4160 = vmatprep.subr.mxu0 0.0
        %4161 = vmatpush1.msra.mxu0 %v3769
        %4162 = vmatprep.subr.mxu0 0.0
        %4163 = vmatpush1.msra.mxu0 %v3770
        %4164 = vmatprep.subr.mxu0 0.0
        %4165 = vmatpush1.msra.mxu0 %v3771
        %4166 = vmatprep.subr.mxu0 0.0
        %4167 = vmatpush1.msra.mxu0 %v3772
        %4168 = vmatprep.subr.mxu0 0.0
        %4169 = vmatpush1.msra.mxu0 %v3773
        %4170 = vmatprep.subr.mxu0 0.0
        %4171 = vmatpush1.msra.mxu0 %v3774
        %4172 = vmatprep.subr.mxu0 0.0
        %4173 = vmatpush1.msra.mxu0 %v3775
        %4174 = vmatprep.subr.mxu0 0.0
        %4175 = vmatpush1.msra.mxu0 %v3776
        %4176 = vmatprep.subr.mxu0 0.0
        %4177 = vmatpush1.msra.mxu0 %v3777
        %4178 = vmatprep.subr.mxu0 0.0
        %4179 = vmatpush1.msra.mxu0 %v3778
        %4180 = vmatprep.subr.mxu0 0.0
        %4181 = vmatpush1.msra.mxu0 %v3779
        %4182 = vmatprep.subr.mxu0 0.0
        %4183 = vmatpush1.msra.mxu0 %v3780
        %4184 = vmatprep.subr.mxu0 0.0
        %4185 = vmatpush1.msra.mxu0 %v3781
        %4186 = vmatprep.subr.mxu0 0.0
        %4187 = vmatpush1.msra.mxu0 %v3782
        %4188 = vmatprep.subr.mxu0 0.0
        %4189 = vmatpush1.msra.mxu0 %v3783
        %4190 = vmatprep.subr.mxu0 0.0
        %4191 = vmatpush1.msra.mxu0 %v3784
        %4192 = vmatprep.subr.mxu0 0.0
        %4193 = vmatpush1.msra.mxu0 %v3785
        %4194 = vmatprep.subr.mxu0 0.0
        %4195 = vmatpush1.msra.mxu0 %v3786
        %4196 = vmatprep.subr.mxu0 0.0
        %4197 = vmatpush1.msra.mxu0 %v3787
        %4198 = vmatprep.subr.mxu0 0.0
        %4199 = vmatpush1.msra.mxu0 %v3788
        %4200 = vmatprep.subr.mxu0 0.0
        %4201 = vmatpush1.msra.mxu0 %v3789
        %4202 = vmatprep.subr.mxu0 0.0
        %4203 = vmatpush1.msra.mxu0 %v3790
        %4204 = vmatprep.subr.mxu0 0.0
        %4205 = vmatpush1.msra.mxu0 %v3791
        %4206 = vmatprep.subr.mxu0 0.0
        %4207 = vmatpush1.msra.mxu0 %v3792
        %4208 = vmatprep.subr.mxu0 0.0
        %4209 = vmatpush1.msra.mxu0 %v3793
        %4210 = vmatprep.subr.mxu0 0.0
        %4211 = vmatpush1.msra.mxu0 %v3794
        %4212 = vmatprep.subr.mxu0 0.0
        %4213 = vmatpush1.msra.mxu0 %v3795
        %4214 = vmatprep.subr.mxu0 0.0
        %4215 = vmatpush1.msra.mxu0 %v3796
        %4216 = vmatprep.subr.mxu0 0.0
        %4217 = vmatpush1.msra.mxu0 %v3797
        %4218 = vmatprep.subr.mxu0 0.0
        %4219 = vmatpush1.msra.mxu0 %v3798
        %4220 = vmatprep.subr.mxu0 0.0
        %4221 = vmatpush1.msra.mxu0 %v3799
        %4222 = vmatprep.subr.mxu0 0.0
        %4223 = vmatpush1.msra.mxu0 %v3800
        %4224 = vmatprep.mubr.f32.mxu0 %v3903
        %4225 = vmatmul.mubr.f32.gmra.mrb[0].mxu0 %v3871
        %v4226 = vpop.f32.mrb[0].mxu0
        %v4227 = vadd.f32 %v4122, %v4226
        %v4228 = vpop.f32.mrb[0].mxu0
        %4229 = vmatprep.mubr.f32.mxu0 %v3906
        %4230 = vmatmul.mubr.f32.gmra.mrb[0].mxu0 %v3874
        %v4231 = vpop.f32.mrb[0].mxu0
        %v4232 = vadd.f32 %v4127, %v4231
        %v4233 = vpop.f32.mrb[0].mxu0
        %4234 = vmatprep.mubr.f32.mxu0 %v3909
        %4235 = vmatmul.mubr.f32.gmra.mrb[0].mxu0 %v3877
        %v4236 = vpop.f32.mrb[0].mxu0
        %v4237 = vadd.f32 %v4132, %v4236
        %v4238 = vpop.f32.mrb[0].mxu0
        %4239 = vmatprep.mubr.f32.mxu0 %v3912
        %4240 = vmatmul.mubr.f32.gmra.mrb[0].mxu0 %v3880
        %v4241 = vpop.f32.mrb[0].mxu0
        %v4242 = vadd.f32 %v4137, %v4241
        %v4243 = vpop.f32.mrb[0].mxu0
        %4244 = vmatprep.mubr.f32.mxu0 %v3915
        %4245 = vmatmul.mubr.f32.gmra.mrb[0].mxu0 %v3883
        %v4246 = vpop.f32.mrb[0].mxu0
        %v4247 = vadd.f32 %v4142, %v4246
        %v4248 = vpop.f32.mrb[0].mxu0
        %4249 = vmatprep.mubr.f32.mxu0 %v3918
        %4250 = vmatmul.mubr.f32.gmra.mrb[0].mxu0 %v3886
        %v4251 = vpop.f32.mrb[0].mxu0
        %v4252 = vadd.f32 %v4147, %v4251
        %v4253 = vpop.f32.mrb[0].mxu0
        %4254 = vmatprep.mubr.f32.mxu0 %v3921
        %4255 = vmatmul.mubr.f32.gmra.mrb[0].mxu0 %v3889
        %v4256 = vpop.f32.mrb[0].mxu0
        %v4257 = vadd.f32 %v4152, %v4256
        %v4258 = vpop.f32.mrb[0].mxu0
        %4259 = vmatprep.mubr.f32.mxu0 %v3938
        %4260 = vmatmul.mubr.f32.gmra.mrb[0].mxu0 %v3934
        %v4261 = vpop.f32.mrb[0].mxu0
        %v4262 = vadd.f32 %v4157, %v4261
        %v4263 = vpop.f32.mrb[0].mxu0
        %4264 = vdwg.mxu0
        %4265 = vmatprep.subr.mxu0 0.0
        %4266 = vmatpush1.msra.mxu0 %v3801
        %4267 = vmatprep.subr.mxu0 0.0
        %4268 = vmatpush1.msra.mxu0 %v3802
        %4269 = vmatprep.subr.mxu0 0.0
        %4270 = vmatpush1.msra.mxu0 %v3803
        %4271 = vmatprep.subr.mxu0 0.0
        %4272 = vmatpush1.msra.mxu0 %v3804
        %4273 = vmatprep.subr.mxu0 0.0
        %4274 = vmatpush1.msra.mxu0 %v3805
        %4275 = vmatprep.subr.mxu0 0.0
        %4276 = vmatpush1.msra.mxu0 %v3806
        %4277 = vmatprep.subr.mxu0 0.0
        %4278 = vmatpush1.msra.mxu0 %v3807
        %4279 = vmatprep.subr.mxu0 0.0
        %4280 = vmatpush1.msra.mxu0 %v3808
        %4281 = vmatprep.subr.mxu0 0.0
        %4282 = vmatpush1.msra.mxu0 %v3809
        %4283 = vmatprep.subr.mxu0 0.0
        %4284 = vmatpush1.msra.mxu0 %v3810
        %4285 = vmatprep.subr.mxu0 0.0
        %4286 = vmatpush1.msra.mxu0 %v3811
        %4287 = vmatprep.subr.mxu0 0.0
        %4288 = vmatpush1.msra.mxu0 %v3812
        %4289 = vmatprep.subr.mxu0 0.0
        %4290 = vmatpush1.msra.mxu0 %v3813
        %4291 = vmatprep.subr.mxu0 0.0
        %4292 = vmatpush1.msra.mxu0 %v3814
        %4293 = vmatprep.subr.mxu0 0.0
        %4294 = vmatpush1.msra.mxu0 %v3815
        %4295 = vmatprep.subr.mxu0 0.0
        %4296 = vmatpush1.msra.mxu0 %v3816
        %4297 = vmatprep.subr.mxu0 0.0
        %4298 = vmatpush1.msra.mxu0 %v3817
        %4299 = vmatprep.subr.mxu0 0.0
        %4300 = vmatpush1.msra.mxu0 %v3818
        %4301 = vmatprep.subr.mxu0 0.0
        %4302 = vmatpush1.msra.mxu0 %v3819
        %4303 = vmatprep.subr.mxu0 0.0
        %4304 = vmatpush1.msra.mxu0 %v3820
        %4305 = vmatprep.subr.mxu0 0.0
        %4306 = vmatpush1.msra.mxu0 %v3821
        %4307 = vmatprep.subr.mxu0 0.0
        %4308 = vmatpush1.msra.mxu0 %v3822
        %4309 = vmatprep.subr.mxu0 0.0
        %4310 = vmatpush1.msra.mxu0 %v3823
        %4311 = vmatprep.subr.mxu0 0.0
        %4312 = vmatpush1.msra.mxu0 %v3824
        %4313 = vmatprep.subr.mxu0 0.0
        %4314 = vmatpush1.msra.mxu0 %v3825
        %4315 = vmatprep.subr.mxu0 0.0
        %4316 = vmatpush1.msra.mxu0 %v3826
        %4317 = vmatprep.subr.mxu0 0.0
        %4318 = vmatpush1.msra.mxu0 %v3827
        %4319 = vmatprep.subr.mxu0 0.0
        %4320 = vmatpush1.msra.mxu0 %v3828
        %4321 = vmatprep.subr.mxu0 0.0
        %4322 = vmatpush1.msra.mxu0 %v3829
        %4323 = vmatprep.subr.mxu0 0.0
        %4324 = vmatpush1.msra.mxu0 %v3830
        %4325 = vmatprep.subr.mxu0 0.0
        %4326 = vmatpush1.msra.mxu0 %v3831
        %4327 = vmatprep.subr.mxu0 0.0
        %4328 = vmatpush1.msra.mxu0 %v3832
        %4329 = vmatprep.mubr.f32.mxu0 %v3874
        %4330 = vmatmul.mubr.f32.gmra.mrb[0].mxu0 %v3689
        %v4331 = vpop.f32.mrb[0].mxu0
        %v4332 = vadd.f32 %v4227, %v4331
        %v4333 = vpop.f32.mrb[0].mxu0
        %4334 = vmatprep.mubr.f32.mxu0 %v3877
        %4335 = vmatmul.mubr.f32.gmra.mrb[0].mxu0 %v3691
        %v4336 = vpop.f32.mrb[0].mxu0
        %v4337 = vadd.f32 %v4232, %v4336
        %v4338 = vpop.f32.mrb[0].mxu0
        %4339 = vmatprep.mubr.f32.mxu0 %v3880
        %4340 = vmatmul.mubr.f32.gmra.mrb[0].mxu0 %v3693
        %v4341 = vpop.f32.mrb[0].mxu0
        %v4342 = vadd.f32 %v4237, %v4341
        %v4343 = vpop.f32.mrb[0].mxu0
        %4344 = vmatprep.mubr.f32.mxu0 %v3883
        %4345 = vmatmul.mubr.f32.gmra.mrb[0].mxu0 %v3695
        %v4346 = vpop.f32.mrb[0].mxu0
        %v4347 = vadd.f32 %v4242, %v4346
        %v4348 = vpop.f32.mrb[0].mxu0
        %4349 = vmatprep.mubr.f32.mxu0 %v3886
        %4350 = vmatmul.mubr.f32.gmra.mrb[0].mxu0 %v3697
        %v4351 = vpop.f32.mrb[0].mxu0
        %v4352 = vadd.f32 %v4247, %v4351
        %v4353 = vpop.f32.mrb[0].mxu0
        %4354 = vmatprep.mubr.f32.mxu0 %v3889
        %4355 = vmatmul.mubr.f32.gmra.mrb[0].mxu0 %v3699
        %v4356 = vpop.f32.mrb[0].mxu0
        %v4357 = vadd.f32 %v4252, %v4356
        %v4358 = vpop.f32.mrb[0].mxu0
        %4359 = vmatprep.mubr.f32.mxu0 %v3934
        %4360 = vmatmul.mubr.f32.gmra.mrb[0].mxu0 %v3701
        %v4361 = vpop.f32.mrb[0].mxu0
        %v4362 = vadd.f32 %v4257, %v4361
        %v4363 = vpop.f32.mrb[0].mxu0
        %4364 = vmatprep.mubr.f32.mxu0 %v3944
        %4365 = vmatmul.mubr.f32.gmra.mrb[0].mxu0 %v3703
        %v4366 = vpop.f32.mrb[0].mxu0
        %v4367 = vadd.f32 %v4262, %v4366
        %v4368 = vpop.f32.mrb[0].mxu0
        %4369 = vdwg.mxu0
        %4370 = vmatprep.subr.mxu0 0.0
        %4371 = vmatpush1.msra.mxu0 %v3833
        %4372 = vmatprep.subr.mxu0 0.0
        %4373 = vmatpush1.msra.mxu0 %v3834
        %4374 = vmatprep.subr.mxu0 0.0
        %4375 = vmatpush1.msra.mxu0 %v3835
        %4376 = vmatprep.subr.mxu0 0.0
        %4377 = vmatpush1.msra.mxu0 %v3836
        %4378 = vmatprep.subr.mxu0 0.0
        %4379 = vmatpush1.msra.mxu0 %v3837
        %4380 = vmatprep.subr.mxu0 0.0
        %4381 = vmatpush1.msra.mxu0 %v3838
        %4382 = vmatprep.subr.mxu0 0.0
        %4383 = vmatpush1.msra.mxu0 %v3839
        %4384 = vmatprep.subr.mxu0 0.0
        %4385 = vmatpush1.msra.mxu0 %v3840
        %4386 = vmatprep.subr.mxu0 0.0
        %4387 = vmatpush1.msra.mxu0 %v3841
        %4388 = vmatprep.subr.mxu0 0.0
        %4389 = vmatpush1.msra.mxu0 %v3842
        %4390 = vmatprep.subr.mxu0 0.0
        %4391 = vmatpush1.msra.mxu0 %v3843
        %4392 = vmatprep.subr.mxu0 0.0
        %4393 = vmatpush1.msra.mxu0 %v3844
        %4394 = vmatprep.subr.mxu0 0.0
        %4395 = vmatpush1.msra.mxu0 %v3845
        %4396 = vmatprep.subr.mxu0 0.0
        %4397 = vmatpush1.msra.mxu0 %v3846
        %4398 = vmatprep.subr.mxu0 0.0
        %4399 = vmatpush1.msra.mxu0 %v3847
        %4400 = vmatprep.subr.mxu0 0.0
        %4401 = vmatpush1.msra.mxu0 %v3848
        %4402 = vmatprep.subr.mxu0 0.0
        %4403 = vmatpush1.msra.mxu0 0.0
        %4404 = vmatprep.subr.mxu0 0.0
        %4405 = vmatpush1.msra.mxu0 0.0
        %4406 = vmatprep.subr.mxu0 0.0
        %4407 = vmatpush1.msra.mxu0 0.0
        %4408 = vmatprep.subr.mxu0 0.0
        %4409 = vmatpush1.msra.mxu0 0.0
        %4410 = vmatprep.subr.mxu0 0.0
        %4411 = vmatpush1.msra.mxu0 0.0
        %4412 = vmatprep.subr.mxu0 0.0
        %4413 = vmatpush1.msra.mxu0 0.0
        %4414 = vmatprep.subr.mxu0 0.0
        %4415 = vmatpush1.msra.mxu0 0.0
        %4416 = vmatprep.subr.mxu0 0.0
        %4417 = vmatpush1.msra.mxu0 0.0
        %4418 = vmatprep.subr.mxu0 0.0
        %4419 = vmatpush1.msra.mxu0 0.0
        %4420 = vmatprep.subr.mxu0 0.0
        %4421 = vmatpush1.msra.mxu0 0.0
        %4422 = vmatprep.subr.mxu0 0.0
        %4423 = vmatpush1.msra.mxu0 0.0
        %4424 = vmatprep.subr.mxu0 0.0
        %4425 = vmatpush1.msra.mxu0 0.0
        %4426 = vmatprep.subr.mxu0 0.0
        %4427 = vmatpush1.msra.mxu0 0.0
        %4428 = vmatprep.subr.mxu0 0.0
        %4429 = vmatpush1.msra.mxu0 0.0
        %4430 = vmatprep.subr.mxu0 0.0
        %4431 = vmatpush1.msra.mxu0 0.0
        %4432 = vmatprep.subr.mxu0 0.0
        %4433 = vmatpush1.msra.mxu0 0.0
        %4434 = vmatprep.mubr.f32.mxu0 0.0
        %4435 = vmatmul.mubr.f32.gmra.mrb[0].mxu0 %v3906
        %v4436 = vpop.f32.mrb[0].mxu0
        %v4437 = vadd.f32 %v4332, %v4436
        %v4438 = vpop.f32.mrb[0].mxu0
        %4439 = vmatprep.mubr.f32.mxu0 0.0
        %4440 = vmatmul.mubr.f32.gmra.mrb[0].mxu0 %v3909
        %v4441 = vpop.f32.mrb[0].mxu0
        %v4442 = vadd.f32 %v4337, %v4441
        %v4443 = vpop.f32.mrb[0].mxu0
        %4444 = vmatprep.mubr.f32.mxu0 0.0
        %4445 = vmatmul.mubr.f32.gmra.mrb[0].mxu0 %v3912
        %v4446 = vpop.f32.mrb[0].mxu0
        %v4447 = vadd.f32 %v4342, %v4446
        %v4448 = vpop.f32.mrb[0].mxu0
        %4449 = vmatprep.mubr.f32.mxu0 0.0
        %4450 = vmatmul.mubr.f32.gmra.mrb[0].mxu0 %v3915
        %v4451 = vpop.f32.mrb[0].mxu0
        %v4452 = vadd.f32 %v4347, %v4451
        %v4453 = vpop.f32.mrb[0].mxu0
        %4454 = vmatprep.mubr.f32.mxu0 0.0
        %4455 = vmatmul.mubr.f32.gmra.mrb[0].mxu0 %v3918
        %v4456 = vpop.f32.mrb[0].mxu0
        %v4457 = vadd.f32 %v4352, %v4456
        %v4458 = vpop.f32.mrb[0].mxu0
        %4459 = vmatprep.mubr.f32.mxu0 0.0
        %4460 = vmatmul.mubr.f32.gmra.mrb[0].mxu0 %v3921
        %v4461 = vpop.f32.mrb[0].mxu0
        %v4462 = vadd.f32 %v4357, %v4461
        %v4463 = vpop.f32.mrb[0].mxu0
        %4464 = vmatprep.mubr.f32.mxu0 0.0
        %4465 = vmatmul.mubr.f32.gmra.mrb[0].mxu0 %v3938
        %v4466 = vpop.f32.mrb[0].mxu0
        %v4467 = vadd.f32 %v4362, %v4466
        %v4468 = vpop.f32.mrb[0].mxu0
        %4469 = vmatprep.mubr.f32.mxu0 0.0
        %4470 = vmatmul.mubr.f32.gmra.mrb[0].mxu0 %v3948
        %v4471 = vpop.f32.mrb[0].mxu0
        %v4472 = vadd.f32 %v4367, %v4471
        %v4473 = vpop.f32.mrb[0].mxu0
        %4474 = vdwg.mxu0
        %v4475 = vlaneseq
        %v4476 = vshrl.u32 %v4475, 7
        %v4477 = vsub.s32 0, %v4476
        %v4478 = vrot.slane %v3849, %v4477
        %v4479 = vmul.f32 %v4437, %v4478
        %v4480 = vmul.f32 %v4442, %v4478
        %v4481 = vmul.f32 %v4447, %v4478
        %v4482 = vmul.f32 %v4452, %v4478
        %v4483 = vmul.f32 %v4457, %v4478
        %v4484 = vmul.f32 %v4462, %v4478
        %v4485 = vmul.f32 %v4467, %v4478
        %v4486 = vmul.f32 %v4472, %v4478
        %v4487 = vlaneseq
        %v4488 = vshrl.u32 %v4487, 7
        %v4489 = vsub.s32 1, %v4488
        %v4490 = vrot.slane %v3849, %v4489
        %v4491 = vadd.f32 %v4479, %v4490
        %v4492 = vadd.f32 %v4480, %v4490
        %v4493 = vadd.f32 %v4481, %v4490
        %v4494 = vadd.f32 %v4482, %v4490
        %v4495 = vadd.f32 %v4483, %v4490
        %v4496 = vadd.f32 %v4484, %v4490
        %v4497 = vadd.f32 %v4485, %v4490
        %v4498 = vadd.f32 %v4486, %v4490
        %v4499 = vmax.f32 %v4491, 0.0
        %v4500 = vmax.f32 %v4492, 0.0
        %v4501 = vmax.f32 %v4493, 0.0
        %v4502 = vmax.f32 %v4494, 0.0
        %v4503 = vmax.f32 %v4495, 0.0
        %v4504 = vmax.f32 %v4496, 0.0
        %v4505 = vmax.f32 %v4497, 0.0
        %v4506 = vmax.f32 %v4498, 0.0
        %4507 = vst [vmem:[#allocation4] sm:$0xff] 0.0
        %4508 = vst [vmem:[#allocation4 + $0x8] sm:$0x3] 0.0
        %4509 = vst [vmem:[#allocation4 + $0x10] sm:$0xff] 0.0
        %4510 = vst [vmem:[#allocation4 + $0x18] sm:$0x3] 0.0
        %4511 = vst [vmem:[#allocation4 + $0x20] sm:$0xff] 0.0
        %4512 = vst [vmem:[#allocation4 + $0x28] sm:$0x3] 0.0
        %4513 = vst [vmem:[#allocation4 + $0x30] sm:$0xff] 0.0
        %4514 = vst [vmem:[#allocation4 + $0x38] sm:$0x3] 0.0
        %4515 = vst [vmem:[#allocation4 + $0x40] sm:$0xff] 0.0
        %4516 = vst [vmem:[#allocation4 + $0x48] sm:$0x3] 0.0
        %4517 = vst [vmem:[#allocation4 + $0x50] sm:$0xff] 0.0
        %4518 = vst [vmem:[#allocation4 + $0x58] sm:$0x3] 0.0
        %4519 = vst [vmem:[#allocation4 + $0x60] sm:$0xff] 0.0
        %4520 = vst [vmem:[#allocation4 + $0x68] sm:$0x3] 0.0
        %4521 = vst [vmem:[#allocation4 + $0x70] sm:$0xff] 0.0
        %4522 = vst [vmem:[#allocation4 + $0x78] sm:$0x3] 0.0
        %4523 = vst [vmem:[#allocation4 + $0x80] sm:$0xff] 0.0
        %4524 = vst [vmem:[#allocation4 + $0x88] sm:$0x3] 0.0
        %4525 = vst [vmem:[#allocation4 + $0x90] sm:$0xff] 0.0
        %4526 = vst [vmem:[#allocation4 + $0x98] sm:$0x3] 0.0
        %s4527 = scalar_lea.vmem [#allocation4], 16
        %4528 = vst [vmem:[%s4527 + $0x1] sm:$0xff] %v4499
        %4529 = vst [vmem:[%s4527 + $0x11] sm:$0xff] %v4500
        %4530 = vst [vmem:[%s4527 + $0x21] sm:$0xff] %v4501
        %4531 = vst [vmem:[%s4527 + $0x31] sm:$0xff] %v4502
        %4532 = vst [vmem:[%s4527 + $0x41] sm:$0xff] %v4503
        %4533 = vst [vmem:[%s4527 + $0x51] sm:$0xff] %v4504
        %4534 = vst [vmem:[%s4527 + $0x61] sm:$0xff] %v4505
        %4535 = vst [vmem:[%s4527 + $0x71] sm:$0xff] %v4506
        %v4536 = vld [vmem:[#allocation4] sm:$0xff]
        %v4537 = vld [vmem:[#allocation4 + $0x8] sm:$0x3]
        %v4538 = vld [vmem:[#allocation4 + $0x10] sm:$0xff]
        %v4539 = vld [vmem:[#allocation4 + $0x18] sm:$0x3]
        %v4540 = vld [vmem:[#allocation4 + $0x20] sm:$0xff]
        %v4541 = vld [vmem:[#allocation4 + $0x28] sm:$0x3]
        %v4542 = vld [vmem:[#allocation4 + $0x30] sm:$0xff]
        %v4543 = vld [vmem:[#allocation4 + $0x38] sm:$0x3]
        %v4544 = vld [vmem:[#allocation4 + $0x40] sm:$0xff]
        %v4545 = vld [vmem:[#allocation4 + $0x48] sm:$0x3]
        %v4546 = vld [vmem:[#allocation4 + $0x50] sm:$0xff]
        %v4547 = vld [vmem:[#allocation4 + $0x58] sm:$0x3]
        %v4548 = vld [vmem:[#allocation4 + $0x60] sm:$0xff]
        %v4549 = vld [vmem:[#allocation4 + $0x68] sm:$0x3]
        %v4550 = vld [vmem:[#allocation4 + $0x70] sm:$0xff]
        %v4551 = vld [vmem:[#allocation4 + $0x78] sm:$0x3]
        %v4552 = vld [vmem:[#allocation4 + $0x80] sm:$0xff]
        %v4553 = vld [vmem:[#allocation4 + $0x88] sm:$0x3]
        %v4554 = vld [vmem:[#allocation4 + $0x90] sm:$0xff]
        %v4555 = vld [vmem:[#allocation4 + $0x98] sm:$0x3]
        %v4556 = vld [vmem:[#allocation7] sm:$0xff]
        %v4557 = vld [vmem:[#allocation7 + $0x8] sm:$0xff]
        %v4558 = vld [vmem:[#allocation7 + $0x10] sm:$0xff]
        %v4559 = vld [vmem:[#allocation7 + $0x18] sm:$0xff]
        %v4560 = vld [vmem:[#allocation7 + $0x20] sm:$0xff]
        %v4561 = vld [vmem:[#allocation7 + $0x28] sm:$0xff]
        %v4562 = vld [vmem:[#allocation7 + $0x30] sm:$0xff]
        %v4563 = vld [vmem:[#allocation7 + $0x38] sm:$0xff]
        %v4564 = vld [vmem:[#allocation7 + $0x40] sm:$0xff]
        %v4565 = vld [vmem:[#allocation7 + $0x48] sm:$0xff]
        %v4566 = vld [vmem:[#allocation7 + $0x50] sm:$0xff]
        %v4567 = vld [vmem:[#allocation7 + $0x58] sm:$0xff]
        %v4568 = vld [vmem:[#allocation7 + $0x60] sm:$0xff]
        %v4569 = vld [vmem:[#allocation7 + $0x68] sm:$0xff]
        %v4570 = vld [vmem:[#allocation7 + $0x70] sm:$0xff]
        %v4571 = vld [vmem:[#allocation7 + $0x78] sm:$0xff]
        %v4572 = vld [vmem:[#allocation7 + $0x80] sm:$0xff]
        %v4573 = vld [vmem:[#allocation7 + $0x88] sm:$0xff]
        %v4574 = vld [vmem:[#allocation7 + $0x90] sm:$0xff]
        %v4575 = vld [vmem:[#allocation7 + $0x98] sm:$0xff]
        %v4576 = vld [vmem:[#allocation7 + $0xa0] sm:$0xff]
        %v4577 = vld [vmem:[#allocation7 + $0xa8] sm:$0xff]
        %v4578 = vld [vmem:[#allocation7 + $0xb0] sm:$0xff]
        %v4579 = vld [vmem:[#allocation7 + $0xb8] sm:$0xff]
        %v4580 = vld [vmem:[#allocation7 + $0xc0] sm:$0xff]
        %v4581 = vld [vmem:[#allocation7 + $0xc8] sm:$0xff]
        %v4582 = vld [vmem:[#allocation7 + $0xd0] sm:$0xff]
        %v4583 = vld [vmem:[#allocation7 + $0xd8] sm:$0xff]
        %v4584 = vld [vmem:[#allocation7 + $0xe0] sm:$0xff]
        %v4585 = vld [vmem:[#allocation7 + $0xe8] sm:$0xff]
        %v4586 = vld [vmem:[#allocation7 + $0xf0] sm:$0xff]
        %v4587 = vld [vmem:[#allocation7 + $0xf8] sm:$0xff]
        %v4588 = vld [vmem:[#allocation7 + $0x100] sm:$0xff]
        %v4589 = vld [vmem:[#allocation7 + $0x108] sm:$0xff]
        %v4590 = vld [vmem:[#allocation7 + $0x110] sm:$0xff]
        %v4591 = vld [vmem:[#allocation7 + $0x118] sm:$0xff]
        %v4592 = vld [vmem:[#allocation7 + $0x120] sm:$0xff]
        %v4593 = vld [vmem:[#allocation7 + $0x128] sm:$0xff]
        %v4594 = vld [vmem:[#allocation7 + $0x130] sm:$0xff]
        %v4595 = vld [vmem:[#allocation7 + $0x138] sm:$0xff]
        %v4596 = vld [vmem:[#allocation7 + $0x140] sm:$0xff]
        %v4597 = vld [vmem:[#allocation7 + $0x148] sm:$0xff]
        %v4598 = vld [vmem:[#allocation7 + $0x150] sm:$0xff]
        %v4599 = vld [vmem:[#allocation7 + $0x158] sm:$0xff]
        %v4600 = vld [vmem:[#allocation7 + $0x160] sm:$0xff]
        %v4601 = vld [vmem:[#allocation7 + $0x168] sm:$0xff]
        %v4602 = vld [vmem:[#allocation7 + $0x170] sm:$0xff]
        %v4603 = vld [vmem:[#allocation7 + $0x178] sm:$0xff]
        %v4604 = vld [vmem:[#allocation7 + $0x180] sm:$0xff]
        %v4605 = vld [vmem:[#allocation7 + $0x188] sm:$0xff]
        %v4606 = vld [vmem:[#allocation7 + $0x190] sm:$0xff]
        %v4607 = vld [vmem:[#allocation7 + $0x198] sm:$0xff]
        %v4608 = vld [vmem:[#allocation7 + $0x1a0] sm:$0xff]
        %v4609 = vld [vmem:[#allocation7 + $0x1a8] sm:$0xff]
        %v4610 = vld [vmem:[#allocation7 + $0x1b0] sm:$0xff]
        %v4611 = vld [vmem:[#allocation7 + $0x1b8] sm:$0xff]
        %v4612 = vld [vmem:[#allocation7 + $0x1c0] sm:$0xff]
        %v4613 = vld [vmem:[#allocation7 + $0x1c8] sm:$0xff]
        %v4614 = vld [vmem:[#allocation7 + $0x1d0] sm:$0xff]
        %v4615 = vld [vmem:[#allocation7 + $0x1d8] sm:$0xff]
        %v4616 = vld [vmem:[#allocation7 + $0x1e0] sm:$0xff]
        %v4617 = vld [vmem:[#allocation7 + $0x1e8] sm:$0xff]
        %v4618 = vld [vmem:[#allocation7 + $0x1f0] sm:$0xff]
        %v4619 = vld [vmem:[#allocation7 + $0x1f8] sm:$0xff]
        %v4620 = vld [vmem:[#allocation7 + $0x200] sm:$0xff]
        %v4621 = vld [vmem:[#allocation7 + $0x208] sm:$0xff]
        %v4622 = vld [vmem:[#allocation7 + $0x210] sm:$0xff]
        %v4623 = vld [vmem:[#allocation7 + $0x218] sm:$0xff]
        %v4624 = vld [vmem:[#allocation7 + $0x220] sm:$0xff]
        %v4625 = vld [vmem:[#allocation7 + $0x228] sm:$0xff]
        %v4626 = vld [vmem:[#allocation7 + $0x230] sm:$0xff]
        %v4627 = vld [vmem:[#allocation7 + $0x238] sm:$0xff]
        %v4628 = vld [vmem:[#allocation7 + $0x240] sm:$0xff]
        %v4629 = vld [vmem:[#allocation7 + $0x248] sm:$0xff]
        %v4630 = vld [vmem:[#allocation7 + $0x250] sm:$0xff]
        %v4631 = vld [vmem:[#allocation7 + $0x258] sm:$0xff]
        %v4632 = vld [vmem:[#allocation7 + $0x260] sm:$0xff]
        %v4633 = vld [vmem:[#allocation7 + $0x268] sm:$0xff]
        %v4634 = vld [vmem:[#allocation7 + $0x270] sm:$0xff]
        %v4635 = vld [vmem:[#allocation7 + $0x278] sm:$0xff]
        %v4636 = vld [vmem:[#allocation7 + $0x280] sm:$0xff]
        %v4637 = vld [vmem:[#allocation7 + $0x288] sm:$0xff]
        %v4638 = vld [vmem:[#allocation7 + $0x290] sm:$0xff]
        %v4639 = vld [vmem:[#allocation7 + $0x298] sm:$0xff]
        %v4640 = vld [vmem:[#allocation7 + $0x2a0] sm:$0xff]
        %v4641 = vld [vmem:[#allocation7 + $0x2a8] sm:$0xff]
        %v4642 = vld [vmem:[#allocation7 + $0x2b0] sm:$0xff]
        %v4643 = vld [vmem:[#allocation7 + $0x2b8] sm:$0xff]
        %v4644 = vld [vmem:[#allocation7 + $0x2c0] sm:$0xff]
        %v4645 = vld [vmem:[#allocation7 + $0x2c8] sm:$0xff]
        %v4646 = vld [vmem:[#allocation7 + $0x2d0] sm:$0xff]
        %v4647 = vld [vmem:[#allocation7 + $0x2d8] sm:$0xff]
        %v4648 = vld [vmem:[#allocation7 + $0x2e0] sm:$0xff]
        %v4649 = vld [vmem:[#allocation7 + $0x2e8] sm:$0xff]
        %v4650 = vld [vmem:[#allocation7 + $0x2f0] sm:$0xff]
        %v4651 = vld [vmem:[#allocation7 + $0x2f8] sm:$0xff]
        %v4652 = vld [vmem:[#allocation7 + $0x300] sm:$0xff]
        %v4653 = vld [vmem:[#allocation7 + $0x308] sm:$0xff]
        %v4654 = vld [vmem:[#allocation7 + $0x310] sm:$0xff]
        %v4655 = vld [vmem:[#allocation7 + $0x318] sm:$0xff]
        %v4656 = vld [vmem:[#allocation7 + $0x320] sm:$0xff]
        %v4657 = vld [vmem:[#allocation7 + $0x328] sm:$0xff]
        %v4658 = vld [vmem:[#allocation7 + $0x330] sm:$0xff]
        %v4659 = vld [vmem:[#allocation7 + $0x338] sm:$0xff]
        %v4660 = vld [vmem:[#allocation7 + $0x340] sm:$0xff]
        %v4661 = vld [vmem:[#allocation7 + $0x348] sm:$0xff]
        %v4662 = vld [vmem:[#allocation7 + $0x350] sm:$0xff]
        %v4663 = vld [vmem:[#allocation7 + $0x358] sm:$0xff]
        %v4664 = vld [vmem:[#allocation7 + $0x360] sm:$0xff]
        %v4665 = vld [vmem:[#allocation7 + $0x368] sm:$0xff]
        %v4666 = vld [vmem:[#allocation7 + $0x370] sm:$0xff]
        %v4667 = vld [vmem:[#allocation7 + $0x378] sm:$0xff]
        %v4668 = vld [vmem:[#allocation7 + $0x380] sm:$0xff]
        %v4669 = vld [vmem:[#allocation7 + $0x388] sm:$0xff]
        %v4670 = vld [vmem:[#allocation7 + $0x390] sm:$0xff]
        %v4671 = vld [vmem:[#allocation7 + $0x398] sm:$0xff]
        %v4672 = vld [vmem:[#allocation7 + $0x3a0] sm:$0xff]
        %v4673 = vld [vmem:[#allocation7 + $0x3a8] sm:$0xff]
        %v4674 = vld [vmem:[#allocation7 + $0x3b0] sm:$0xff]
        %v4675 = vld [vmem:[#allocation7 + $0x3b8] sm:$0xff]
        %v4676 = vld [vmem:[#allocation7 + $0x3c0] sm:$0xff]
        %v4677 = vld [vmem:[#allocation7 + $0x3c8] sm:$0xff]
        %v4678 = vld [vmem:[#allocation7 + $0x3d0] sm:$0xff]
        %v4679 = vld [vmem:[#allocation7 + $0x3d8] sm:$0xff]
        %v4680 = vld [vmem:[#allocation7 + $0x3e0] sm:$0xff]
        %v4681 = vld [vmem:[#allocation7 + $0x3e8] sm:$0xff]
        %v4682 = vld [vmem:[#allocation7 + $0x3f0] sm:$0xff]
        %v4683 = vld [vmem:[#allocation7 + $0x3f8] sm:$0xff]
        %v4684 = vld [vmem:[#allocation7 + $0x400] sm:$0xff]
        %v4685 = vld [vmem:[#allocation7 + $0x408] sm:$0xff]
        %v4686 = vld [vmem:[#allocation7 + $0x410] sm:$0xff]
        %v4687 = vld [vmem:[#allocation7 + $0x418] sm:$0xff]
        %v4688 = vld [vmem:[#allocation7 + $0x420] sm:$0xff]
        %v4689 = vld [vmem:[#allocation7 + $0x428] sm:$0xff]
        %v4690 = vld [vmem:[#allocation7 + $0x430] sm:$0xff]
        %v4691 = vld [vmem:[#allocation7 + $0x438] sm:$0xff]
        %v4692 = vld [vmem:[#allocation7 + $0x440] sm:$0xff]
        %v4693 = vld [vmem:[#allocation7 + $0x448] sm:$0xff]
        %v4694 = vld [vmem:[#allocation7 + $0x450] sm:$0xff]
        %v4695 = vld [vmem:[#allocation7 + $0x458] sm:$0xff]
        %v4696 = vld [vmem:[#allocation7 + $0x460] sm:$0xff]
        %v4697 = vld [vmem:[#allocation7 + $0x468] sm:$0xff]
        %v4698 = vld [vmem:[#allocation7 + $0x470] sm:$0xff]
        %v4699 = vld [vmem:[#allocation7 + $0x478] sm:$0xff]
        %v4700 = vld [vmem:[%s7] sm:$0x3]
        %v4717 = vrot.slane %v4536, 1
        %v4718 = vrot.slane %v4537, 1
        %v4719 = vsel %vm621, %v4717, %v4718
        %v4720 = vrot.slane %v4538, 1
        %v4721 = vrot.slane %v4539, 1
        %v4722 = vsel %vm621, %v4720, %v4721
        %v4723 = vrot.slane %v4540, 1
        %v4724 = vrot.slane %v4541, 1
        %v4725 = vsel %vm621, %v4723, %v4724
        %v4726 = vrot.slane %v4542, 1
        %v4727 = vrot.slane %v4543, 1
        %v4728 = vsel %vm621, %v4726, %v4727
        %v4729 = vrot.slane %v4544, 1
        %v4730 = vrot.slane %v4545, 1
        %v4731 = vsel %vm621, %v4729, %v4730
        %v4732 = vrot.slane %v4546, 1
        %v4733 = vrot.slane %v4547, 1
        %v4734 = vsel %vm621, %v4732, %v4733
        %v4735 = vrot.slane %v4548, 1
        %v4736 = vrot.slane %v4549, 1
        %v4737 = vsel %vm621, %v4735, %v4736
        %v4738 = vrot.slane %v4550, 1
        %v4739 = vrot.slane %v4551, 1
        %v4740 = vsel %vm621, %v4738, %v4739
        %v4749 = vrot.slane %v4536, 2
        %v4750 = vrot.slane %v4537, 2
        %v4751 = vsel %vm1287, %v4749, %v4750
        %v4752 = vrot.slane %v4538, 2
        %v4753 = vrot.slane %v4539, 2
        %v4754 = vsel %vm1287, %v4752, %v4753
        %v4755 = vrot.slane %v4540, 2
        %v4756 = vrot.slane %v4541, 2
        %v4757 = vsel %vm1287, %v4755, %v4756
        %v4758 = vrot.slane %v4542, 2
        %v4759 = vrot.slane %v4543, 2
        %v4760 = vsel %vm1287, %v4758, %v4759
        %v4761 = vrot.slane %v4544, 2
        %v4762 = vrot.slane %v4545, 2
        %v4763 = vsel %vm1287, %v4761, %v4762
        %v4764 = vrot.slane %v4546, 2
        %v4765 = vrot.slane %v4547, 2
        %v4766 = vsel %vm1287, %v4764, %v4765
        %v4767 = vrot.slane %v4548, 2
        %v4768 = vrot.slane %v4549, 2
        %v4769 = vsel %vm1287, %v4767, %v4768
        %v4770 = vrot.slane %v4550, 2
        %v4771 = vrot.slane %v4551, 2
        %v4772 = vsel %vm1287, %v4770, %v4771
        %v4783 = vrot.slane %v4552, 1
        %v4784 = vrot.slane %v4553, 1
        %v4785 = vsel %vm621, %v4783, %v4784
        %v4787 = vrot.slane %v4552, 2
        %v4788 = vrot.slane %v4553, 2
        %v4789 = vsel %vm1287, %v4787, %v4788
        %v4793 = vrot.slane %v4554, 1
        %v4794 = vrot.slane %v4555, 1
        %v4795 = vsel %vm621, %v4793, %v4794
        %v4797 = vrot.slane %v4554, 2
        %v4798 = vrot.slane %v4555, 2
        %v4799 = vsel %vm1287, %v4797, %v4798
        %4801 = vmatprep.subr.mxu0 0.0
        %4802 = vmatpush1.msra.mxu0 %v4556
        %4803 = vmatprep.subr.mxu0 0.0
        %4804 = vmatpush1.msra.mxu0 %v4557
        %4805 = vmatprep.subr.mxu0 0.0
        %4806 = vmatpush1.msra.mxu0 %v4558
        %4807 = vmatprep.subr.mxu0 0.0
        %4808 = vmatpush1.msra.mxu0 %v4559
        %4809 = vmatprep.subr.mxu0 0.0
        %4810 = vmatpush1.msra.mxu0 %v4560
        %4811 = vmatprep.subr.mxu0 0.0
        %4812 = vmatpush1.msra.mxu0 %v4561
        %4813 = vmatprep.subr.mxu0 0.0
        %4814 = vmatpush1.msra.mxu0 %v4562
        %4815 = vmatprep.subr.mxu0 0.0
        %4816 = vmatpush1.msra.mxu0 %v4563
        %4817 = vmatprep.subr.mxu0 0.0
        %4818 = vmatpush1.msra.mxu0 %v4564
        %4819 = vmatprep.subr.mxu0 0.0
        %4820 = vmatpush1.msra.mxu0 %v4565
        %4821 = vmatprep.subr.mxu0 0.0
        %4822 = vmatpush1.msra.mxu0 %v4566
        %4823 = vmatprep.subr.mxu0 0.0
        %4824 = vmatpush1.msra.mxu0 %v4567
        %4825 = vmatprep.subr.mxu0 0.0
        %4826 = vmatpush1.msra.mxu0 %v4568
        %4827 = vmatprep.subr.mxu0 0.0
        %4828 = vmatpush1.msra.mxu0 %v4569
        %4829 = vmatprep.subr.mxu0 0.0
        %4830 = vmatpush1.msra.mxu0 %v4570
        %4831 = vmatprep.subr.mxu0 0.0
        %4832 = vmatpush1.msra.mxu0 %v4571
        %4833 = vmatprep.subr.mxu0 0.0
        %4834 = vmatpush1.msra.mxu0 %v4572
        %4835 = vmatprep.subr.mxu0 0.0
        %4836 = vmatpush1.msra.mxu0 %v4573
        %4837 = vmatprep.subr.mxu0 0.0
        %4838 = vmatpush1.msra.mxu0 %v4574
        %4839 = vmatprep.subr.mxu0 0.0
        %4840 = vmatpush1.msra.mxu0 %v4575
        %4841 = vmatprep.subr.mxu0 0.0
        %4842 = vmatpush1.msra.mxu0 %v4576
        %4843 = vmatprep.subr.mxu0 0.0
        %4844 = vmatpush1.msra.mxu0 %v4577
        %4845 = vmatprep.subr.mxu0 0.0
        %4846 = vmatpush1.msra.mxu0 %v4578
        %4847 = vmatprep.subr.mxu0 0.0
        %4848 = vmatpush1.msra.mxu0 %v4579
        %4849 = vmatprep.subr.mxu0 0.0
        %4850 = vmatpush1.msra.mxu0 %v4580
        %4851 = vmatprep.subr.mxu0 0.0
        %4852 = vmatpush1.msra.mxu0 %v4581
        %4853 = vmatprep.subr.mxu0 0.0
        %4854 = vmatpush1.msra.mxu0 %v4582
        %4855 = vmatprep.subr.mxu0 0.0
        %4856 = vmatpush1.msra.mxu0 %v4583
        %4857 = vmatprep.subr.mxu0 0.0
        %4858 = vmatpush1.msra.mxu0 %v4584
        %4859 = vmatprep.subr.mxu0 0.0
        %4860 = vmatpush1.msra.mxu0 %v4585
        %4861 = vmatprep.subr.mxu0 0.0
        %4862 = vmatpush1.msra.mxu0 %v4586
        %4863 = vmatprep.subr.mxu0 0.0
        %4864 = vmatpush1.msra.mxu0 %v4587
        %4865 = vmatprep.mubr.f32.mxu0 %v4719
        %4866 = vmatmul.mubr.f32.gmra.mrb[0].mxu0 %v4536
        %v4867 = vpop.f32.mrb[0].mxu0
        %v4868 = vadd.f32 0.0, %v4867
        %v4869 = vpop.f32.mrb[0].mxu0
        %4870 = vmatprep.mubr.f32.mxu0 %v4722
        %4871 = vmatmul.mubr.f32.gmra.mrb[0].mxu0 %v4538
        %v4872 = vpop.f32.mrb[0].mxu0
        %v4873 = vadd.f32 0.0, %v4872
        %v4874 = vpop.f32.mrb[0].mxu0
        %4875 = vmatprep.mubr.f32.mxu0 %v4725
        %4876 = vmatmul.mubr.f32.gmra.mrb[0].mxu0 %v4540
        %v4877 = vpop.f32.mrb[0].mxu0
        %v4878 = vadd.f32 0.0, %v4877
        %v4879 = vpop.f32.mrb[0].mxu0
        %4880 = vmatprep.mubr.f32.mxu0 %v4728
        %4881 = vmatmul.mubr.f32.gmra.mrb[0].mxu0 %v4542
        %v4882 = vpop.f32.mrb[0].mxu0
        %v4883 = vadd.f32 0.0, %v4882
        %v4884 = vpop.f32.mrb[0].mxu0
        %4885 = vmatprep.mubr.f32.mxu0 %v4731
        %4886 = vmatmul.mubr.f32.gmra.mrb[0].mxu0 %v4544
        %v4887 = vpop.f32.mrb[0].mxu0
        %v4888 = vadd.f32 0.0, %v4887
        %v4889 = vpop.f32.mrb[0].mxu0
        %4890 = vmatprep.mubr.f32.mxu0 %v4734
        %4891 = vmatmul.mubr.f32.gmra.mrb[0].mxu0 %v4546
        %v4892 = vpop.f32.mrb[0].mxu0
        %v4893 = vadd.f32 0.0, %v4892
        %v4894 = vpop.f32.mrb[0].mxu0
        %4895 = vmatprep.mubr.f32.mxu0 %v4737
        %4896 = vmatmul.mubr.f32.gmra.mrb[0].mxu0 %v4548
        %v4897 = vpop.f32.mrb[0].mxu0
        %v4898 = vadd.f32 0.0, %v4897
        %v4899 = vpop.f32.mrb[0].mxu0
        %4900 = vmatprep.mubr.f32.mxu0 %v4740
        %4901 = vmatmul.mubr.f32.gmra.mrb[0].mxu0 %v4550
        %v4902 = vpop.f32.mrb[0].mxu0
        %v4903 = vadd.f32 0.0, %v4902
        %v4904 = vpop.f32.mrb[0].mxu0
        %4905 = vdwg.mxu0
        %4906 = vmatprep.subr.mxu0 0.0
        %4907 = vmatpush1.msra.mxu0 %v4588
        %4908 = vmatprep.subr.mxu0 0.0
        %4909 = vmatpush1.msra.mxu0 %v4589
        %4910 = vmatprep.subr.mxu0 0.0
        %4911 = vmatpush1.msra.mxu0 %v4590
        %4912 = vmatprep.subr.mxu0 0.0
        %4913 = vmatpush1.msra.mxu0 %v4591
        %4914 = vmatprep.subr.mxu0 0.0
        %4915 = vmatpush1.msra.mxu0 %v4592
        %4916 = vmatprep.subr.mxu0 0.0
        %4917 = vmatpush1.msra.mxu0 %v4593
        %4918 = vmatprep.subr.mxu0 0.0
        %4919 = vmatpush1.msra.mxu0 %v4594
        %4920 = vmatprep.subr.mxu0 0.0
        %4921 = vmatpush1.msra.mxu0 %v4595
        %4922 = vmatprep.subr.mxu0 0.0
        %4923 = vmatpush1.msra.mxu0 %v4596
        %4924 = vmatprep.subr.mxu0 0.0
        %4925 = vmatpush1.msra.mxu0 %v4597
        %4926 = vmatprep.subr.mxu0 0.0
        %4927 = vmatpush1.msra.mxu0 %v4598
        %4928 = vmatprep.subr.mxu0 0.0
        %4929 = vmatpush1.msra.mxu0 %v4599
        %4930 = vmatprep.subr.mxu0 0.0
        %4931 = vmatpush1.msra.mxu0 %v4600
        %4932 = vmatprep.subr.mxu0 0.0
        %4933 = vmatpush1.msra.mxu0 %v4601
        %4934 = vmatprep.subr.mxu0 0.0
        %4935 = vmatpush1.msra.mxu0 %v4602
        %4936 = vmatprep.subr.mxu0 0.0
        %4937 = vmatpush1.msra.mxu0 %v4603
        %4938 = vmatprep.subr.mxu0 0.0
        %4939 = vmatpush1.msra.mxu0 %v4604
        %4940 = vmatprep.subr.mxu0 0.0
        %4941 = vmatpush1.msra.mxu0 %v4605
        %4942 = vmatprep.subr.mxu0 0.0
        %4943 = vmatpush1.msra.mxu0 %v4606
        %4944 = vmatprep.subr.mxu0 0.0
        %4945 = vmatpush1.msra.mxu0 %v4607
        %4946 = vmatprep.subr.mxu0 0.0
        %4947 = vmatpush1.msra.mxu0 %v4608
        %4948 = vmatprep.subr.mxu0 0.0
        %4949 = vmatpush1.msra.mxu0 %v4609
        %4950 = vmatprep.subr.mxu0 0.0
        %4951 = vmatpush1.msra.mxu0 %v4610
        %4952 = vmatprep.subr.mxu0 0.0
        %4953 = vmatpush1.msra.mxu0 %v4611
        %4954 = vmatprep.subr.mxu0 0.0
        %4955 = vmatpush1.msra.mxu0 %v4612
        %4956 = vmatprep.subr.mxu0 0.0
        %4957 = vmatpush1.msra.mxu0 %v4613
        %4958 = vmatprep.subr.mxu0 0.0
        %4959 = vmatpush1.msra.mxu0 %v4614
        %4960 = vmatprep.subr.mxu0 0.0
        %4961 = vmatpush1.msra.mxu0 %v4615
        %4962 = vmatprep.subr.mxu0 0.0
        %4963 = vmatpush1.msra.mxu0 %v4616
        %4964 = vmatprep.subr.mxu0 0.0
        %4965 = vmatpush1.msra.mxu0 %v4617
        %4966 = vmatprep.subr.mxu0 0.0
        %4967 = vmatpush1.msra.mxu0 %v4618
        %4968 = vmatprep.subr.mxu0 0.0
        %4969 = vmatpush1.msra.mxu0 %v4619
        %4970 = vmatprep.mubr.f32.mxu0 %v4538
        %4971 = vmatmul.mubr.f32.gmra.mrb[0].mxu0 %v4751
        %v4972 = vpop.f32.mrb[0].mxu0
        %v4973 = vadd.f32 %v4868, %v4972
        %v4974 = vpop.f32.mrb[0].mxu0
        %4975 = vmatprep.mubr.f32.mxu0 %v4540
        %4976 = vmatmul.mubr.f32.gmra.mrb[0].mxu0 %v4754
        %v4977 = vpop.f32.mrb[0].mxu0
        %v4978 = vadd.f32 %v4873, %v4977
        %v4979 = vpop.f32.mrb[0].mxu0
        %4980 = vmatprep.mubr.f32.mxu0 %v4542
        %4981 = vmatmul.mubr.f32.gmra.mrb[0].mxu0 %v4757
        %v4982 = vpop.f32.mrb[0].mxu0
        %v4983 = vadd.f32 %v4878, %v4982
        %v4984 = vpop.f32.mrb[0].mxu0
        %4985 = vmatprep.mubr.f32.mxu0 %v4544
        %4986 = vmatmul.mubr.f32.gmra.mrb[0].mxu0 %v4760
        %v4987 = vpop.f32.mrb[0].mxu0
        %v4988 = vadd.f32 %v4883, %v4987
        %v4989 = vpop.f32.mrb[0].mxu0
        %4990 = vmatprep.mubr.f32.mxu0 %v4546
        %4991 = vmatmul.mubr.f32.gmra.mrb[0].mxu0 %v4763
        %v4992 = vpop.f32.mrb[0].mxu0
        %v4993 = vadd.f32 %v4888, %v4992
        %v4994 = vpop.f32.mrb[0].mxu0
        %4995 = vmatprep.mubr.f32.mxu0 %v4548
        %4996 = vmatmul.mubr.f32.gmra.mrb[0].mxu0 %v4766
        %v4997 = vpop.f32.mrb[0].mxu0
        %v4998 = vadd.f32 %v4893, %v4997
        %v4999 = vpop.f32.mrb[0].mxu0
        %5000 = vmatprep.mubr.f32.mxu0 %v4550
        %5001 = vmatmul.mubr.f32.gmra.mrb[0].mxu0 %v4769
        %v5002 = vpop.f32.mrb[0].mxu0
        %v5003 = vadd.f32 %v4898, %v5002
        %v5004 = vpop.f32.mrb[0].mxu0
        %5005 = vmatprep.mubr.f32.mxu0 %v4552
        %5006 = vmatmul.mubr.f32.gmra.mrb[0].mxu0 %v4772
        %v5007 = vpop.f32.mrb[0].mxu0
        %v5008 = vadd.f32 %v4903, %v5007
        %v5009 = vpop.f32.mrb[0].mxu0
        %5010 = vdwg.mxu0
        %5011 = vmatprep.subr.mxu0 0.0
        %5012 = vmatpush1.msra.mxu0 %v4620
        %5013 = vmatprep.subr.mxu0 0.0
        %5014 = vmatpush1.msra.mxu0 %v4621
        %5015 = vmatprep.subr.mxu0 0.0
        %5016 = vmatpush1.msra.mxu0 %v4622
        %5017 = vmatprep.subr.mxu0 0.0
        %5018 = vmatpush1.msra.mxu0 %v4623
        %5019 = vmatprep.subr.mxu0 0.0
        %5020 = vmatpush1.msra.mxu0 %v4624
        %5021 = vmatprep.subr.mxu0 0.0
        %5022 = vmatpush1.msra.mxu0 %v4625
        %5023 = vmatprep.subr.mxu0 0.0
        %5024 = vmatpush1.msra.mxu0 %v4626
        %5025 = vmatprep.subr.mxu0 0.0
        %5026 = vmatpush1.msra.mxu0 %v4627
        %5027 = vmatprep.subr.mxu0 0.0
        %5028 = vmatpush1.msra.mxu0 %v4628
        %5029 = vmatprep.subr.mxu0 0.0
        %5030 = vmatpush1.msra.mxu0 %v4629
        %5031 = vmatprep.subr.mxu0 0.0
        %5032 = vmatpush1.msra.mxu0 %v4630
        %5033 = vmatprep.subr.mxu0 0.0
        %5034 = vmatpush1.msra.mxu0 %v4631
        %5035 = vmatprep.subr.mxu0 0.0
        %5036 = vmatpush1.msra.mxu0 %v4632
        %5037 = vmatprep.subr.mxu0 0.0
        %5038 = vmatpush1.msra.mxu0 %v4633
        %5039 = vmatprep.subr.mxu0 0.0
        %5040 = vmatpush1.msra.mxu0 %v4634
        %5041 = vmatprep.subr.mxu0 0.0
        %5042 = vmatpush1.msra.mxu0 %v4635
        %5043 = vmatprep.subr.mxu0 0.0
        %5044 = vmatpush1.msra.mxu0 %v4636
        %5045 = vmatprep.subr.mxu0 0.0
        %5046 = vmatpush1.msra.mxu0 %v4637
        %5047 = vmatprep.subr.mxu0 0.0
        %5048 = vmatpush1.msra.mxu0 %v4638
        %5049 = vmatprep.subr.mxu0 0.0
        %5050 = vmatpush1.msra.mxu0 %v4639
        %5051 = vmatprep.subr.mxu0 0.0
        %5052 = vmatpush1.msra.mxu0 %v4640
        %5053 = vmatprep.subr.mxu0 0.0
        %5054 = vmatpush1.msra.mxu0 %v4641
        %5055 = vmatprep.subr.mxu0 0.0
        %5056 = vmatpush1.msra.mxu0 %v4642
        %5057 = vmatprep.subr.mxu0 0.0
        %5058 = vmatpush1.msra.mxu0 %v4643
        %5059 = vmatprep.subr.mxu0 0.0
        %5060 = vmatpush1.msra.mxu0 %v4644
        %5061 = vmatprep.subr.mxu0 0.0
        %5062 = vmatpush1.msra.mxu0 %v4645
        %5063 = vmatprep.subr.mxu0 0.0
        %5064 = vmatpush1.msra.mxu0 %v4646
        %5065 = vmatprep.subr.mxu0 0.0
        %5066 = vmatpush1.msra.mxu0 %v4647
        %5067 = vmatprep.subr.mxu0 0.0
        %5068 = vmatpush1.msra.mxu0 %v4648
        %5069 = vmatprep.subr.mxu0 0.0
        %5070 = vmatpush1.msra.mxu0 %v4649
        %5071 = vmatprep.subr.mxu0 0.0
        %5072 = vmatpush1.msra.mxu0 %v4650
        %5073 = vmatprep.subr.mxu0 0.0
        %5074 = vmatpush1.msra.mxu0 %v4651
        %5075 = vmatprep.mubr.f32.mxu0 %v4754
        %5076 = vmatmul.mubr.f32.gmra.mrb[0].mxu0 %v4722
        %v5077 = vpop.f32.mrb[0].mxu0
        %v5078 = vadd.f32 %v4973, %v5077
        %v5079 = vpop.f32.mrb[0].mxu0
        %5080 = vmatprep.mubr.f32.mxu0 %v4757
        %5081 = vmatmul.mubr.f32.gmra.mrb[0].mxu0 %v4725
        %v5082 = vpop.f32.mrb[0].mxu0
        %v5083 = vadd.f32 %v4978, %v5082
        %v5084 = vpop.f32.mrb[0].mxu0
        %5085 = vmatprep.mubr.f32.mxu0 %v4760
        %5086 = vmatmul.mubr.f32.gmra.mrb[0].mxu0 %v4728
        %v5087 = vpop.f32.mrb[0].mxu0
        %v5088 = vadd.f32 %v4983, %v5087
        %v5089 = vpop.f32.mrb[0].mxu0
        %5090 = vmatprep.mubr.f32.mxu0 %v4763
        %5091 = vmatmul.mubr.f32.gmra.mrb[0].mxu0 %v4731
        %v5092 = vpop.f32.mrb[0].mxu0
        %v5093 = vadd.f32 %v4988, %v5092
        %v5094 = vpop.f32.mrb[0].mxu0
        %5095 = vmatprep.mubr.f32.mxu0 %v4766
        %5096 = vmatmul.mubr.f32.gmra.mrb[0].mxu0 %v4734
        %v5097 = vpop.f32.mrb[0].mxu0
        %v5098 = vadd.f32 %v4993, %v5097
        %v5099 = vpop.f32.mrb[0].mxu0
        %5100 = vmatprep.mubr.f32.mxu0 %v4769
        %5101 = vmatmul.mubr.f32.gmra.mrb[0].mxu0 %v4737
        %v5102 = vpop.f32.mrb[0].mxu0
        %v5103 = vadd.f32 %v4998, %v5102
        %v5104 = vpop.f32.mrb[0].mxu0
        %5105 = vmatprep.mubr.f32.mxu0 %v4772
        %5106 = vmatmul.mubr.f32.gmra.mrb[0].mxu0 %v4740
        %v5107 = vpop.f32.mrb[0].mxu0
        %v5108 = vadd.f32 %v5003, %v5107
        %v5109 = vpop.f32.mrb[0].mxu0
        %5110 = vmatprep.mubr.f32.mxu0 %v4789
        %5111 = vmatmul.mubr.f32.gmra.mrb[0].mxu0 %v4785
        %v5112 = vpop.f32.mrb[0].mxu0
        %v5113 = vadd.f32 %v5008, %v5112
        %v5114 = vpop.f32.mrb[0].mxu0
        %5115 = vdwg.mxu0
        %5116 = vmatprep.subr.mxu0 0.0
        %5117 = vmatpush1.msra.mxu0 %v4652
        %5118 = vmatprep.subr.mxu0 0.0
        %5119 = vmatpush1.msra.mxu0 %v4653
        %5120 = vmatprep.subr.mxu0 0.0
        %5121 = vmatpush1.msra.mxu0 %v4654
        %5122 = vmatprep.subr.mxu0 0.0
        %5123 = vmatpush1.msra.mxu0 %v4655
        %5124 = vmatprep.subr.mxu0 0.0
        %5125 = vmatpush1.msra.mxu0 %v4656
        %5126 = vmatprep.subr.mxu0 0.0
        %5127 = vmatpush1.msra.mxu0 %v4657
        %5128 = vmatprep.subr.mxu0 0.0
        %5129 = vmatpush1.msra.mxu0 %v4658
        %5130 = vmatprep.subr.mxu0 0.0
        %5131 = vmatpush1.msra.mxu0 %v4659
        %5132 = vmatprep.subr.mxu0 0.0
        %5133 = vmatpush1.msra.mxu0 %v4660
        %5134 = vmatprep.subr.mxu0 0.0
        %5135 = vmatpush1.msra.mxu0 %v4661
        %5136 = vmatprep.subr.mxu0 0.0
        %5137 = vmatpush1.msra.mxu0 %v4662
        %5138 = vmatprep.subr.mxu0 0.0
        %5139 = vmatpush1.msra.mxu0 %v4663
        %5140 = vmatprep.subr.mxu0 0.0
        %5141 = vmatpush1.msra.mxu0 %v4664
        %5142 = vmatprep.subr.mxu0 0.0
        %5143 = vmatpush1.msra.mxu0 %v4665
        %5144 = vmatprep.subr.mxu0 0.0
        %5145 = vmatpush1.msra.mxu0 %v4666
        %5146 = vmatprep.subr.mxu0 0.0
        %5147 = vmatpush1.msra.mxu0 %v4667
        %5148 = vmatprep.subr.mxu0 0.0
        %5149 = vmatpush1.msra.mxu0 %v4668
        %5150 = vmatprep.subr.mxu0 0.0
        %5151 = vmatpush1.msra.mxu0 %v4669
        %5152 = vmatprep.subr.mxu0 0.0
        %5153 = vmatpush1.msra.mxu0 %v4670
        %5154 = vmatprep.subr.mxu0 0.0
        %5155 = vmatpush1.msra.mxu0 %v4671
        %5156 = vmatprep.subr.mxu0 0.0
        %5157 = vmatpush1.msra.mxu0 %v4672
        %5158 = vmatprep.subr.mxu0 0.0
        %5159 = vmatpush1.msra.mxu0 %v4673
        %5160 = vmatprep.subr.mxu0 0.0
        %5161 = vmatpush1.msra.mxu0 %v4674
        %5162 = vmatprep.subr.mxu0 0.0
        %5163 = vmatpush1.msra.mxu0 %v4675
        %5164 = vmatprep.subr.mxu0 0.0
        %5165 = vmatpush1.msra.mxu0 %v4676
        %5166 = vmatprep.subr.mxu0 0.0
        %5167 = vmatpush1.msra.mxu0 %v4677
        %5168 = vmatprep.subr.mxu0 0.0
        %5169 = vmatpush1.msra.mxu0 %v4678
        %5170 = vmatprep.subr.mxu0 0.0
        %5171 = vmatpush1.msra.mxu0 %v4679
        %5172 = vmatprep.subr.mxu0 0.0
        %5173 = vmatpush1.msra.mxu0 %v4680
        %5174 = vmatprep.subr.mxu0 0.0
        %5175 = vmatpush1.msra.mxu0 %v4681
        %5176 = vmatprep.subr.mxu0 0.0
        %5177 = vmatpush1.msra.mxu0 %v4682
        %5178 = vmatprep.subr.mxu0 0.0
        %5179 = vmatpush1.msra.mxu0 %v4683
        %5180 = vmatprep.mubr.f32.mxu0 %v4725
        %5181 = vmatmul.mubr.f32.gmra.mrb[0].mxu0 %v4540
        %v5182 = vpop.f32.mrb[0].mxu0
        %v5183 = vadd.f32 %v5078, %v5182
        %v5184 = vpop.f32.mrb[0].mxu0
        %5185 = vmatprep.mubr.f32.mxu0 %v4728
        %5186 = vmatmul.mubr.f32.gmra.mrb[0].mxu0 %v4542
        %v5187 = vpop.f32.mrb[0].mxu0
        %v5188 = vadd.f32 %v5083, %v5187
        %v5189 = vpop.f32.mrb[0].mxu0
        %5190 = vmatprep.mubr.f32.mxu0 %v4731
        %5191 = vmatmul.mubr.f32.gmra.mrb[0].mxu0 %v4544
        %v5192 = vpop.f32.mrb[0].mxu0
        %v5193 = vadd.f32 %v5088, %v5192
        %v5194 = vpop.f32.mrb[0].mxu0
        %5195 = vmatprep.mubr.f32.mxu0 %v4734
        %5196 = vmatmul.mubr.f32.gmra.mrb[0].mxu0 %v4546
        %v5197 = vpop.f32.mrb[0].mxu0
        %v5198 = vadd.f32 %v5093, %v5197
        %v5199 = vpop.f32.mrb[0].mxu0
        %5200 = vmatprep.mubr.f32.mxu0 %v4737
        %5201 = vmatmul.mubr.f32.gmra.mrb[0].mxu0 %v4548
        %v5202 = vpop.f32.mrb[0].mxu0
        %v5203 = vadd.f32 %v5098, %v5202
        %v5204 = vpop.f32.mrb[0].mxu0
        %5205 = vmatprep.mubr.f32.mxu0 %v4740
        %5206 = vmatmul.mubr.f32.gmra.mrb[0].mxu0 %v4550
        %v5207 = vpop.f32.mrb[0].mxu0
        %v5208 = vadd.f32 %v5103, %v5207
        %v5209 = vpop.f32.mrb[0].mxu0
        %5210 = vmatprep.mubr.f32.mxu0 %v4785
        %5211 = vmatmul.mubr.f32.gmra.mrb[0].mxu0 %v4552
        %v5212 = vpop.f32.mrb[0].mxu0
        %v5213 = vadd.f32 %v5108, %v5212
        %v5214 = vpop.f32.mrb[0].mxu0
        %5215 = vmatprep.mubr.f32.mxu0 %v4795
        %5216 = vmatmul.mubr.f32.gmra.mrb[0].mxu0 %v4554
        %v5217 = vpop.f32.mrb[0].mxu0
        %v5218 = vadd.f32 %v5113, %v5217
        %v5219 = vpop.f32.mrb[0].mxu0
        %5220 = vdwg.mxu0
        %5221 = vmatprep.subr.mxu0 0.0
        %5222 = vmatpush1.msra.mxu0 %v4684
        %5223 = vmatprep.subr.mxu0 0.0
        %5224 = vmatpush1.msra.mxu0 %v4685
        %5225 = vmatprep.subr.mxu0 0.0
        %5226 = vmatpush1.msra.mxu0 %v4686
        %5227 = vmatprep.subr.mxu0 0.0
        %5228 = vmatpush1.msra.mxu0 %v4687
        %5229 = vmatprep.subr.mxu0 0.0
        %5230 = vmatpush1.msra.mxu0 %v4688
        %5231 = vmatprep.subr.mxu0 0.0
        %5232 = vmatpush1.msra.mxu0 %v4689
        %5233 = vmatprep.subr.mxu0 0.0
        %5234 = vmatpush1.msra.mxu0 %v4690
        %5235 = vmatprep.subr.mxu0 0.0
        %5236 = vmatpush1.msra.mxu0 %v4691
        %5237 = vmatprep.subr.mxu0 0.0
        %5238 = vmatpush1.msra.mxu0 %v4692
        %5239 = vmatprep.subr.mxu0 0.0
        %5240 = vmatpush1.msra.mxu0 %v4693
        %5241 = vmatprep.subr.mxu0 0.0
        %5242 = vmatpush1.msra.mxu0 %v4694
        %5243 = vmatprep.subr.mxu0 0.0
        %5244 = vmatpush1.msra.mxu0 %v4695
        %5245 = vmatprep.subr.mxu0 0.0
        %5246 = vmatpush1.msra.mxu0 %v4696
        %5247 = vmatprep.subr.mxu0 0.0
        %5248 = vmatpush1.msra.mxu0 %v4697
        %5249 = vmatprep.subr.mxu0 0.0
        %5250 = vmatpush1.msra.mxu0 %v4698
        %5251 = vmatprep.subr.mxu0 0.0
        %5252 = vmatpush1.msra.mxu0 %v4699
        %5253 = vmatprep.subr.mxu0 0.0
        %5254 = vmatpush1.msra.mxu0 0.0
        %5255 = vmatprep.subr.mxu0 0.0
        %5256 = vmatpush1.msra.mxu0 0.0
        %5257 = vmatprep.subr.mxu0 0.0
        %5258 = vmatpush1.msra.mxu0 0.0
        %5259 = vmatprep.subr.mxu0 0.0
        %5260 = vmatpush1.msra.mxu0 0.0
        %5261 = vmatprep.subr.mxu0 0.0
        %5262 = vmatpush1.msra.mxu0 0.0
        %5263 = vmatprep.subr.mxu0 0.0
        %5264 = vmatpush1.msra.mxu0 0.0
        %5265 = vmatprep.subr.mxu0 0.0
        %5266 = vmatpush1.msra.mxu0 0.0
        %5267 = vmatprep.subr.mxu0 0.0
        %5268 = vmatpush1.msra.mxu0 0.0
        %5269 = vmatprep.subr.mxu0 0.0
        %5270 = vmatpush1.msra.mxu0 0.0
        %5271 = vmatprep.subr.mxu0 0.0
        %5272 = vmatpush1.msra.mxu0 0.0
        %5273 = vmatprep.subr.mxu0 0.0
        %5274 = vmatpush1.msra.mxu0 0.0
        %5275 = vmatprep.subr.mxu0 0.0
        %5276 = vmatpush1.msra.mxu0 0.0
        %5277 = vmatprep.subr.mxu0 0.0
        %5278 = vmatpush1.msra.mxu0 0.0
        %5279 = vmatprep.subr.mxu0 0.0
        %5280 = vmatpush1.msra.mxu0 0.0
        %5281 = vmatprep.subr.mxu0 0.0
        %5282 = vmatpush1.msra.mxu0 0.0
        %5283 = vmatprep.subr.mxu0 0.0
        %5284 = vmatpush1.msra.mxu0 0.0
        %5285 = vmatprep.mubr.f32.mxu0 0.0
        %5286 = vmatmul.mubr.f32.gmra.mrb[0].mxu0 %v4757
        %v5287 = vpop.f32.mrb[0].mxu0
        %v5288 = vadd.f32 %v5183, %v5287
        %v5289 = vpop.f32.mrb[0].mxu0
        %5290 = vmatprep.mubr.f32.mxu0 0.0
        %5291 = vmatmul.mubr.f32.gmra.mrb[0].mxu0 %v4760
        %v5292 = vpop.f32.mrb[0].mxu0
        %v5293 = vadd.f32 %v5188, %v5292
        %v5294 = vpop.f32.mrb[0].mxu0
        %5295 = vmatprep.mubr.f32.mxu0 0.0
        %5296 = vmatmul.mubr.f32.gmra.mrb[0].mxu0 %v4763
        %v5297 = vpop.f32.mrb[0].mxu0
        %v5298 = vadd.f32 %v5193, %v5297
        %v5299 = vpop.f32.mrb[0].mxu0
        %5300 = vmatprep.mubr.f32.mxu0 0.0
        %5301 = vmatmul.mubr.f32.gmra.mrb[0].mxu0 %v4766
        %v5302 = vpop.f32.mrb[0].mxu0
        %v5303 = vadd.f32 %v5198, %v5302
        %v5304 = vpop.f32.mrb[0].mxu0
        %5305 = vmatprep.mubr.f32.mxu0 0.0
        %5306 = vmatmul.mubr.f32.gmra.mrb[0].mxu0 %v4769
        %v5307 = vpop.f32.mrb[0].mxu0
        %v5308 = vadd.f32 %v5203, %v5307
        %v5309 = vpop.f32.mrb[0].mxu0
        %5310 = vmatprep.mubr.f32.mxu0 0.0
        %5311 = vmatmul.mubr.f32.gmra.mrb[0].mxu0 %v4772
        %v5312 = vpop.f32.mrb[0].mxu0
        %v5313 = vadd.f32 %v5208, %v5312
        %v5314 = vpop.f32.mrb[0].mxu0
        %5315 = vmatprep.mubr.f32.mxu0 0.0
        %5316 = vmatmul.mubr.f32.gmra.mrb[0].mxu0 %v4789
        %v5317 = vpop.f32.mrb[0].mxu0
        %v5318 = vadd.f32 %v5213, %v5317
        %v5319 = vpop.f32.mrb[0].mxu0
        %5320 = vmatprep.mubr.f32.mxu0 0.0
        %5321 = vmatmul.mubr.f32.gmra.mrb[0].mxu0 %v4799
        %v5322 = vpop.f32.mrb[0].mxu0
        %v5323 = vadd.f32 %v5218, %v5322
        %v5324 = vpop.f32.mrb[0].mxu0
        %5325 = vdwg.mxu0
        %v5326 = vlaneseq
        %v5327 = vshrl.u32 %v5326, 7
        %v5328 = vsub.s32 0, %v5327
        %v5329 = vrot.slane %v4700, %v5328
        %v5330 = vmul.f32 %v5288, %v5329
        %v5331 = vmul.f32 %v5293, %v5329
        %v5332 = vmul.f32 %v5298, %v5329
        %v5333 = vmul.f32 %v5303, %v5329
        %v5334 = vmul.f32 %v5308, %v5329
        %v5335 = vmul.f32 %v5313, %v5329
        %v5336 = vmul.f32 %v5318, %v5329
        %v5337 = vmul.f32 %v5323, %v5329
        %v5338 = vlaneseq
        %v5339 = vshrl.u32 %v5338, 7
        %v5340 = vsub.s32 1, %v5339
        %v5341 = vrot.slane %v4700, %v5340
        %v5342 = vadd.f32 %v5330, %v5341
        %v5343 = vadd.f32 %v5331, %v5341
        %v5344 = vadd.f32 %v5332, %v5341
        %v5345 = vadd.f32 %v5333, %v5341
        %v5346 = vadd.f32 %v5334, %v5341
        %v5347 = vadd.f32 %v5335, %v5341
        %v5348 = vadd.f32 %v5336, %v5341
        %v5349 = vadd.f32 %v5337, %v5341
        %v5350 = vmax.f32 %v5342, 0.0
        %v5351 = vmax.f32 %v5343, 0.0
        %v5352 = vmax.f32 %v5344, 0.0
        %v5353 = vmax.f32 %v5345, 0.0
        %v5354 = vmax.f32 %v5346, 0.0
        %v5355 = vmax.f32 %v5347, 0.0
        %v5356 = vmax.f32 %v5348, 0.0
        %v5357 = vmax.f32 %v5349, 0.0
        %v5358 = vld [vmem:[%s8] sm:$0xff]
        %v5359 = vld [vmem:[%s8 + $0x8] sm:$0xff]
        %v5360 = vld [vmem:[%s8 + $0x10] sm:$0xff]
        %v5361 = vld [vmem:[%s8 + $0x18] sm:$0xff]
        %v5362 = vld [vmem:[%s8 + $0x20] sm:$0xff]
        %v5363 = vld [vmem:[%s8 + $0x28] sm:$0xff]
        %v5364 = vld [vmem:[%s8 + $0x30] sm:$0xff]
        %v5365 = vld [vmem:[%s8 + $0x38] sm:$0xff]
        %v5366 = vld [vmem:[%s8 + $0x40] sm:$0xff]
        %v5367 = vld [vmem:[%s8 + $0x48] sm:$0xff]
        %v5368 = vld [vmem:[%s8 + $0x50] sm:$0xff]
        %v5369 = vld [vmem:[%s8 + $0x58] sm:$0xff]
        %v5370 = vld [vmem:[%s8 + $0x60] sm:$0xff]
        %v5371 = vld [vmem:[%s8 + $0x68] sm:$0xff]
        %v5372 = vld [vmem:[%s8 + $0x70] sm:$0xff]
        %v5373 = vld [vmem:[%s8 + $0x78] sm:$0xff]
        %v5374 = vld [vmem:[%s8 + $0x80] sm:$0xff]
        %v5375 = vld [vmem:[%s8 + $0x88] sm:$0xff]
        %v5376 = vld [vmem:[%s8 + $0x90] sm:$0xff]
        %v5377 = vld [vmem:[%s8 + $0x98] sm:$0xff]
        %v5378 = vld [vmem:[%s8 + $0xa0] sm:$0xff]
        %v5379 = vld [vmem:[%s8 + $0xa8] sm:$0xff]
        %v5380 = vld [vmem:[%s8 + $0xb0] sm:$0xff]
        %v5381 = vld [vmem:[%s8 + $0xb8] sm:$0xff]
        %v5382 = vld [vmem:[%s8 + $0xc0] sm:$0xff]
        %v5383 = vld [vmem:[%s8 + $0xc8] sm:$0xff]
        %v5384 = vld [vmem:[%s8 + $0xd0] sm:$0xff]
        %v5385 = vld [vmem:[%s8 + $0xd8] sm:$0xff]
        %v5386 = vld [vmem:[%s8 + $0xe0] sm:$0xff]
        %v5387 = vld [vmem:[%s8 + $0xe8] sm:$0xff]
        %v5388 = vld [vmem:[%s8 + $0xf0] sm:$0xff]
        %v5389 = vld [vmem:[%s8 + $0xf8] sm:$0xff]
        %v5390 = vld [vmem:[%s8 + $0x100] sm:$0xff]
        %v5391 = vld [vmem:[%s8 + $0x108] sm:$0xff]
        %v5392 = vld [vmem:[%s8 + $0x110] sm:$0xff]
        %v5393 = vld [vmem:[%s8 + $0x118] sm:$0xff]
        %v5394 = vld [vmem:[%s8 + $0x120] sm:$0xff]
        %v5395 = vld [vmem:[%s8 + $0x128] sm:$0xff]
        %v5396 = vld [vmem:[%s8 + $0x130] sm:$0xff]
        %v5397 = vld [vmem:[%s8 + $0x138] sm:$0xff]
        %v5398 = vld [vmem:[%s8 + $0x140] sm:$0xff]
        %v5399 = vld [vmem:[%s8 + $0x148] sm:$0xff]
        %v5400 = vld [vmem:[%s8 + $0x150] sm:$0xff]
        %v5401 = vld [vmem:[%s8 + $0x158] sm:$0xff]
        %v5402 = vld [vmem:[%s8 + $0x160] sm:$0xff]
        %v5403 = vld [vmem:[%s8 + $0x168] sm:$0xff]
        %v5404 = vld [vmem:[%s8 + $0x170] sm:$0xff]
        %v5405 = vld [vmem:[%s8 + $0x178] sm:$0xff]
        %v5406 = vmul.f32 %v5350, %v5358
        %v5407 = vmul.f32 %v5351, %v5359
        %v5408 = vmul.f32 %v5352, %v5360
        %v5409 = vmul.f32 %v5353, %v5361
        %v5410 = vmul.f32 %v5354, %v5362
        %v5411 = vmul.f32 %v5355, %v5363
        %v5412 = vmul.f32 %v5356, %v5364
        %v5413 = vmul.f32 %v5357, %v5365
        %v5414 = vmul.f32 %v5350, %v5366
        %v5415 = vmul.f32 %v5351, %v5367
        %v5416 = vmul.f32 %v5352, %v5368
        %v5417 = vmul.f32 %v5353, %v5369
        %v5418 = vmul.f32 %v5354, %v5370
        %v5419 = vmul.f32 %v5355, %v5371
        %v5420 = vmul.f32 %v5356, %v5372
        %v5421 = vmul.f32 %v5357, %v5373
        %v5422 = vmul.f32 %v5350, %v5374
        %v5423 = vmul.f32 %v5351, %v5375
        %v5424 = vmul.f32 %v5352, %v5376
        %v5425 = vmul.f32 %v5353, %v5377
        %v5426 = vmul.f32 %v5354, %v5378
        %v5427 = vmul.f32 %v5355, %v5379
        %v5428 = vmul.f32 %v5356, %v5380
        %v5429 = vmul.f32 %v5357, %v5381
        %v5430 = vmul.f32 %v5350, %v5382
        %v5431 = vmul.f32 %v5351, %v5383
        %v5432 = vmul.f32 %v5352, %v5384
        %v5433 = vmul.f32 %v5353, %v5385
        %v5434 = vmul.f32 %v5354, %v5386
        %v5435 = vmul.f32 %v5355, %v5387
        %v5436 = vmul.f32 %v5356, %v5388
        %v5437 = vmul.f32 %v5357, %v5389
        %v5438 = vmul.f32 %v5350, %v5390
        %v5439 = vmul.f32 %v5351, %v5391
        %v5440 = vmul.f32 %v5352, %v5392
        %v5441 = vmul.f32 %v5353, %v5393
        %v5442 = vmul.f32 %v5354, %v5394
        %v5443 = vmul.f32 %v5355, %v5395
        %v5444 = vmul.f32 %v5356, %v5396
        %v5445 = vmul.f32 %v5357, %v5397
        %v5446 = vmul.f32 %v5350, %v5398
        %v5447 = vmul.f32 %v5351, %v5399
        %v5448 = vmul.f32 %v5352, %v5400
        %v5449 = vmul.f32 %v5353, %v5401
        %v5450 = vmul.f32 %v5354, %v5402
        %v5451 = vmul.f32 %v5355, %v5403
        %v5452 = vmul.f32 %v5356, %v5404
        %v5453 = vmul.f32 %v5357, %v5405
        %v5454 = vadd.f32 %v5406, %v5407
        %v5455 = vadd.f32 %v5454, %v5408
        %v5456 = vadd.f32 %v5455, %v5409
        %v5457 = vadd.f32 %v5456, %v5410
        %v5458 = vadd.f32 %v5457, %v5411
        %v5459 = vadd.f32 %v5458, %v5412
        %v5460 = vadd.f32 %v5459, %v5413
        %v5461 = vrot.slane %v5460, 4
        %v5462 = vadd.f32 %v5460, %v5461
        %v5463 = vrot.slane %v5462, 2
        %v5464 = vadd.f32 %v5462, %v5463
        %v5465 = vrot.slane %v5464, 1
        %v5466 = vadd.f32 %v5464, %v5465
        %v5467 = vadd.f32 %v5414, %v5415
        %v5468 = vadd.f32 %v5467, %v5416
        %v5469 = vadd.f32 %v5468, %v5417
        %v5470 = vadd.f32 %v5469, %v5418
        %v5471 = vadd.f32 %v5470, %v5419
        %v5472 = vadd.f32 %v5471, %v5420
        %v5473 = vadd.f32 %v5472, %v5421
        %v5474 = vrot.slane %v5473, 4
        %v5475 = vadd.f32 %v5473, %v5474
        %v5476 = vrot.slane %v5475, 2
        %v5477 = vadd.f32 %v5475, %v5476
        %v5478 = vrot.slane %v5477, 1
        %v5479 = vadd.f32 %v5477, %v5478
        %v5480 = vadd.f32 %v5422, %v5423
        %v5481 = vadd.f32 %v5480, %v5424
        %v5482 = vadd.f32 %v5481, %v5425
        %v5483 = vadd.f32 %v5482, %v5426
        %v5484 = vadd.f32 %v5483, %v5427
        %v5485 = vadd.f32 %v5484, %v5428
        %v5486 = vadd.f32 %v5485, %v5429
        %v5487 = vrot.slane %v5486, 4
        %v5488 = vadd.f32 %v5486, %v5487
        %v5489 = vrot.slane %v5488, 2
        %v5490 = vadd.f32 %v5488, %v5489
        %v5491 = vrot.slane %v5490, 1
        %v5492 = vadd.f32 %v5490, %v5491
        %v5493 = vadd.f32 %v5430, %v5431
        %v5494 = vadd.f32 %v5493, %v5432
        %v5495 = vadd.f32 %v5494, %v5433
        %v5496 = vadd.f32 %v5495, %v5434
        %v5497 = vadd.f32 %v5496, %v5435
        %v5498 = vadd.f32 %v5497, %v5436
        %v5499 = vadd.f32 %v5498, %v5437
        %v5500 = vrot.slane %v5499, 4
        %v5501 = vadd.f32 %v5499, %v5500
        %v5502 = vrot.slane %v5501, 2
        %v5503 = vadd.f32 %v5501, %v5502
        %v5504 = vrot.slane %v5503, 1
        %v5505 = vadd.f32 %v5503, %v5504
        %v5506 = vadd.f32 %v5438, %v5439
        %v5507 = vadd.f32 %v5506, %v5440
        %v5508 = vadd.f32 %v5507, %v5441
        %v5509 = vadd.f32 %v5508, %v5442
        %v5510 = vadd.f32 %v5509, %v5443
        %v5511 = vadd.f32 %v5510, %v5444
        %v5512 = vadd.f32 %v5511, %v5445
        %v5513 = vrot.slane %v5512, 4
        %v5514 = vadd.f32 %v5512, %v5513
        %v5515 = vrot.slane %v5514, 2
        %v5516 = vadd.f32 %v5514, %v5515
        %v5517 = vrot.slane %v5516, 1
        %v5518 = vadd.f32 %v5516, %v5517
        %v5519 = vadd.f32 %v5446, %v5447
        %v5520 = vadd.f32 %v5519, %v5448
        %v5521 = vadd.f32 %v5520, %v5449
        %v5522 = vadd.f32 %v5521, %v5450
        %v5523 = vadd.f32 %v5522, %v5451
        %v5524 = vadd.f32 %v5523, %v5452
        %v5525 = vadd.f32 %v5524, %v5453
        %v5526 = vrot.slane %v5525, 4
        %v5527 = vadd.f32 %v5525, %v5526
        %v5528 = vrot.slane %v5527, 2
        %v5529 = vadd.f32 %v5527, %v5528
        %v5530 = vrot.slane %v5529, 1
        %v5531 = vadd.f32 %v5529, %v5530
        %vm5538 = vcmask 1041409
        %v5539 = vsel %vm5538, %v5479, %v5466
        %vm5540 = vcmask 1042434
        %v5541 = vsel %vm5540, %v5492, %v5539
        %vm5542 = vcmask 1043459
        %v5543 = vsel %vm5542, %v5505, %v5541
        %vm5544 = vcmask 1044484
        %v5545 = vsel %vm5544, %v5518, %v5543
        %vm5546 = vcmask 1045509
        %v5547 = vsel %vm5546, %v5531, %v5545
        %v5549 = vsel %vm1287, %v5547, 0.0
        %5550 = vadd.xlane.f32.xlu0 %v5549
        %v5551 = vpop.xlane.xlu0 %5550
        %v5552 = vld [vmem:[%s9] sm:$0x3f]
        %v5553 = vadd.f32 %v5551, %v5552
        %vm5554 = vcmask 5120
        %5555 = vst.msk [vmem:[%s387] sm:$0x3f] %vm5554, %v5553
        %p5556 = scmp.lt.s32.totalorder %s23, 1
        %s5557 = scalar_select %p5556, %s23, 1
        %s5558 = smul.addr %s5557, 8
        %s5559 = scalar_lea.vmem %s10, %s5558
        // Predicated region
        $region69: #{convnet_forward.1} parent=59 // pred_check
          %p5560 = pneg %p256
        $region70: #{convnet_forward.1} parent=59 // pred_check_branch
          %5562 = sbr.rel (%p5560) target = $region72
        $region71: #{convnet_forward.1} parent=59 // pred_region
          _
        $region72: #{convnet_forward.1} parent=59 // pred_fallthru
          _
      $region60: #{convnet_forward.1} parent=5 // pred_fallthru
        _
      %p5563 = scmp.le.s32.totalorder 2, %s18
      // Predicated region
      $region73: #{convnet_forward.1} parent=5 // pred_check
        %p5564 = pneg %p5563
      $region74: #{convnet_forward.1} parent=5 // pred_check_branch
        %5566 = sbr.rel (%p5564) target = $region76
      $region75: #{convnet_forward.1} parent=5 // pred_region
        %s5567 = ssub.s32 %s18, 2
        // Predicated region
        $region77: #{convnet_forward.1} parent=75 // pred_check
          %p5568 = pneg %p262
        $region78: #{convnet_forward.1} parent=75 // pred_check_branch
          %5570 = sbr.rel (%p5568) target = $region80
        $region79: #{convnet_forward.1} parent=75 // pred_region
          %p5571 = scmp.lt.s32.totalorder %s24, 1
          %s5572 = scalar_select %p5571, %s24, 1
          %s5573 = smul.addr %s5572, 8
          %s5574 = scalar_lea.vmem %s10, %s5573
        $region80: #{convnet_forward.1} parent=75 // pred_fallthru
          _
      $region76: #{convnet_forward.1} parent=5 // pred_fallthru
        _
    $region6: #{convnet_forward.1} parent=1 // loop_footer
      %s22 = sadd.s32 1, %s18
    $region7: #{convnet_forward.1} parent=1 // loop_footer_branch
      %17 = sbr.rel target = $region3
    $region8: #{convnet_forward.1} parent=1 // loop_exit
      _
    %5575 = vsyncpa [#allocation6], 1
    %s5576 = scalar_lea.sflag [#allocation6], 1
    %5577 = vsyncpa %s5576, 1
    %5578 = vsyncpa [#allocation8], 1

</llo_original>
